<compile_context>
chip_gen: v7x
topology: tpu7x:2x2x1
jax: 0.10.0
libtpu: 0.0.40
codegen_flags: <defaults>
</compile_context>

<pallas_src>
import jax
import jax.numpy as jnp
from jax.experimental import pallas as pl
from jax.experimental.pallas import tpu as pltpu

LN_EPS = 1e-5


def _round_up(x, m):
    return ((x + m - 1) // m) * m


def _cdiv(a, b):
    return (a + b - 1) // b


def _pad2(a, rows, cols):
    pr, pc = rows - a.shape[0], cols - a.shape[1]
    if pr or pc:
        a = jnp.pad(a, ((0, pr), (0, pc)))
    return a


def _chip_info():
    """Best-effort TPU generation info: (vmem_capacity_bytes, num_tensorcores, kind)."""
    vmem_cap = 128 << 20  # v5e / v6e default
    try:
        info = pltpu.get_tpu_info()
        vmem_cap = int(getattr(info, "vmem_capacity_bytes", vmem_cap))
    except Exception:
        pass
    try:
        kind = jax.devices()[0].device_kind.lower()
    except Exception:
        kind = ""
    # v7x exposes 2 TensorCores per device (and 64 MiB VMEM per TC).
    num_tc = 2 if ("7" in kind or vmem_cap <= (64 << 20)) else 1
    return vmem_cap, num_tc, kind


def _make_decoder_kernel(block_struct, hid_p, out_f, compute_dtype):
    """Fused kernel for the whole block stack.

    block_struct: tuple of bools -- True if the block uses a Linear shortcut.
    """
    inv_out = 1.0 / float(out_f)

    def kernel(x_ref, *rest):
        out_ref = rest[-1]
        w = rest[:-1]
        a = x_ref[...].astype(jnp.float32)

        idx = 0
        for has_sc in block_struct:
            wmain, bmain, w2, vec = w[idx:idx + 4]
            idx += 4

            # Single fused x @ [W1 | Ws] matmul for shortcut blocks; plain
            # x @ W1 otherwise.  MXU inputs in compute_dtype, f32 accumulate.
            pre = jnp.dot(a.astype(compute_dtype), wmain[...],
                          preferred_element_type=jnp.float32) + bmain[...]
            if has_sc:
                h = jnp.maximum(pre[:, :hid_p], 0.0)     # ReLU
                res = pre[:, hid_p:]                     # Linear shortcut
            else:
                h = jnp.maximum(pre, 0.0)
                res = a                                  # identity shortcut

            v = vec[...]                                 # (3, out_p): b2, gamma, beta
            y = jnp.dot(h.astype(compute_dtype), w2[...],
                        preferred_element_type=jnp.float32) + v[0:1, :]
            # dropout: identity (eval mode)
            z = y + res

            # LayerNorm over the REAL out_features only.  Padded z columns are
            # exactly zero, so plain sums give correct mean / E[z^2].
            mean = jnp.sum(z, axis=-1, keepdims=True) * inv_out
            var = jnp.maximum(
                jnp.sum(z * z, axis=-1, keepdims=True) * inv_out - mean * mean, 0.0)
            zn = (z - mean) * jax.lax.rsqrt(var + LN_EPS)
            a = zn * v[1:2, :] + v[2:3, :]   # padded gamma/beta are zero -> pads stay 0

        out_ref[...] = a.astype(out_ref.dtype)

    return kernel


def tide_dense_decoder_pallas(x, block_params, *, tile_m=None, compute_dtype=None):
    """Fused TiDE dense decoder (stack of residual blocks) in one pallas_call.

    x:            (B, in_features) float32
    block_params: list of dicts with w1 (in,hid), b1 (1,hid), w2 (hid,out),
                  b2 (1,out), optional ws (in,out), bs (1,out), gamma/beta (1,out).
    tile_m:       batch tile rows (None = auto per TPU generation).
    compute_dtype: MXU input dtype (None = auto: bf16 on v6e/v7x, f32 elsewhere).
    """
    B, in_f = x.shape
    hid_f = block_params[0]["w1"].shape[1]
    out_f = block_params[0]["w2"].shape[1]

    vmem_cap, num_tc, kind = _chip_info()
    if compute_dtype is None:
        compute_dtype = jnp.bfloat16 if ("v6" in kind or "7" in kind) else jnp.float32

    # Feature padding: K of the first matmul only to a sublane multiple,
    # lane dims (matmul N / output slab) to 128 multiples.
    in_s = _round_up(in_f, 8)
    hid_p = _round_up(hid_f, 128)
    out_p = _round_up(out_f, 128)

    # ------------------------- padded weight operands -------------------------
    weight_args = []
    block_struct = []
    flops_per_row = 0
    cur_in = in_s
    for params in block_params:
        has_sc = "ws" in params
        w1 = _pad2(params["w1"], cur_in, hid_p)
        b1 = _pad2(params["b1"], 1, hid_p)
        w2 = _pad2(params["w2"], hid_p, out_p).astype(compute_dtype)
        vec = jnp.concatenate(
            [_pad2(params["b2"], 1, out_p),
             _pad2(params["gamma"], 1, out_p),
             _pad2(params["beta"], 1, out_p)], axis=0)           # (3, out_p)
        if has_sc:
            ws = _pad2(params["ws"], cur_in, out_p)
            bs = _pad2(params["bs"], 1, out_p)
            wmain = jnp.concatenate([w1, ws], axis=1).astype(compute_dtype)
            bmain = jnp.concatenate([b1, bs], axis=1)
            flops_per_row += 2 * (cur_in * (hid_p + out_p) + hid_p * out_p)
        else:
            wmain = w1.astype(compute_dtype)
            bmain = b1
            flops_per_row += 2 * (cur_in * hid_p + hid_p * out_p)
        weight_args += [wmain, bmain, w2, vec]
        block_struct.append(has_sc)
        cur_in = out_p

    weight_bytes = sum(int(a.size) * a.dtype.itemsize for a in weight_args)

    # ---------------- per-generation tile / grid / VMEM budget ----------------
    def vmem_need(t, wbuf):
        act = 2 * t * (in_s + out_p) * 4          # double-buffered x / out tiles
        inter = 8 * t * (hid_p + out_p) * 4        # in-kernel intermediates
        return wbuf * weight_bytes + act + inter + (2 << 20)

    budget = int(0.75 * vmem_cap)                  # ~51 MiB v7x, ~96 MiB v5e/v6e
    B8 = _round_up(max(B, 8), 8)
    if tile_m is None:
        max_tile = 1024 if num_tc >= 2 else 2048   # >=2 steps for v7x; big tiles 1-TC
        n_tiles = max(num_tc, _cdiv(B8, max_tile))
        if num_tc >= 2:
            n_tiles = _round_up(n_tiles, num_tc)
        tile_m = _round_up(_cdiv(B8, n_tiles), 8)
    while tile_m > 8 and vmem_need(tile_m, 1) > budget:
        tile_m = _round_up(tile_m // 2, 8)
    n_tiles = _cdiv(B8, tile_m)
    if num_tc >= 2:
        n_tiles = _round_up(n_tiles, num_tc)       # balanced work for both TCs
    B_pad = n_tiles * tile_m

    x_p = jnp.pad(x, ((0, B_pad - B), (0, in_s - in_f)))

    vmem_limit = int(min(max(vmem_need(tile_m, 2), 32 << 20), budget))
    cost = pl.CostEstimate(
        flops=int(flops_per_row) * int(B_pad),
        transcendentals=int(B_pad * len(block_params)),
        bytes_accessed=int(x_p.size * x_p.dtype.itemsize
                           + B_pad * out_p * 4 + weight_bytes),
    )

    kernel = _make_decoder_kernel(tuple(block_struct), hid_p, out_f, compute_dtype)

    def call(single_buffer_weights):
        def const_spec(arr):
            if single_buffer_weights:
                # Constant index_map -> one resident buffer is enough.
                return pl.BlockSpec(arr.shape, lambda i: (0, 0),
                                    pipeline_mode=pl.Buffered(1))
            return pl.BlockSpec(arr.shape, lambda i: (0, 0))

        in_specs = [pl.BlockSpec((tile_m, in_s), lambda i: (i, 0))]
        in_specs += [const_spec(a) for a in weight_args]
        return pl.pallas_call(
            kernel,
            out_shape=jax.ShapeDtypeStruct((B_pad, out_p), x.dtype),
            grid_spec=pltpu.PrefetchScalarGridSpec(
                num_scalar_prefetch=0,
                grid=(n_tiles,),
                in_specs=in_specs,
                out_specs=pl.BlockSpec((tile_m, out_p), lambda i: (i, 0)),
            ),
            compiler_params=pltpu.CompilerParams(
                dimension_semantics=("parallel",),
                vmem_limit_bytes=vmem_limit,
            ),
            cost_estimate=cost,
        )(x_p, *weight_args)

    try:
        out = call(True)       # single-buffer the constant weight operands
    except Exception:
        out = call(False)      # fallback: default double-buffering

    return out[:B, :out_f]


# -------------------------- reference (pure JAX) --------------------------
def _residual_block_ref(x, params):
    h = jnp.maximum(x @ params["w1"] + params["b1"], 0.0)
    y = h @ params["w2"] + params["b2"]
    res = x @ params["ws"] + params["bs"] if "ws" in params else x
    z = y + res
    mean = jnp.mean(z, axis=-1, keepdims=True)
    var = jnp.mean(jnp.square(z - mean), axis=-1, keepdims=True)
    zn = (z - mean) * jax.lax.rsqrt(var + LN_EPS)
    return zn * params["gamma"] + params["beta"]


def _decoder_ref(x, block_params):
    for p in block_params:
        x = _residual_block_ref(x, p)
    return x


# ------------------------ deterministic param init ------------------------
def init_residual_block(key, in_f, hid_f, out_f):
    ks = jax.random.split(key, 6)
    scale1 = 1.0 / jnp.sqrt(in_f)
    scale2 = 1.0 / jnp.sqrt(hid_f)
    params = {
        "w1": jax.random.uniform(ks[0], (in_f, hid_f), jnp.float32, -scale1, scale1),
        "b1": jax.random.uniform(ks[1], (1, hid_f), jnp.float32, -scale1, scale1),
        "w2": jax.random.uniform(ks[2], (hid_f, out_f), jnp.float32, -scale2, scale2),
        "b2": jax.random.uniform(ks[3], (1, out_f), jnp.float32, -scale2, scale2),
        "gamma": jnp.ones((1, out_f), jnp.float32),
        "beta": jnp.zeros((1, out_f), jnp.float32),
    }
    if in_f != out_f:  # Linear shortcut only when dims differ (matches PyTorch)
        params["ws"] = jax.random.uniform(
            ks[4], (in_f, out_f), jnp.float32, -scale1, scale1)
        params["bs"] = jax.random.uniform(
            ks[5], (1, out_f), jnp.float32, -scale1, scale1)
    return params


def init_tide_dense_decoder(key, in_features, hid_features, out_features,
                            num_blocks=1):
    keys = jax.random.split(key, num_blocks)
    blocks = []
    f_in = in_features
    for i in range(num_blocks):
        blocks.append(init_residual_block(keys[i], f_in, hid_features, out_features))
        f_in = out_features
    return blocks


if __name__ == "__main__":
    key = jax.random.PRNGKey(0)
    k_x, k_p = jax.random.split(key)

    # Module-consistent small shapes: batch big enough to exercise multi-step
    # grids on v7x; features are TiDE-like small widths.
    batch, in_features, hid_features, out_features = 256, 32, 48, 24
    num_blocks = 2  # block 0 uses a Linear shortcut; block 1 uses identity

    x = jax.random.normal(k_x, (batch, in_features), jnp.float32)
    block_params = init_tide_dense_decoder(
        k_p, in_features, hid_features, out_features, num_blocks=num_blocks)

    ref = _decoder_ref(x, block_params)

    # 1) Tight numeric check with f32 MXU inputs.
    out_f32 = jax.block_until_ready(
        tide_dense_decoder_pallas(x, block_params, compute_dtype=jnp.float32))
    assert out_f32.shape == (batch, out_features)
    assert jnp.allclose(out_f32, ref, atol=5e-4, rtol=5e-4), \
        "f32 mismatch vs. JAX reference"

    # 2) Auto per-generation config (bf16 MXU inputs on v6e/v7x) -- looser tol.
    out_auto = jax.block_until_ready(tide_dense_decoder_pallas(x, block_params))
    assert out_auto.shape == (batch, out_features)
    assert jnp.allclose(out_auto, ref, atol=7.5e-2, rtol=7.5e-2), \
        "auto-dtype mismatch vs. JAX reference"

    print("KERNEL_OK")
</pallas_src>

<mosaic_0001>
module attributes {stable_mosaic.version = 11 : i64} {
  func.func @kernel(%arg0: i32, %arg1: memref<256x32xf32, #tpu.memory_space<vmem>>, %arg2: memref<32x256xf32, #tpu.memory_space<vmem>>, %arg3: memref<1x256xf32, #tpu.memory_space<vmem>>, %arg4: memref<128x128xf32, #tpu.memory_space<vmem>>, %arg5: memref<3x128xf32, #tpu.memory_space<vmem>>, %arg6: memref<128x128xf32, #tpu.memory_space<vmem>>, %arg7: memref<1x128xf32, #tpu.memory_space<vmem>>, %arg8: memref<128x128xf32, #tpu.memory_space<vmem>>, %arg9: memref<3x128xf32, #tpu.memory_space<vmem>>, %arg10: memref<256x128xf32, #tpu.memory_space<vmem>>) attributes {dimension_semantics = [#tpu.dimension_semantics<parallel>], iteration_bounds = array<i64: 1>, scalar_prefetch = 0 : i64, scratch_operands = 0 : i64, tpu.core_type = #tpu.core_type<tc>, window_params = [{transform_indices = @transform_0, window_bounds = array<i64: 256, 32>}, {pipeline_mode = #tpu.pipeline_mode<synchronous>, transform_indices = @transform_1, window_bounds = array<i64: 32, 256>}, {pipeline_mode = #tpu.pipeline_mode<synchronous>, transform_indices = @transform_2, window_bounds = array<i64: 1, 256>}, {pipeline_mode = #tpu.pipeline_mode<synchronous>, transform_indices = @transform_3, window_bounds = array<i64: 128, 128>}, {pipeline_mode = #tpu.pipeline_mode<synchronous>, transform_indices = @transform_4, window_bounds = array<i64: 3, 128>}, {pipeline_mode = #tpu.pipeline_mode<synchronous>, transform_indices = @transform_5, window_bounds = array<i64: 128, 128>}, {pipeline_mode = #tpu.pipeline_mode<synchronous>, transform_indices = @transform_6, window_bounds = array<i64: 1, 128>}, {pipeline_mode = #tpu.pipeline_mode<synchronous>, transform_indices = @transform_7, window_bounds = array<i64: 128, 128>}, {pipeline_mode = #tpu.pipeline_mode<synchronous>, transform_indices = @transform_8, window_bounds = array<i64: 3, 128>}, {transform_indices = @transform_9, window_bounds = array<i64: 256, 128>}]} {
    %c0 = arith.constant 0 : index
    %c0_0 = arith.constant 0 : index
    %0 = vector.load %arg1[%c0, %c0_0] : memref<256x32xf32, #tpu.memory_space<vmem>>, vector<256x32xf32>
    %c0_1 = arith.constant 0 : index
    %c0_2 = arith.constant 0 : index
    %1 = vector.load %arg2[%c0_1, %c0_2] : memref<32x256xf32, #tpu.memory_space<vmem>>, vector<32x256xf32>
    %cst = arith.constant dense<0.000000e+00> : vector<256x256xf32>
    %2 = tpu.matmul %0, %1, %cst {dimension_numbers = #tpu.dot_dimension_numbers<[1], [0], [0], [1], [0, 0, 1, 1], [], []>} : vector<256x32xf32>, vector<32x256xf32>, vector<256x256xf32> -> vector<256x256xf32>
    %c0_3 = arith.constant 0 : index
    %c0_4 = arith.constant 0 : index
    %3 = vector.load %arg3[%c0_3, %c0_4] : memref<1x256xf32, #tpu.memory_space<vmem>>, vector<1x256xf32>
    %4 = vector.broadcast %3 : vector<1x256xf32> to vector<256x256xf32>
    %5 = arith.addf %2, %4 : vector<256x256xf32>
    %6 = vector.extract_strided_slice %5 {offsets = [0, 0], sizes = [256, 128], strides = [1, 1]} : vector<256x256xf32> to vector<256x128xf32>
    %cst_5 = arith.constant 0.000000e+00 : f32
    %7 = vector.broadcast %cst_5 : f32 to vector<256x128xf32>
    %8 = arith.maximumf %6, %7 : vector<256x128xf32>
    %9 = vector.extract_strided_slice %5 {offsets = [0, 128], sizes = [256, 128], strides = [1, 1]} : vector<256x256xf32> to vector<256x128xf32>
    %c0_6 = arith.constant 0 : index
    %c0_7 = arith.constant 0 : index
    %10 = vector.load %arg5[%c0_6, %c0_7] : memref<3x128xf32, #tpu.memory_space<vmem>>, vector<3x128xf32>
    %c0_8 = arith.constant 0 : index
    %c0_9 = arith.constant 0 : index
    %11 = vector.load %arg4[%c0_8, %c0_9] : memref<128x128xf32, #tpu.memory_space<vmem>>, vector<128x128xf32>
    %cst_10 = arith.constant dense<0.000000e+00> : vector<256x128xf32>
    %12 = tpu.matmul %8, %11, %cst_10 {dimension_numbers = #tpu.dot_dimension_numbers<[1], [0], [0], [1], [0, 0, 1, 1], [], []>} : vector<256x128xf32>, vector<128x128xf32>, vector<256x128xf32> -> vector<256x128xf32>
    %13 = vector.extract_strided_slice %10 {offsets = [0, 0], sizes = [1, 128], strides = [1, 1]} : vector<3x128xf32> to vector<1x128xf32>
    %14 = vector.broadcast %13 : vector<1x128xf32> to vector<256x128xf32>
    %15 = arith.addf %12, %14 : vector<256x128xf32>
    %16 = arith.addf %15, %9 : vector<256x128xf32>
    %cst_11 = arith.constant dense<0.000000e+00> : vector<256xf32>
    %17 = vector.multi_reduction <add>, %16, %cst_11 [1] : vector<256x128xf32> to vector<256xf32>
    %18 = vector.shape_cast %17 : vector<256xf32> to vector<256x1xf32>
    %cst_12 = arith.constant 0.0416666679 : f32
    %19 = vector.broadcast %cst_12 : f32 to vector<256x1xf32>
    %20 = arith.mulf %18, %19 : vector<256x1xf32>
    %21 = arith.mulf %16, %16 : vector<256x128xf32>
    %cst_13 = arith.constant dense<0.000000e+00> : vector<256xf32>
    %22 = vector.multi_reduction <add>, %21, %cst_13 [1] : vector<256x128xf32> to vector<256xf32>
    %23 = vector.shape_cast %22 : vector<256xf32> to vector<256x1xf32>
    %cst_14 = arith.constant 0.0416666679 : f32
    %24 = vector.broadcast %cst_14 : f32 to vector<256x1xf32>
    %25 = arith.mulf %23, %24 : vector<256x1xf32>
    %26 = arith.mulf %20, %20 : vector<256x1xf32>
    %27 = arith.subf %25, %26 : vector<256x1xf32>
    %cst_15 = arith.constant 0.000000e+00 : f32
    %28 = vector.broadcast %cst_15 : f32 to vector<256x1xf32>
    %29 = arith.maximumf %27, %28 : vector<256x1xf32>
    %30 = vector.broadcast %20 : vector<256x1xf32> to vector<256x128xf32>
    %31 = arith.subf %16, %30 : vector<256x128xf32>
    %cst_16 = arith.constant 9.99999974E-6 : f32
    %32 = vector.broadcast %cst_16 : f32 to vector<256x1xf32>
    %33 = arith.addf %29, %32 : vector<256x1xf32>
    %34 = math.rsqrt %33 : vector<256x1xf32>
    %35 = vector.broadcast %34 : vector<256x1xf32> to vector<256x128xf32>
    %36 = arith.mulf %31, %35 : vector<256x128xf32>
    %37 = vector.extract_strided_slice %10 {offsets = [1, 0], sizes = [1, 128], strides = [1, 1]} : vector<3x128xf32> to vector<1x128xf32>
    %38 = vector.broadcast %37 : vector<1x128xf32> to vector<256x128xf32>
    %39 = arith.mulf %36, %38 : vector<256x128xf32>
    %40 = vector.extract_strided_slice %10 {offsets = [2, 0], sizes = [1, 128], strides = [1, 1]} : vector<3x128xf32> to vector<1x128xf32>
    %41 = vector.broadcast %40 : vector<1x128xf32> to vector<256x128xf32>
    %42 = arith.addf %39, %41 : vector<256x128xf32>
    %c0_17 = arith.constant 0 : index
    %c0_18 = arith.constant 0 : index
    %43 = vector.load %arg6[%c0_17, %c0_18] : memref<128x128xf32, #tpu.memory_space<vmem>>, vector<128x128xf32>
    %cst_19 = arith.constant dense<0.000000e+00> : vector<256x128xf32>
    %44 = tpu.matmul %42, %43, %cst_19 {dimension_numbers = #tpu.dot_dimension_numbers<[1], [0], [0], [1], [0, 0, 1, 1], [], []>} : vector<256x128xf32>, vector<128x128xf32>, vector<256x128xf32> -> vector<256x128xf32>
    %c0_20 = arith.constant 0 : index
    %c0_21 = arith.constant 0 : index
    %45 = vector.load %arg7[%c0_20, %c0_21] : memref<1x128xf32, #tpu.memory_space<vmem>>, vector<1x128xf32>
    %46 = vector.broadcast %45 : vector<1x128xf32> to vector<256x128xf32>
    %47 = arith.addf %44, %46 : vector<256x128xf32>
    %cst_22 = arith.constant 0.000000e+00 : f32
    %48 = vector.broadcast %cst_22 : f32 to vector<256x128xf32>
    %49 = arith.maximumf %47, %48 : vector<256x128xf32>
    %c0_23 = arith.constant 0 : index
    %c0_24 = arith.constant 0 : index
    %50 = vector.load %arg9[%c0_23, %c0_24] : memref<3x128xf32, #tpu.memory_space<vmem>>, vector<3x128xf32>
    %c0_25 = arith.constant 0 : index
    %c0_26 = arith.constant 0 : index
    %51 = vector.load %arg8[%c0_25, %c0_26] : memref<128x128xf32, #tpu.memory_space<vmem>>, vector<128x128xf32>
    %cst_27 = arith.constant dense<0.000000e+00> : vector<256x128xf32>
    %52 = tpu.matmul %49, %51, %cst_27 {dimension_numbers = #tpu.dot_dimension_numbers<[1], [0], [0], [1], [0, 0, 1, 1], [], []>} : vector<256x128xf32>, vector<128x128xf32>, vector<256x128xf32> -> vector<256x128xf32>
    %53 = vector.extract_strided_slice %50 {offsets = [0, 0], sizes = [1, 128], strides = [1, 1]} : vector<3x128xf32> to vector<1x128xf32>
    %54 = vector.broadcast %53 : vector<1x128xf32> to vector<256x128xf32>
    %55 = arith.addf %52, %54 : vector<256x128xf32>
    %56 = arith.addf %55, %42 : vector<256x128xf32>
    %cst_28 = arith.constant dense<0.000000e+00> : vector<256xf32>
    %57 = vector.multi_reduction <add>, %56, %cst_28 [1] : vector<256x128xf32> to vector<256xf32>
    %58 = vector.shape_cast %57 : vector<256xf32> to vector<256x1xf32>
    %cst_29 = arith.constant 0.0416666679 : f32
    %59 = vector.broadcast %cst_29 : f32 to vector<256x1xf32>
    %60 = arith.mulf %58, %59 : vector<256x1xf32>
    %61 = arith.mulf %56, %56 : vector<256x128xf32>
    %cst_30 = arith.constant dense<0.000000e+00> : vector<256xf32>
    %62 = vector.multi_reduction <add>, %61, %cst_30 [1] : vector<256x128xf32> to vector<256xf32>
    %63 = vector.shape_cast %62 : vector<256xf32> to vector<256x1xf32>
    %cst_31 = arith.constant 0.0416666679 : f32
    %64 = vector.broadcast %cst_31 : f32 to vector<256x1xf32>
    %65 = arith.mulf %63, %64 : vector<256x1xf32>
    %66 = arith.mulf %60, %60 : vector<256x1xf32>
    %67 = arith.subf %65, %66 : vector<256x1xf32>
    %cst_32 = arith.constant 0.000000e+00 : f32
    %68 = vector.broadcast %cst_32 : f32 to vector<256x1xf32>
    %69 = arith.maximumf %67, %68 : vector<256x1xf32>
    %70 = vector.broadcast %60 : vector<256x1xf32> to vector<256x128xf32>
    %71 = arith.subf %56, %70 : vector<256x128xf32>
    %cst_33 = arith.constant 9.99999974E-6 : f32
    %72 = vector.broadcast %cst_33 : f32 to vector<256x1xf32>
    %73 = arith.addf %69, %72 : vector<256x1xf32>
    %74 = math.rsqrt %73 : vector<256x1xf32>
    %75 = vector.broadcast %74 : vector<256x1xf32> to vector<256x128xf32>
    %76 = arith.mulf %71, %75 : vector<256x128xf32>
    %77 = vector.extract_strided_slice %50 {offsets = [1, 0], sizes = [1, 128], strides = [1, 1]} : vector<3x128xf32> to vector<1x128xf32>
    %78 = vector.broadcast %77 : vector<1x128xf32> to vector<256x128xf32>
    %79 = arith.mulf %76, %78 : vector<256x128xf32>
    %80 = vector.extract_strided_slice %50 {offsets = [2, 0], sizes = [1, 128], strides = [1, 1]} : vector<3x128xf32> to vector<1x128xf32>
    %81 = vector.broadcast %80 : vector<1x128xf32> to vector<256x128xf32>
    %82 = arith.addf %79, %81 : vector<256x128xf32>
    %c0_34 = arith.constant 0 : index
    %c0_35 = arith.constant 0 : index
    %83 = vector.load %arg10[%c0_34, %c0_35] : memref<256x128xf32, #tpu.memory_space<vmem>>, vector<256x128xf32>
    tpu.vector_store %arg10[%c0_34, %c0_35], %82 {strides = array<i32>} : memref<256x128xf32, #tpu.memory_space<vmem>>, vector<256x128xf32>,
    return
  }
  func.func @transform_0(%arg0: i32) -> (i32, i32) {
    %c0_i32 = arith.constant 0 : i32
    %c0_i32_0 = arith.constant 0 : i32
    return %arg0, %c0_i32 : i32, i32
  }
  func.func @transform_1(%arg0: i32) -> (i32, i32) {
    %c0_i32 = arith.constant 0 : i32
    %c0_i32_0 = arith.constant 0 : i32
    %c0_i32_1 = arith.constant 0 : i32
    return %c0_i32, %c0_i32_0 : i32, i32
  }
  func.func @transform_2(%arg0: i32) -> (i32, i32) {
    %c0_i32 = arith.constant 0 : i32
    %c0_i32_0 = arith.constant 0 : i32
    %c0_i32_1 = arith.constant 0 : i32
    return %c0_i32, %c0_i32_0 : i32, i32
  }
  func.func @transform_3(%arg0: i32) -> (i32, i32) {
    %c0_i32 = arith.constant 0 : i32
    %c0_i32_0 = arith.constant 0 : i32
    %c0_i32_1 = arith.constant 0 : i32
    return %c0_i32, %c0_i32_0 : i32, i32
  }
  func.func @transform_4(%arg0: i32) -> (i32, i32) {
    %c0_i32 = arith.constant 0 : i32
    %c0_i32_0 = arith.constant 0 : i32
    %c0_i32_1 = arith.constant 0 : i32
    return %c0_i32, %c0_i32_0 : i32, i32
  }
  func.func @transform_5(%arg0: i32) -> (i32, i32) {
    %c0_i32 = arith.constant 0 : i32
    %c0_i32_0 = arith.constant 0 : i32
    %c0_i32_1 = arith.constant 0 : i32
    return %c0_i32, %c0_i32_0 : i32, i32
  }
  func.func @transform_6(%arg0: i32) -> (i32, i32) {
    %c0_i32 = arith.constant 0 : i32
    %c0_i32_0 = arith.constant 0 : i32
    %c0_i32_1 = arith.constant 0 : i32
    return %c0_i32, %c0_i32_0 : i32, i32
  }
  func.func @transform_7(%arg0: i32) -> (i32, i32) {
    %c0_i32 = arith.constant 0 : i32
    %c0_i32_0 = arith.constant 0 : i32
    %c0_i32_1 = arith.constant 0 : i32
    return %c0_i32, %c0_i32_0 : i32, i32
  }
  func.func @transform_8(%arg0: i32) -> (i32, i32) {
    %c0_i32 = arith.constant 0 : i32
    %c0_i32_0 = arith.constant 0 : i32
    %c0_i32_1 = arith.constant 0 : i32
    return %c0_i32, %c0_i32_0 : i32, i32
  }
  func.func @transform_9(%arg0: i32) -> (i32, i32) {
    %c0_i32 = arith.constant 0 : i32
    %c0_i32_0 = arith.constant 0 : i32
    return %arg0, %c0_i32 : i32, i32
  }
}

module attributes {stable_mosaic.version = 11 : i64} {
  func.func @kernel(%arg0: i32, %arg1: memref<256x32xf32, #tpu.memory_space<vmem>>, %arg2: memref<32x256xf32, #tpu.memory_space<vmem>>, %arg3: memref<1x256xf32, #tpu.memory_space<vmem>>, %arg4: memref<128x128xf32, #tpu.memory_space<vmem>>, %arg5: memref<3x128xf32, #tpu.memory_space<vmem>>, %arg6: memref<128x128xf32, #tpu.memory_space<vmem>>, %arg7: memref<1x128xf32, #tpu.memory_space<vmem>>, %arg8: memref<128x128xf32, #tpu.memory_space<vmem>>, %arg9: memref<3x128xf32, #tpu.memory_space<vmem>>, %arg10: memref<256x128xf32, #tpu.memory_space<vmem>>) attributes {dimension_semantics = [#tpu.dimension_semantics<parallel>], iteration_bounds = array<i64: 1>, scalar_prefetch = 0 : i64, scratch_operands = 0 : i64, tpu.core_type = #tpu.core_type<tc>, window_params = [{transform_indices = @transform_0, window_bounds = array<i64: 256, 32>}, {pipeline_mode = #tpu.pipeline_mode<synchronous>, transform_indices = @transform_1, window_bounds = array<i64: 32, 256>}, {pipeline_mode = #tpu.pipeline_mode<synchronous>, transform_indices = @transform_2, window_bounds = array<i64: 1, 256>}, {pipeline_mode = #tpu.pipeline_mode<synchronous>, transform_indices = @transform_3, window_bounds = array<i64: 128, 128>}, {pipeline_mode = #tpu.pipeline_mode<synchronous>, transform_indices = @transform_4, window_bounds = array<i64: 3, 128>}, {pipeline_mode = #tpu.pipeline_mode<synchronous>, transform_indices = @transform_5, window_bounds = array<i64: 128, 128>}, {pipeline_mode = #tpu.pipeline_mode<synchronous>, transform_indices = @transform_6, window_bounds = array<i64: 1, 128>}, {pipeline_mode = #tpu.pipeline_mode<synchronous>, transform_indices = @transform_7, window_bounds = array<i64: 128, 128>}, {pipeline_mode = #tpu.pipeline_mode<synchronous>, transform_indices = @transform_8, window_bounds = array<i64: 3, 128>}, {transform_indices = @transform_9, window_bounds = array<i64: 256, 128>}]} {
    %c0 = arith.constant 0 : index
    %c0_0 = arith.constant 0 : index
    %0 = vector.load %arg1[%c0, %c0_0] : memref<256x32xf32, #tpu.memory_space<vmem>>, vector<256x32xf32>
    %c0_1 = arith.constant 0 : index
    %c0_2 = arith.constant 0 : index
    %1 = vector.load %arg2[%c0_1, %c0_2] : memref<32x256xf32, #tpu.memory_space<vmem>>, vector<32x256xf32>
    %cst = arith.constant dense<0.000000e+00> : vector<256x256xf32>
    %2 = tpu.matmul %0, %1, %cst {dimension_numbers = #tpu.dot_dimension_numbers<[1], [0], [0], [1], [0, 0, 1, 1], [], []>} : vector<256x32xf32>, vector<32x256xf32>, vector<256x256xf32> -> vector<256x256xf32>
    %c0_3 = arith.constant 0 : index
    %c0_4 = arith.constant 0 : index
    %3 = vector.load %arg3[%c0_3, %c0_4] : memref<1x256xf32, #tpu.memory_space<vmem>>, vector<1x256xf32>
    %4 = vector.broadcast %3 : vector<1x256xf32> to vector<256x256xf32>
    %5 = arith.addf %2, %4 : vector<256x256xf32>
    %6 = vector.extract_strided_slice %5 {offsets = [0, 0], sizes = [256, 128], strides = [1, 1]} : vector<256x256xf32> to vector<256x128xf32>
    %cst_5 = arith.constant 0.000000e+00 : f32
    %7 = vector.broadcast %cst_5 : f32 to vector<256x128xf32>
    %8 = arith.maximumf %6, %7 : vector<256x128xf32>
    %9 = vector.extract_strided_slice %5 {offsets = [0, 128], sizes = [256, 128], strides = [1, 1]} : vector<256x256xf32> to vector<256x128xf32>
    %c0_6 = arith.constant 0 : index
    %c0_7 = arith.constant 0 : index
    %10 = vector.load %arg5[%c0_6, %c0_7] : memref<3x128xf32, #tpu.memory_space<vmem>>, vector<3x128xf32>
    %c0_8 = arith.constant 0 : index
    %c0_9 = arith.constant 0 : index
    %11 = vector.load %arg4[%c0_8, %c0_9] : memref<128x128xf32, #tpu.memory_space<vmem>>, vector<128x128xf32>
    %cst_10 = arith.constant dense<0.000000e+00> : vector<256x128xf32>
    %12 = tpu.matmul %8, %11, %cst_10 {dimension_numbers = #tpu.dot_dimension_numbers<[1], [0], [0], [1], [0, 0, 1, 1], [], []>} : vector<256x128xf32>, vector<128x128xf32>, vector<256x128xf32> -> vector<256x128xf32>
    %13 = vector.extract_strided_slice %10 {offsets = [0, 0], sizes = [1, 128], strides = [1, 1]} : vector<3x128xf32> to vector<1x128xf32>
    %14 = vector.broadcast %13 : vector<1x128xf32> to vector<256x128xf32>
    %15 = arith.addf %12, %14 : vector<256x128xf32>
    %16 = arith.addf %15, %9 : vector<256x128xf32>
    %cst_11 = arith.constant dense<0.000000e+00> : vector<256xf32>
    %17 = vector.multi_reduction <add>, %16, %cst_11 [1] : vector<256x128xf32> to vector<256xf32>
    %18 = vector.shape_cast %17 : vector<256xf32> to vector<256x1xf32>
    %cst_12 = arith.constant 0.0416666679 : f32
    %19 = vector.broadcast %cst_12 : f32 to vector<256x1xf32>
    %20 = arith.mulf %18, %19 : vector<256x1xf32>
    %21 = arith.mulf %16, %16 : vector<256x128xf32>
    %cst_13 = arith.constant dense<0.000000e+00> : vector<256xf32>
    %22 = vector.multi_reduction <add>, %21, %cst_13 [1] : vector<256x128xf32> to vector<256xf32>
    %23 = vector.shape_cast %22 : vector<256xf32> to vector<256x1xf32>
    %cst_14 = arith.constant 0.0416666679 : f32
    %24 = vector.broadcast %cst_14 : f32 to vector<256x1xf32>
    %25 = arith.mulf %23, %24 : vector<256x1xf32>
    %26 = arith.mulf %20, %20 : vector<256x1xf32>
    %27 = arith.subf %25, %26 : vector<256x1xf32>
    %cst_15 = arith.constant 0.000000e+00 : f32
    %28 = vector.broadcast %cst_15 : f32 to vector<256x1xf32>
    %29 = arith.maximumf %27, %28 : vector<256x1xf32>
    %30 = vector.broadcast %20 : vector<256x1xf32> to vector<256x128xf32>
    %31 = arith.subf %16, %30 : vector<256x128xf32>
    %cst_16 = arith.constant 9.99999974E-6 : f32
    %32 = vector.broadcast %cst_16 : f32 to vector<256x1xf32>
    %33 = arith.addf %29, %32 : vector<256x1xf32>
    %34 = math.rsqrt %33 : vector<256x1xf32>
    %35 = vector.broadcast %34 : vector<256x1xf32> to vector<256x128xf32>
    %36 = arith.mulf %31, %35 : vector<256x128xf32>
    %37 = vector.extract_strided_slice %10 {offsets = [1, 0], sizes = [1, 128], strides = [1, 1]} : vector<3x128xf32> to vector<1x128xf32>
    %38 = vector.broadcast %37 : vector<1x128xf32> to vector<256x128xf32>
    %39 = arith.mulf %36, %38 : vector<256x128xf32>
    %40 = vector.extract_strided_slice %10 {offsets = [2, 0], sizes = [1, 128], strides = [1, 1]} : vector<3x128xf32> to vector<1x128xf32>
    %41 = vector.broadcast %40 : vector<1x128xf32> to vector<256x128xf32>
    %42 = arith.addf %39, %41 : vector<256x128xf32>
    %c0_17 = arith.constant 0 : index
    %c0_18 = arith.constant 0 : index
    %43 = vector.load %arg6[%c0_17, %c0_18] : memref<128x128xf32, #tpu.memory_space<vmem>>, vector<128x128xf32>
    %cst_19 = arith.constant dense<0.000000e+00> : vector<256x128xf32>
    %44 = tpu.matmul %42, %43, %cst_19 {dimension_numbers = #tpu.dot_dimension_numbers<[1], [0], [0], [1], [0, 0, 1, 1], [], []>} : vector<256x128xf32>, vector<128x128xf32>, vector<256x128xf32> -> vector<256x128xf32>
    %c0_20 = arith.constant 0 : index
    %c0_21 = arith.constant 0 : index
    %45 = vector.load %arg7[%c0_20, %c0_21] : memref<1x128xf32, #tpu.memory_space<vmem>>, vector<1x128xf32>
    %46 = vector.broadcast %45 : vector<1x128xf32> to vector<256x128xf32>
    %47 = arith.addf %44, %46 : vector<256x128xf32>
    %cst_22 = arith.constant 0.000000e+00 : f32
    %48 = vector.broadcast %cst_22 : f32 to vector<256x128xf32>
    %49 = arith.maximumf %47, %48 : vector<256x128xf32>
    %c0_23 = arith.constant 0 : index
    %c0_24 = arith.constant 0 : index
    %50 = vector.load %arg9[%c0_23, %c0_24] : memref<3x128xf32, #tpu.memory_space<vmem>>, vector<3x128xf32>
    %c0_25 = arith.constant 0 : index
    %c0_26 = arith.constant 0 : index
    %51 = vector.load %arg8[%c0_25, %c0_26] : memref<128x128xf32, #tpu.memory_space<vmem>>, vector<128x128xf32>
    %cst_27 = arith.constant dense<0.000000e+00> : vector<256x128xf32>
    %52 = tpu.matmul %49, %51, %cst_27 {dimension_numbers = #tpu.dot_dimension_numbers<[1], [0], [0], [1], [0, 0, 1, 1], [], []>} : vector<256x128xf32>, vector<128x128xf32>, vector<256x128xf32> -> vector<256x128xf32>
    %53 = vector.extract_strided_slice %50 {offsets = [0, 0], sizes = [1, 128], strides = [1, 1]} : vector<3x128xf32> to vector<1x128xf32>
    %54 = vector.broadcast %53 : vector<1x128xf32> to vector<256x128xf32>
    %55 = arith.addf %52, %54 : vector<256x128xf32>
    %56 = arith.addf %55, %42 : vector<256x128xf32>
    %cst_28 = arith.constant dense<0.000000e+00> : vector<256xf32>
    %57 = vector.multi_reduction <add>, %56, %cst_28 [1] : vector<256x128xf32> to vector<256xf32>
    %58 = vector.shape_cast %57 : vector<256xf32> to vector<256x1xf32>
    %cst_29 = arith.constant 0.0416666679 : f32
    %59 = vector.broadcast %cst_29 : f32 to vector<256x1xf32>
    %60 = arith.mulf %58, %59 : vector<256x1xf32>
    %61 = arith.mulf %56, %56 : vector<256x128xf32>
    %cst_30 = arith.constant dense<0.000000e+00> : vector<256xf32>
    %62 = vector.multi_reduction <add>, %61, %cst_30 [1] : vector<256x128xf32> to vector<256xf32>
    %63 = vector.shape_cast %62 : vector<256xf32> to vector<256x1xf32>
    %cst_31 = arith.constant 0.0416666679 : f32
    %64 = vector.broadcast %cst_31 : f32 to vector<256x1xf32>
    %65 = arith.mulf %63, %64 : vector<256x1xf32>
    %66 = arith.mulf %60, %60 : vector<256x1xf32>
    %67 = arith.subf %65, %66 : vector<256x1xf32>
    %cst_32 = arith.constant 0.000000e+00 : f32
    %68 = vector.broadcast %cst_32 : f32 to vector<256x1xf32>
    %69 = arith.maximumf %67, %68 : vector<256x1xf32>
    %70 = vector.broadcast %60 : vector<256x1xf32> to vector<256x128xf32>
    %71 = arith.subf %56, %70 : vector<256x128xf32>
    %cst_33 = arith.constant 9.99999974E-6 : f32
    %72 = vector.broadcast %cst_33 : f32 to vector<256x1xf32>
    %73 = arith.addf %69, %72 : vector<256x1xf32>
    %74 = math.rsqrt %73 : vector<256x1xf32>
    %75 = vector.broadcast %74 : vector<256x1xf32> to vector<256x128xf32>
    %76 = arith.mulf %71, %75 : vector<256x128xf32>
    %77 = vector.extract_strided_slice %50 {offsets = [1, 0], sizes = [1, 128], strides = [1, 1]} : vector<3x128xf32> to vector<1x128xf32>
    %78 = vector.broadcast %77 : vector<1x128xf32> to vector<256x128xf32>
    %79 = arith.mulf %76, %78 : vector<256x128xf32>
    %80 = vector.extract_strided_slice %50 {offsets = [2, 0], sizes = [1, 128], strides = [1, 1]} : vector<3x128xf32> to vector<1x128xf32>
    %81 = vector.broadcast %80 : vector<1x128xf32> to vector<256x128xf32>
    %82 = arith.addf %79, %81 : vector<256x128xf32>
    %c0_34 = arith.constant 0 : index
    %c0_35 = arith.constant 0 : index
    %83 = vector.load %arg10[%c0_34, %c0_35] : memref<256x128xf32, #tpu.memory_space<vmem>>, vector<256x128xf32>
    tpu.vector_store %arg10[%c0_34, %c0_35], %82 {strides = array<i32>} : memref<256x128xf32, #tpu.memory_space<vmem>>, vector<256x128xf32>,
    return
  }
  func.func @transform_0(%arg0: i32) -> (i32, i32) {
    %c0_i32 = arith.constant 0 : i32
    %c0_i32_0 = arith.constant 0 : i32
    return %arg0, %c0_i32 : i32, i32
  }
  func.func @transform_1(%arg0: i32) -> (i32, i32) {
    %c0_i32 = arith.constant 0 : i32
    %c0_i32_0 = arith.constant 0 : i32
    %c0_i32_1 = arith.constant 0 : i32
    return %c0_i32, %c0_i32_0 : i32, i32
  }
  func.func @transform_2(%arg0: i32) -> (i32, i32) {
    %c0_i32 = arith.constant 0 : i32
    %c0_i32_0 = arith.constant 0 : i32
    %c0_i32_1 = arith.constant 0 : i32
    return %c0_i32, %c0_i32_0 : i32, i32
  }
  func.func @transform_3(%arg0: i32) -> (i32, i32) {
    %c0_i32 = arith.constant 0 : i32
    %c0_i32_0 = arith.constant 0 : i32
    %c0_i32_1 = arith.constant 0 : i32
    return %c0_i32, %c0_i32_0 : i32, i32
  }
  func.func @transform_4(%arg0: i32) -> (i32, i32) {
    %c0_i32 = arith.constant 0 : i32
    %c0_i32_0 = arith.constant 0 : i32
    %c0_i32_1 = arith.constant 0 : i32
    return %c0_i32, %c0_i32_0 : i32, i32
  }
  func.func @transform_5(%arg0: i32) -> (i32, i32) {
    %c0_i32 = arith.constant 0 : i32
    %c0_i32_0 = arith.constant 0 : i32
    %c0_i32_1 = arith.constant 0 : i32
    return %c0_i32, %c0_i32_0 : i32, i32
  }
  func.func @transform_6(%arg0: i32) -> (i32, i32) {
    %c0_i32 = arith.constant 0 : i32
    %c0_i32_0 = arith.constant 0 : i32
    %c0_i32_1 = arith.constant 0 : i32
    return %c0_i32, %c0_i32_0 : i32, i32
  }
  func.func @transform_7(%arg0: i32) -> (i32, i32) {
    %c0_i32 = arith.constant 0 : i32
    %c0_i32_0 = arith.constant 0 : i32
    %c0_i32_1 = arith.constant 0 : i32
    return %c0_i32, %c0_i32_0 : i32, i32
  }
  func.func @transform_8(%arg0: i32) -> (i32, i32) {
    %c0_i32 = arith.constant 0 : i32
    %c0_i32_0 = arith.constant 0 : i32
    %c0_i32_1 = arith.constant 0 : i32
    return %c0_i32, %c0_i32_0 : i32, i32
  }
  func.func @transform_9(%arg0: i32) -> (i32, i32) {
    %c0_i32 = arith.constant 0 : i32
    %c0_i32_0 = arith.constant 0 : i32
    return %arg0, %c0_i32 : i32, i32
  }
}

</mosaic_0001>

<llo_original>
// kernel: tpu_custom_call.1
$region0: #{tpu_custom_call.1}
  #allocation0 [shape = 'u32[]', space=smem, size = 0x4, offset = 0x4, fixed_abs, tag = 'smem constant byte address 0x4 - core index']
  #allocation1 [shape = 'u32[144,128]{1,0:T(1,128)}', space=vmem, size = 0x12000, scoped, tag = 'internal scratch']
  %s0 = inlined_call_operand.vmem [shape: f32[256,32], index: 0, kind: input, shape index: {}]
  %s1 = inlined_call_operand.vmem [shape: f32[32,256], index: 1, kind: input, shape index: {}]
  %s2 = inlined_call_operand.vmem [shape: f32[1,256], index: 2, kind: input, shape index: {}]
  %s3 = inlined_call_operand.vmem [shape: f32[128,128], index: 3, kind: input, shape index: {}]
  %s4 = inlined_call_operand.vmem [shape: f32[3,128], index: 4, kind: input, shape index: {}]
  %s5 = inlined_call_operand.vmem [shape: f32[128,128], index: 5, kind: input, shape index: {}]
  %s6 = inlined_call_operand.vmem [shape: f32[1,128], index: 6, kind: input, shape index: {}]
  %s7 = inlined_call_operand.hbm [shape: f32[128,128], index: 7, kind: input, shape index: {}]
  %s8 = inlined_call_operand.vmem [shape: f32[3,128], index: 8, kind: input, shape index: {}]
  %s9 = inlined_call_operand.hbm [shape: f32[256,128], index: 9, kind: output, shape index: {}]
  %s10 = sld [smem:[#allocation0]]
  $region50: #{tpu_custom_call.1} parent=0
    _
  %s12 = ssub.s32 1, %s10
  %s13 = scalar_select 0, %s12, %s10
  $region1: #{tpu_custom_call.1} parent=0
    #allocation2 [shape = 'u8[65536]{0}', space=vmem, size = 0x10000, scoped, tag = 'input window, operand 7, single buffered']
    #allocation3 [shape = 's32[1]{0}', space=sflag, size = 0x4, scoped, tag = 'scoped memory for tpu_custom_call.1']
    #allocation4 [shape = 's32[1]{0}', space=sflag, size = 0x4, scoped, tag = 'scoped memory for tpu_custom_call.1']
    #allocation5 [shape = 'u8[131072]{0}', space=vmem, size = 0x20000, scoped, tag = 'output window, operand 0, single buffered']
    %14 = vsyncpa [#allocation3], 0
    %15 = vsyncpa [#allocation4], 0
    // Predicated region
    $region2: #{tpu_custom_call.1} parent=1 // pred_check
      _
    $region3: #{tpu_custom_call.1} parent=1 // pred_check_branch
      %17 = sbr.rel (0) target = $region5
    $region4: #{tpu_custom_call.1} parent=1 // pred_region
      _
    $region5: #{tpu_custom_call.1} parent=1 // pred_fallthru
      _
    // Predicated region
    $region6: #{tpu_custom_call.1} parent=1 // pred_check
      _
    $region7: #{tpu_custom_call.1} parent=1 // pred_check_branch
      %19 = sbr.rel (0) target = $region9
    $region8: #{tpu_custom_call.1} parent=1 // pred_region
      _
    $region9: #{tpu_custom_call.1} parent=1 // pred_fallthru
      _
    // Predicated region
    $region10: #{tpu_custom_call.1} parent=1 // pred_check
      _
    $region11: #{tpu_custom_call.1} parent=1 // pred_check_branch
      %21 = sbr.rel (0) target = $region13
    $region12: #{tpu_custom_call.1} parent=1 // pred_region
      _
    $region13: #{tpu_custom_call.1} parent=1 // pred_fallthru
      _
    // Predicated region
    $region14: #{tpu_custom_call.1} parent=1 // pred_check
      _
    $region15: #{tpu_custom_call.1} parent=1 // pred_check_branch
      %23 = sbr.rel (0) target = $region17
    $region16: #{tpu_custom_call.1} parent=1 // pred_region
      _
    $region17: #{tpu_custom_call.1} parent=1 // pred_fallthru
      _
    // Predicated region
    $region18: #{tpu_custom_call.1} parent=1 // pred_check
      _
    $region19: #{tpu_custom_call.1} parent=1 // pred_check_branch
      %25 = sbr.rel (0) target = $region21
    $region20: #{tpu_custom_call.1} parent=1 // pred_region
      _
    $region21: #{tpu_custom_call.1} parent=1 // pred_fallthru
      _
    // Predicated region
    $region22: #{tpu_custom_call.1} parent=1 // pred_check
      _
    $region23: #{tpu_custom_call.1} parent=1 // pred_check_branch
      %27 = sbr.rel (0) target = $region25
    $region24: #{tpu_custom_call.1} parent=1 // pred_region
      _
    $region25: #{tpu_custom_call.1} parent=1 // pred_fallthru
      _
    // Predicated region
    $region26: #{tpu_custom_call.1} parent=1 // pred_check
      _
    $region27: #{tpu_custom_call.1} parent=1 // pred_check_branch
      %29 = sbr.rel (0) target = $region29
    $region28: #{tpu_custom_call.1} parent=1 // pred_region
      _
    $region29: #{tpu_custom_call.1} parent=1 // pred_fallthru
      _
    // Predicated region
    $region30: #{tpu_custom_call.1} parent=1 // pred_check
      _
    $region31: #{tpu_custom_call.1} parent=1 // pred_check_branch
      %31 = sbr.rel (0) target = $region33
    $region32: #{tpu_custom_call.1} parent=1 // pred_region
      %s33 = ssub.s32 2048, 2048
      %34 = vsyncadd [#allocation3], %s33
      %s35 = sshll.u32 [#allocation2], 4
      %s36 = int_to_ptr.vmem [resolvable:$true] %s35
      %41 = dma.hbm_to_vmem [thread:$0]  %s7, 2048, %s36, [#allocation3], 128, 128, 8
    $region33: #{tpu_custom_call.1} parent=1 // pred_fallthru
      _
    // Predicated region
    $region34: #{tpu_custom_call.1} parent=1 // pred_check
      _
    $region35: #{tpu_custom_call.1} parent=1 // pred_check_branch
      %43 = sbr.rel (0) target = $region37
    $region36: #{tpu_custom_call.1} parent=1 // pred_region
      _
    $region37: #{tpu_custom_call.1} parent=1 // pred_fallthru
      _
    // Predicated region
    $region38: #{tpu_custom_call.1} parent=1 // pred_check
      _
    $region39: #{tpu_custom_call.1} parent=1 // pred_check_branch
      %45 = sbr.rel (0) target = $region41
    $region40: #{tpu_custom_call.1} parent=1 // pred_region
      %46 = dma.done [#allocation3], 2048
    $region41: #{tpu_custom_call.1} parent=1 // pred_fallthru
      _
    %v47 = vld [vmem:[%s0] sm:$0xff]
    %v48 = vld [vmem:[%s0 + $0x8] sm:$0xff]
    %v49 = vld [vmem:[%s0 + $0x10] sm:$0xff]
    %v50 = vld [vmem:[%s0 + $0x18] sm:$0xff]
    %v51 = vld [vmem:[%s0 + $0x20] sm:$0xff]
    %v52 = vld [vmem:[%s0 + $0x28] sm:$0xff]
    %v53 = vld [vmem:[%s0 + $0x30] sm:$0xff]
    %v54 = vld [vmem:[%s0 + $0x38] sm:$0xff]
    %v55 = vld [vmem:[%s0 + $0x40] sm:$0xff]
    %v56 = vld [vmem:[%s0 + $0x48] sm:$0xff]
    %v57 = vld [vmem:[%s0 + $0x50] sm:$0xff]
    %v58 = vld [vmem:[%s0 + $0x58] sm:$0xff]
    %v59 = vld [vmem:[%s0 + $0x60] sm:$0xff]
    %v60 = vld [vmem:[%s0 + $0x68] sm:$0xff]
    %v61 = vld [vmem:[%s0 + $0x70] sm:$0xff]
    %v62 = vld [vmem:[%s0 + $0x78] sm:$0xff]
    %v63 = vld [vmem:[%s0 + $0x80] sm:$0xff]
    %v64 = vld [vmem:[%s0 + $0x88] sm:$0xff]
    %v65 = vld [vmem:[%s0 + $0x90] sm:$0xff]
    %v66 = vld [vmem:[%s0 + $0x98] sm:$0xff]
    %v67 = vld [vmem:[%s0 + $0xa0] sm:$0xff]
    %v68 = vld [vmem:[%s0 + $0xa8] sm:$0xff]
    %v69 = vld [vmem:[%s0 + $0xb0] sm:$0xff]
    %v70 = vld [vmem:[%s0 + $0xb8] sm:$0xff]
    %v71 = vld [vmem:[%s0 + $0xc0] sm:$0xff]
    %v72 = vld [vmem:[%s0 + $0xc8] sm:$0xff]
    %v73 = vld [vmem:[%s0 + $0xd0] sm:$0xff]
    %v74 = vld [vmem:[%s0 + $0xd8] sm:$0xff]
    %v75 = vld [vmem:[%s0 + $0xe0] sm:$0xff]
    %v76 = vld [vmem:[%s0 + $0xe8] sm:$0xff]
    %v77 = vld [vmem:[%s0 + $0xf0] sm:$0xff]
    %v78 = vld [vmem:[%s0 + $0xf8] sm:$0xff]
    %v79 = vld [vmem:[%s1] sm:$0xff]
    %v80 = vld [vmem:[%s1 + $0x8] sm:$0xff]
    %v81 = vld [vmem:[%s1 + $0x10] sm:$0xff]
    %v82 = vld [vmem:[%s1 + $0x18] sm:$0xff]
    %v83 = vld [vmem:[%s1 + $0x20] sm:$0xff]
    %v84 = vld [vmem:[%s1 + $0x28] sm:$0xff]
    %v85 = vld [vmem:[%s1 + $0x30] sm:$0xff]
    %v86 = vld [vmem:[%s1 + $0x38] sm:$0xff]
    %v87 = vld [vmem:[%s2] sm:$0x3]
    %v89 = vlaneseq
    %v90 = vshrl.u32 %v89, 7
    %v91 = vsub.s32 0, %v90
    %v92 = vrot.slane %v87, %v91
    %v93 = vlaneseq
    %v94 = vshrl.u32 %v93, 7
    %v95 = vsub.s32 1, %v94
    %v96 = vrot.slane %v87, %v95
    %vm99 = vcmask 261120
    %v101 = vsel %vm99, %v47, 0
    %v104 = vsel %vm99, %v48, 0
    %v107 = vsel %vm99, %v49, 0
    %v110 = vsel %vm99, %v50, 0
    %v113 = vsel %vm99, %v51, 0
    %v116 = vsel %vm99, %v52, 0
    %v119 = vsel %vm99, %v53, 0
    %v122 = vsel %vm99, %v54, 0
    %v125 = vsel %vm99, %v55, 0
    %v128 = vsel %vm99, %v56, 0
    %v131 = vsel %vm99, %v57, 0
    %v134 = vsel %vm99, %v58, 0
    %v137 = vsel %vm99, %v59, 0
    %v140 = vsel %vm99, %v60, 0
    %v143 = vsel %vm99, %v61, 0
    %v146 = vsel %vm99, %v62, 0
    %v149 = vsel %vm99, %v63, 0
    %v152 = vsel %vm99, %v64, 0
    %v155 = vsel %vm99, %v65, 0
    %v158 = vsel %vm99, %v66, 0
    %v161 = vsel %vm99, %v67, 0
    %v164 = vsel %vm99, %v68, 0
    %v167 = vsel %vm99, %v69, 0
    %v170 = vsel %vm99, %v70, 0
    %v173 = vsel %vm99, %v71, 0
    %v176 = vsel %vm99, %v72, 0
    %v179 = vsel %vm99, %v73, 0
    %v182 = vsel %vm99, %v74, 0
    %v185 = vsel %vm99, %v75, 0
    %v188 = vsel %vm99, %v76, 0
    %v191 = vsel %vm99, %v77, 0
    %v194 = vsel %vm99, %v78, 0
    %196 = vmatprep.subr.mxu0 %v80
    %197 = vmatpush1.msra.mxu0 %v79
    %198 = vmatprep.subr.mxu0 %v82
    %199 = vmatpush1.msra.mxu0 %v81
    %200 = vmatprep.subr.mxu0 %v84
    %201 = vmatpush1.msra.mxu0 %v83
    %202 = vmatprep.subr.mxu0 %v86
    %203 = vmatpush1.msra.mxu0 %v85
    %204 = vmatprep.subr.mxu0 0.0
    %205 = vmatpush1.msra.mxu0 0.0
    %206 = vmatprep.subr.mxu0 0.0
    %207 = vmatpush1.msra.mxu0 0.0
    %208 = vmatprep.subr.mxu0 0.0
    %209 = vmatpush1.msra.mxu0 0.0
    %210 = vmatprep.subr.mxu0 0.0
    %211 = vmatpush1.msra.mxu0 0.0
    %212 = vmatprep.subr.mxu0 0.0
    %213 = vmatpush1.msra.mxu0 0.0
    %214 = vmatprep.subr.mxu0 0.0
    %215 = vmatpush1.msra.mxu0 0.0
    %216 = vmatprep.subr.mxu0 0.0
    %217 = vmatpush1.msra.mxu0 0.0
    %218 = vmatprep.subr.mxu0 0.0
    %219 = vmatpush1.msra.mxu0 0.0
    %220 = vmatprep.subr.mxu0 0.0
    %221 = vmatpush1.msra.mxu0 0.0
    %222 = vmatprep.subr.mxu0 0.0
    %223 = vmatpush1.msra.mxu0 0.0
    %224 = vmatprep.subr.mxu0 0.0
    %225 = vmatpush1.msra.mxu0 0.0
    %226 = vmatprep.subr.mxu0 0.0
    %227 = vmatpush1.msra.mxu0 0.0
    %228 = vmatprep.subr.mxu0 0.0
    %229 = vmatpush1.msra.mxu0 0.0
    %230 = vmatprep.subr.mxu0 0.0
    %231 = vmatpush1.msra.mxu0 0.0
    %232 = vmatprep.subr.mxu0 0.0
    %233 = vmatpush1.msra.mxu0 0.0
    %234 = vmatprep.subr.mxu0 0.0
    %235 = vmatpush1.msra.mxu0 0.0
    %236 = vmatprep.subr.mxu0 0.0
    %237 = vmatpush1.msra.mxu0 0.0
    %238 = vmatprep.subr.mxu0 0.0
    %239 = vmatpush1.msra.mxu0 0.0
    %240 = vmatprep.subr.mxu0 0.0
    %241 = vmatpush1.msra.mxu0 0.0
    %242 = vmatprep.subr.mxu0 0.0
    %243 = vmatpush1.msra.mxu0 0.0
    %244 = vmatprep.subr.mxu0 0.0
    %245 = vmatpush1.msra.mxu0 0.0
    %246 = vmatprep.subr.mxu0 0.0
    %247 = vmatpush1.msra.mxu0 0.0
    %248 = vmatprep.subr.mxu0 0.0
    %249 = vmatpush1.msra.mxu0 0.0
    %250 = vmatprep.subr.mxu0 0.0
    %251 = vmatpush1.msra.mxu0 0.0
    %252 = vmatprep.subr.mxu0 0.0
    %253 = vmatpush1.msra.mxu0 0.0
    %254 = vmatprep.subr.mxu0 0.0
    %255 = vmatpush1.msra.mxu0 0.0
    %256 = vmatprep.subr.mxu0 0.0
    %257 = vmatpush1.msra.mxu0 0.0
    %258 = vmatprep.subr.mxu0 0.0
    %259 = vmatpush1.msra.mxu0 0.0
    %260 = vmatprep.mubr.f32.mxu0 0.0
    %261 = vmatmul.mubr.f32.gmra.mrb[0].mxu0 %v101
    %v262 = vpop.f32.mrb[0].mxu0
    %v263 = vadd.f32 %v92, %v262
    %v264 = vpop.f32.mrb[0].mxu0
    %v265 = vadd.f32 %v96, %v264
    %266 = vmatprep.mubr.f32.mxu0 0.0
    %267 = vmatmul.mubr.f32.gmra.mrb[0].mxu0 %v104
    %v268 = vpop.f32.mrb[0].mxu0
    %v269 = vadd.f32 %v92, %v268
    %v270 = vpop.f32.mrb[0].mxu0
    %v271 = vadd.f32 %v96, %v270
    %272 = vmatprep.mubr.f32.mxu0 0.0
    %273 = vmatmul.mubr.f32.gmra.mrb[0].mxu0 %v107
    %v274 = vpop.f32.mrb[0].mxu0
    %v275 = vadd.f32 %v92, %v274
    %v276 = vpop.f32.mrb[0].mxu0
    %v277 = vadd.f32 %v96, %v276
    %278 = vmatprep.mubr.f32.mxu0 0.0
    %279 = vmatmul.mubr.f32.gmra.mrb[0].mxu0 %v110
    %v280 = vpop.f32.mrb[0].mxu0
    %v281 = vadd.f32 %v92, %v280
    %v282 = vpop.f32.mrb[0].mxu0
    %v283 = vadd.f32 %v96, %v282
    %284 = vmatprep.mubr.f32.mxu0 0.0
    %285 = vmatmul.mubr.f32.gmra.mrb[0].mxu0 %v113
    %v286 = vpop.f32.mrb[0].mxu0
    %v287 = vadd.f32 %v92, %v286
    %v288 = vpop.f32.mrb[0].mxu0
    %v289 = vadd.f32 %v96, %v288
    %290 = vmatprep.mubr.f32.mxu0 0.0
    %291 = vmatmul.mubr.f32.gmra.mrb[0].mxu0 %v116
    %v292 = vpop.f32.mrb[0].mxu0
    %v293 = vadd.f32 %v92, %v292
    %v294 = vpop.f32.mrb[0].mxu0
    %v295 = vadd.f32 %v96, %v294
    %296 = vmatprep.mubr.f32.mxu0 0.0
    %297 = vmatmul.mubr.f32.gmra.mrb[0].mxu0 %v119
    %v298 = vpop.f32.mrb[0].mxu0
    %v299 = vadd.f32 %v92, %v298
    %v300 = vpop.f32.mrb[0].mxu0
    %v301 = vadd.f32 %v96, %v300
    %302 = vmatprep.mubr.f32.mxu0 0.0
    %303 = vmatmul.mubr.f32.gmra.mrb[0].mxu0 %v122
    %v304 = vpop.f32.mrb[0].mxu0
    %v305 = vadd.f32 %v92, %v304
    %v306 = vpop.f32.mrb[0].mxu0
    %v307 = vadd.f32 %v96, %v306
    %308 = vmatprep.mubr.f32.mxu0 0.0
    %309 = vmatmul.mubr.f32.gmra.mrb[0].mxu0 %v125
    %v310 = vpop.f32.mrb[0].mxu0
    %v311 = vadd.f32 %v92, %v310
    %v312 = vpop.f32.mrb[0].mxu0
    %v313 = vadd.f32 %v96, %v312
    %314 = vmatprep.mubr.f32.mxu0 0.0
    %315 = vmatmul.mubr.f32.gmra.mrb[0].mxu0 %v128
    %v316 = vpop.f32.mrb[0].mxu0
    %v317 = vadd.f32 %v92, %v316
    %v318 = vpop.f32.mrb[0].mxu0
    %v319 = vadd.f32 %v96, %v318
    %320 = vmatprep.mubr.f32.mxu0 0.0
    %321 = vmatmul.mubr.f32.gmra.mrb[0].mxu0 %v131
    %v322 = vpop.f32.mrb[0].mxu0
    %v323 = vadd.f32 %v92, %v322
    %v324 = vpop.f32.mrb[0].mxu0
    %v325 = vadd.f32 %v96, %v324
    %326 = vmatprep.mubr.f32.mxu0 0.0
    %327 = vmatmul.mubr.f32.gmra.mrb[0].mxu0 %v134
    %v328 = vpop.f32.mrb[0].mxu0
    %v329 = vadd.f32 %v92, %v328
    %v330 = vpop.f32.mrb[0].mxu0
    %v331 = vadd.f32 %v96, %v330
    %332 = vmatprep.mubr.f32.mxu0 0.0
    %333 = vmatmul.mubr.f32.gmra.mrb[0].mxu0 %v137
    %v334 = vpop.f32.mrb[0].mxu0
    %v335 = vadd.f32 %v92, %v334
    %v336 = vpop.f32.mrb[0].mxu0
    %v337 = vadd.f32 %v96, %v336
    %338 = vmatprep.mubr.f32.mxu0 0.0
    %339 = vmatmul.mubr.f32.gmra.mrb[0].mxu0 %v140
    %v340 = vpop.f32.mrb[0].mxu0
    %v341 = vadd.f32 %v92, %v340
    %v342 = vpop.f32.mrb[0].mxu0
    %v343 = vadd.f32 %v96, %v342
    %344 = vmatprep.mubr.f32.mxu0 0.0
    %345 = vmatmul.mubr.f32.gmra.mrb[0].mxu0 %v143
    %v346 = vpop.f32.mrb[0].mxu0
    %v347 = vadd.f32 %v92, %v346
    %v348 = vpop.f32.mrb[0].mxu0
    %v349 = vadd.f32 %v96, %v348
    %350 = vmatprep.mubr.f32.mxu0 0.0
    %351 = vmatmul.mubr.f32.gmra.mrb[0].mxu0 %v146
    %v352 = vpop.f32.mrb[0].mxu0
    %v353 = vadd.f32 %v92, %v352
    %v354 = vpop.f32.mrb[0].mxu0
    %v355 = vadd.f32 %v96, %v354
    %356 = vmatprep.mubr.f32.mxu0 0.0
    %357 = vmatmul.mubr.f32.gmra.mrb[0].mxu0 %v149
    %v358 = vpop.f32.mrb[0].mxu0
    %v359 = vadd.f32 %v92, %v358
    %v360 = vpop.f32.mrb[0].mxu0
    %v361 = vadd.f32 %v96, %v360
    %362 = vmatprep.mubr.f32.mxu0 0.0
    %363 = vmatmul.mubr.f32.gmra.mrb[0].mxu0 %v152
    %v364 = vpop.f32.mrb[0].mxu0
    %v365 = vadd.f32 %v92, %v364
    %v366 = vpop.f32.mrb[0].mxu0
    %v367 = vadd.f32 %v96, %v366
    %368 = vmatprep.mubr.f32.mxu0 0.0
    %369 = vmatmul.mubr.f32.gmra.mrb[0].mxu0 %v155
    %v370 = vpop.f32.mrb[0].mxu0
    %v371 = vadd.f32 %v92, %v370
    %v372 = vpop.f32.mrb[0].mxu0
    %v373 = vadd.f32 %v96, %v372
    %374 = vmatprep.mubr.f32.mxu0 0.0
    %375 = vmatmul.mubr.f32.gmra.mrb[0].mxu0 %v158
    %v376 = vpop.f32.mrb[0].mxu0
    %v377 = vadd.f32 %v92, %v376
    %v378 = vpop.f32.mrb[0].mxu0
    %v379 = vadd.f32 %v96, %v378
    %380 = vmatprep.mubr.f32.mxu0 0.0
    %381 = vmatmul.mubr.f32.gmra.mrb[0].mxu0 %v161
    %v382 = vpop.f32.mrb[0].mxu0
    %v383 = vadd.f32 %v92, %v382
    %v384 = vpop.f32.mrb[0].mxu0
    %v385 = vadd.f32 %v96, %v384
    %386 = vmatprep.mubr.f32.mxu0 0.0
    %387 = vmatmul.mubr.f32.gmra.mrb[0].mxu0 %v164
    %v388 = vpop.f32.mrb[0].mxu0
    %v389 = vadd.f32 %v92, %v388
    %v390 = vpop.f32.mrb[0].mxu0
    %v391 = vadd.f32 %v96, %v390
    %392 = vmatprep.mubr.f32.mxu0 0.0
    %393 = vmatmul.mubr.f32.gmra.mrb[0].mxu0 %v167
    %v394 = vpop.f32.mrb[0].mxu0
    %v395 = vadd.f32 %v92, %v394
    %v396 = vpop.f32.mrb[0].mxu0
    %v397 = vadd.f32 %v96, %v396
    %398 = vmatprep.mubr.f32.mxu0 0.0
    %399 = vmatmul.mubr.f32.gmra.mrb[0].mxu0 %v170
    %v400 = vpop.f32.mrb[0].mxu0
    %v401 = vadd.f32 %v92, %v400
    %v402 = vpop.f32.mrb[0].mxu0
    %v403 = vadd.f32 %v96, %v402
    %404 = vmatprep.mubr.f32.mxu0 0.0
    %405 = vmatmul.mubr.f32.gmra.mrb[0].mxu0 %v173
    %v406 = vpop.f32.mrb[0].mxu0
    %v407 = vadd.f32 %v92, %v406
    %v408 = vpop.f32.mrb[0].mxu0
    %v409 = vadd.f32 %v96, %v408
    %410 = vmatprep.mubr.f32.mxu0 0.0
    %411 = vmatmul.mubr.f32.gmra.mrb[0].mxu0 %v176
    %v412 = vpop.f32.mrb[0].mxu0
    %v413 = vadd.f32 %v92, %v412
    %v414 = vpop.f32.mrb[0].mxu0
    %v415 = vadd.f32 %v96, %v414
    %416 = vmatprep.mubr.f32.mxu0 0.0
    %417 = vmatmul.mubr.f32.gmra.mrb[0].mxu0 %v179
    %v418 = vpop.f32.mrb[0].mxu0
    %v419 = vadd.f32 %v92, %v418
    %v420 = vpop.f32.mrb[0].mxu0
    %v421 = vadd.f32 %v96, %v420
    %422 = vmatprep.mubr.f32.mxu0 0.0
    %423 = vmatmul.mubr.f32.gmra.mrb[0].mxu0 %v182
    %v424 = vpop.f32.mrb[0].mxu0
    %v425 = vadd.f32 %v92, %v424
    %v426 = vpop.f32.mrb[0].mxu0
    %v427 = vadd.f32 %v96, %v426
    %428 = vmatprep.mubr.f32.mxu0 0.0
    %429 = vmatmul.mubr.f32.gmra.mrb[0].mxu0 %v185
    %v430 = vpop.f32.mrb[0].mxu0
    %v431 = vadd.f32 %v92, %v430
    %v432 = vpop.f32.mrb[0].mxu0
    %v433 = vadd.f32 %v96, %v432
    %434 = vmatprep.mubr.f32.mxu0 0.0
    %435 = vmatmul.mubr.f32.gmra.mrb[0].mxu0 %v188
    %v436 = vpop.f32.mrb[0].mxu0
    %v437 = vadd.f32 %v92, %v436
    %v438 = vpop.f32.mrb[0].mxu0
    %v439 = vadd.f32 %v96, %v438
    %440 = vmatprep.mubr.f32.mxu0 0.0
    %441 = vmatmul.mubr.f32.gmra.mrb[0].mxu0 %v191
    %v442 = vpop.f32.mrb[0].mxu0
    %v443 = vadd.f32 %v92, %v442
    %v444 = vpop.f32.mrb[0].mxu0
    %v445 = vadd.f32 %v96, %v444
    %446 = vmatprep.mubr.f32.mxu0 0.0
    %447 = vmatmul.mubr.f32.gmra.mrb[0].mxu0 %v194
    %v448 = vpop.f32.mrb[0].mxu0
    %v449 = vadd.f32 %v92, %v448
    %v450 = vpop.f32.mrb[0].mxu0
    %v451 = vadd.f32 %v96, %v450
    %452 = vdwg.mxu0
    %v453 = vmax.f32 %v263, 0.0
    %v454 = vmax.f32 %v269, 0.0
    %v455 = vmax.f32 %v275, 0.0
    %v456 = vmax.f32 %v281, 0.0
    %v457 = vmax.f32 %v287, 0.0
    %v458 = vmax.f32 %v293, 0.0
    %v459 = vmax.f32 %v299, 0.0
    %v460 = vmax.f32 %v305, 0.0
    %v461 = vmax.f32 %v311, 0.0
    %v462 = vmax.f32 %v317, 0.0
    %v463 = vmax.f32 %v323, 0.0
    %v464 = vmax.f32 %v329, 0.0
    %v465 = vmax.f32 %v335, 0.0
    %v466 = vmax.f32 %v341, 0.0
    %v467 = vmax.f32 %v347, 0.0
    %v468 = vmax.f32 %v353, 0.0
    %v469 = vmax.f32 %v359, 0.0
    %v470 = vmax.f32 %v365, 0.0
    %v471 = vmax.f32 %v371, 0.0
    %v472 = vmax.f32 %v377, 0.0
    %v473 = vmax.f32 %v383, 0.0
    %v474 = vmax.f32 %v389, 0.0
    %v475 = vmax.f32 %v395, 0.0
    %v476 = vmax.f32 %v401, 0.0
    %v477 = vmax.f32 %v407, 0.0
    %v478 = vmax.f32 %v413, 0.0
    %v479 = vmax.f32 %v419, 0.0
    %v480 = vmax.f32 %v425, 0.0
    %v481 = vmax.f32 %v431, 0.0
    %v482 = vmax.f32 %v437, 0.0
    %v483 = vmax.f32 %v443, 0.0
    %v484 = vmax.f32 %v449, 0.0
    %v485 = vld [vmem:[%s4] sm:$0x7]
    %v486 = vld [vmem:[%s3] sm:$0xff]
    %v487 = vld [vmem:[%s3 + $0x8] sm:$0xff]
    %v488 = vld [vmem:[%s3 + $0x10] sm:$0xff]
    %v489 = vld [vmem:[%s3 + $0x18] sm:$0xff]
    %v490 = vld [vmem:[%s3 + $0x20] sm:$0xff]
    %v491 = vld [vmem:[%s3 + $0x28] sm:$0xff]
    %v492 = vld [vmem:[%s3 + $0x30] sm:$0xff]
    %v493 = vld [vmem:[%s3 + $0x38] sm:$0xff]
    %v494 = vld [vmem:[%s3 + $0x40] sm:$0xff]
    %v495 = vld [vmem:[%s3 + $0x48] sm:$0xff]
    %v496 = vld [vmem:[%s3 + $0x50] sm:$0xff]
    %v497 = vld [vmem:[%s3 + $0x58] sm:$0xff]
    %v498 = vld [vmem:[%s3 + $0x60] sm:$0xff]
    %v499 = vld [vmem:[%s3 + $0x68] sm:$0xff]
    %v500 = vld [vmem:[%s3 + $0x70] sm:$0xff]
    %v501 = vld [vmem:[%s3 + $0x78] sm:$0xff]
    %v502 = vlaneseq
    %v503 = vshrl.u32 %v502, 7
    %v504 = vsub.s32 0, %v503
    %v505 = vrot.slane %v485, %v504
    %506 = vmatprep.subr.mxu0 0.0
    %507 = vmatpush1.msra.mxu0 %v486
    %508 = vmatprep.subr.mxu0 0.0
    %509 = vmatpush1.msra.mxu0 %v487
    %510 = vmatprep.subr.mxu0 0.0
    %511 = vmatpush1.msra.mxu0 %v488
    %512 = vmatprep.subr.mxu0 0.0
    %513 = vmatpush1.msra.mxu0 %v489
    %514 = vmatprep.subr.mxu0 0.0
    %515 = vmatpush1.msra.mxu0 %v490
    %516 = vmatprep.subr.mxu0 0.0
    %517 = vmatpush1.msra.mxu0 %v491
    %518 = vmatprep.subr.mxu0 0.0
    %519 = vmatpush1.msra.mxu0 %v492
    %520 = vmatprep.subr.mxu0 0.0
    %521 = vmatpush1.msra.mxu0 %v493
    %522 = vmatprep.subr.mxu0 0.0
    %523 = vmatpush1.msra.mxu0 %v494
    %524 = vmatprep.subr.mxu0 0.0
    %525 = vmatpush1.msra.mxu0 %v495
    %526 = vmatprep.subr.mxu0 0.0
    %527 = vmatpush1.msra.mxu0 %v496
    %528 = vmatprep.subr.mxu0 0.0
    %529 = vmatpush1.msra.mxu0 %v497
    %530 = vmatprep.subr.mxu0 0.0
    %531 = vmatpush1.msra.mxu0 %v498
    %532 = vmatprep.subr.mxu0 0.0
    %533 = vmatpush1.msra.mxu0 %v499
    %534 = vmatprep.subr.mxu0 0.0
    %535 = vmatpush1.msra.mxu0 %v500
    %536 = vmatprep.subr.mxu0 0.0
    %537 = vmatpush1.msra.mxu0 %v501
    %538 = vmatprep.subr.mxu0 0.0
    %539 = vmatpush1.msra.mxu0 0.0
    %540 = vmatprep.subr.mxu0 0.0
    %541 = vmatpush1.msra.mxu0 0.0
    %542 = vmatprep.subr.mxu0 0.0
    %543 = vmatpush1.msra.mxu0 0.0
    %544 = vmatprep.subr.mxu0 0.0
    %545 = vmatpush1.msra.mxu0 0.0
    %546 = vmatprep.subr.mxu0 0.0
    %547 = vmatpush1.msra.mxu0 0.0
    %548 = vmatprep.subr.mxu0 0.0
    %549 = vmatpush1.msra.mxu0 0.0
    %550 = vmatprep.subr.mxu0 0.0
    %551 = vmatpush1.msra.mxu0 0.0
    %552 = vmatprep.subr.mxu0 0.0
    %553 = vmatpush1.msra.mxu0 0.0
    %554 = vmatprep.subr.mxu0 0.0
    %555 = vmatpush1.msra.mxu0 0.0
    %556 = vmatprep.subr.mxu0 0.0
    %557 = vmatpush1.msra.mxu0 0.0
    %558 = vmatprep.subr.mxu0 0.0
    %559 = vmatpush1.msra.mxu0 0.0
    %560 = vmatprep.subr.mxu0 0.0
    %561 = vmatpush1.msra.mxu0 0.0
    %562 = vmatprep.subr.mxu0 0.0
    %563 = vmatpush1.msra.mxu0 0.0
    %564 = vmatprep.subr.mxu0 0.0
    %565 = vmatpush1.msra.mxu0 0.0
    %566 = vmatprep.subr.mxu0 0.0
    %567 = vmatpush1.msra.mxu0 0.0
    %568 = vmatprep.subr.mxu0 0.0
    %569 = vmatpush1.msra.mxu0 0.0
    %570 = vmatprep.mubr.f32.mxu0 0.0
    %571 = vmatmul.mubr.f32.gmra.mrb[0].mxu0 %v453
    %v572 = vpop.f32.mrb[0].mxu0
    %v573 = vadd.f32 %v505, %v572
    %v574 = vpop.f32.mrb[0].mxu0
    %575 = vmatprep.mubr.f32.mxu0 0.0
    %576 = vmatmul.mubr.f32.gmra.mrb[0].mxu0 %v454
    %v577 = vpop.f32.mrb[0].mxu0
    %v578 = vadd.f32 %v505, %v577
    %v579 = vpop.f32.mrb[0].mxu0
    %580 = vmatprep.mubr.f32.mxu0 0.0
    %581 = vmatmul.mubr.f32.gmra.mrb[0].mxu0 %v455
    %v582 = vpop.f32.mrb[0].mxu0
    %v583 = vadd.f32 %v505, %v582
    %v584 = vpop.f32.mrb[0].mxu0
    %585 = vmatprep.mubr.f32.mxu0 0.0
    %586 = vmatmul.mubr.f32.gmra.mrb[0].mxu0 %v456
    %v587 = vpop.f32.mrb[0].mxu0
    %v588 = vadd.f32 %v505, %v587
    %v589 = vpop.f32.mrb[0].mxu0
    %590 = vmatprep.mubr.f32.mxu0 0.0
    %591 = vmatmul.mubr.f32.gmra.mrb[0].mxu0 %v457
    %v592 = vpop.f32.mrb[0].mxu0
    %v593 = vadd.f32 %v505, %v592
    %v594 = vpop.f32.mrb[0].mxu0
    %595 = vmatprep.mubr.f32.mxu0 0.0
    %596 = vmatmul.mubr.f32.gmra.mrb[0].mxu0 %v458
    %v597 = vpop.f32.mrb[0].mxu0
    %v598 = vadd.f32 %v505, %v597
    %v599 = vpop.f32.mrb[0].mxu0
    %600 = vmatprep.mubr.f32.mxu0 0.0
    %601 = vmatmul.mubr.f32.gmra.mrb[0].mxu0 %v459
    %v602 = vpop.f32.mrb[0].mxu0
    %v603 = vadd.f32 %v505, %v602
    %v604 = vpop.f32.mrb[0].mxu0
    %605 = vmatprep.mubr.f32.mxu0 0.0
    %606 = vmatmul.mubr.f32.gmra.mrb[0].mxu0 %v460
    %v607 = vpop.f32.mrb[0].mxu0
    %v608 = vadd.f32 %v505, %v607
    %v609 = vpop.f32.mrb[0].mxu0
    %610 = vmatprep.mubr.f32.mxu0 0.0
    %611 = vmatmul.mubr.f32.gmra.mrb[0].mxu0 %v461
    %v612 = vpop.f32.mrb[0].mxu0
    %v613 = vadd.f32 %v505, %v612
    %v614 = vpop.f32.mrb[0].mxu0
    %615 = vmatprep.mubr.f32.mxu0 0.0
    %616 = vmatmul.mubr.f32.gmra.mrb[0].mxu0 %v462
    %v617 = vpop.f32.mrb[0].mxu0
    %v618 = vadd.f32 %v505, %v617
    %v619 = vpop.f32.mrb[0].mxu0
    %620 = vmatprep.mubr.f32.mxu0 0.0
    %621 = vmatmul.mubr.f32.gmra.mrb[0].mxu0 %v463
    %v622 = vpop.f32.mrb[0].mxu0
    %v623 = vadd.f32 %v505, %v622
    %v624 = vpop.f32.mrb[0].mxu0
    %625 = vmatprep.mubr.f32.mxu0 0.0
    %626 = vmatmul.mubr.f32.gmra.mrb[0].mxu0 %v464
    %v627 = vpop.f32.mrb[0].mxu0
    %v628 = vadd.f32 %v505, %v627
    %v629 = vpop.f32.mrb[0].mxu0
    %630 = vmatprep.mubr.f32.mxu0 0.0
    %631 = vmatmul.mubr.f32.gmra.mrb[0].mxu0 %v465
    %v632 = vpop.f32.mrb[0].mxu0
    %v633 = vadd.f32 %v505, %v632
    %v634 = vpop.f32.mrb[0].mxu0
    %635 = vmatprep.mubr.f32.mxu0 0.0
    %636 = vmatmul.mubr.f32.gmra.mrb[0].mxu0 %v466
    %v637 = vpop.f32.mrb[0].mxu0
    %v638 = vadd.f32 %v505, %v637
    %v639 = vpop.f32.mrb[0].mxu0
    %640 = vmatprep.mubr.f32.mxu0 0.0
    %641 = vmatmul.mubr.f32.gmra.mrb[0].mxu0 %v467
    %v642 = vpop.f32.mrb[0].mxu0
    %v643 = vadd.f32 %v505, %v642
    %v644 = vpop.f32.mrb[0].mxu0
    %645 = vmatprep.mubr.f32.mxu0 0.0
    %646 = vmatmul.mubr.f32.gmra.mrb[0].mxu0 %v468
    %v647 = vpop.f32.mrb[0].mxu0
    %v648 = vadd.f32 %v505, %v647
    %v649 = vpop.f32.mrb[0].mxu0
    %650 = vmatprep.mubr.f32.mxu0 0.0
    %651 = vmatmul.mubr.f32.gmra.mrb[0].mxu0 %v469
    %v652 = vpop.f32.mrb[0].mxu0
    %v653 = vadd.f32 %v505, %v652
    %v654 = vpop.f32.mrb[0].mxu0
    %655 = vmatprep.mubr.f32.mxu0 0.0
    %656 = vmatmul.mubr.f32.gmra.mrb[0].mxu0 %v470
    %v657 = vpop.f32.mrb[0].mxu0
    %v658 = vadd.f32 %v505, %v657
    %v659 = vpop.f32.mrb[0].mxu0
    %660 = vmatprep.mubr.f32.mxu0 0.0
    %661 = vmatmul.mubr.f32.gmra.mrb[0].mxu0 %v471
    %v662 = vpop.f32.mrb[0].mxu0
    %v663 = vadd.f32 %v505, %v662
    %v664 = vpop.f32.mrb[0].mxu0
    %665 = vmatprep.mubr.f32.mxu0 0.0
    %666 = vmatmul.mubr.f32.gmra.mrb[0].mxu0 %v472
    %v667 = vpop.f32.mrb[0].mxu0
    %v668 = vadd.f32 %v505, %v667
    %v669 = vpop.f32.mrb[0].mxu0
    %670 = vmatprep.mubr.f32.mxu0 0.0
    %671 = vmatmul.mubr.f32.gmra.mrb[0].mxu0 %v473
    %v672 = vpop.f32.mrb[0].mxu0
    %v673 = vadd.f32 %v505, %v672
    %v674 = vpop.f32.mrb[0].mxu0
    %675 = vmatprep.mubr.f32.mxu0 0.0
    %676 = vmatmul.mubr.f32.gmra.mrb[0].mxu0 %v474
    %v677 = vpop.f32.mrb[0].mxu0
    %v678 = vadd.f32 %v505, %v677
    %v679 = vpop.f32.mrb[0].mxu0
    %680 = vmatprep.mubr.f32.mxu0 0.0
    %681 = vmatmul.mubr.f32.gmra.mrb[0].mxu0 %v475
    %v682 = vpop.f32.mrb[0].mxu0
    %v683 = vadd.f32 %v505, %v682
    %v684 = vpop.f32.mrb[0].mxu0
    %685 = vmatprep.mubr.f32.mxu0 0.0
    %686 = vmatmul.mubr.f32.gmra.mrb[0].mxu0 %v476
    %v687 = vpop.f32.mrb[0].mxu0
    %v688 = vadd.f32 %v505, %v687
    %v689 = vpop.f32.mrb[0].mxu0
    %690 = vmatprep.mubr.f32.mxu0 0.0
    %691 = vmatmul.mubr.f32.gmra.mrb[0].mxu0 %v477
    %v692 = vpop.f32.mrb[0].mxu0
    %v693 = vadd.f32 %v505, %v692
    %v694 = vpop.f32.mrb[0].mxu0
    %695 = vmatprep.mubr.f32.mxu0 0.0
    %696 = vmatmul.mubr.f32.gmra.mrb[0].mxu0 %v478
    %v697 = vpop.f32.mrb[0].mxu0
    %v698 = vadd.f32 %v505, %v697
    %v699 = vpop.f32.mrb[0].mxu0
    %700 = vmatprep.mubr.f32.mxu0 0.0
    %701 = vmatmul.mubr.f32.gmra.mrb[0].mxu0 %v479
    %v702 = vpop.f32.mrb[0].mxu0
    %v703 = vadd.f32 %v505, %v702
    %v704 = vpop.f32.mrb[0].mxu0
    %705 = vmatprep.mubr.f32.mxu0 0.0
    %706 = vmatmul.mubr.f32.gmra.mrb[0].mxu0 %v480
    %v707 = vpop.f32.mrb[0].mxu0
    %v708 = vadd.f32 %v505, %v707
    %v709 = vpop.f32.mrb[0].mxu0
    %710 = vmatprep.mubr.f32.mxu0 0.0
    %711 = vmatmul.mubr.f32.gmra.mrb[0].mxu0 %v481
    %v712 = vpop.f32.mrb[0].mxu0
    %v713 = vadd.f32 %v505, %v712
    %v714 = vpop.f32.mrb[0].mxu0
    %715 = vmatprep.mubr.f32.mxu0 0.0
    %716 = vmatmul.mubr.f32.gmra.mrb[0].mxu0 %v482
    %v717 = vpop.f32.mrb[0].mxu0
    %v718 = vadd.f32 %v505, %v717
    %v719 = vpop.f32.mrb[0].mxu0
    %720 = vmatprep.mubr.f32.mxu0 0.0
    %721 = vmatmul.mubr.f32.gmra.mrb[0].mxu0 %v483
    %v722 = vpop.f32.mrb[0].mxu0
    %v723 = vadd.f32 %v505, %v722
    %v724 = vpop.f32.mrb[0].mxu0
    %725 = vmatprep.mubr.f32.mxu0 0.0
    %726 = vmatmul.mubr.f32.gmra.mrb[0].mxu0 %v484
    %v727 = vpop.f32.mrb[0].mxu0
    %v728 = vadd.f32 %v505, %v727
    %v729 = vpop.f32.mrb[0].mxu0
    %730 = vdwg.mxu0
    %v731 = vadd.f32 %v573, %v265
    %v732 = vadd.f32 %v578, %v271
    %v733 = vadd.f32 %v583, %v277
    %v734 = vadd.f32 %v588, %v283
    %v735 = vadd.f32 %v593, %v289
    %v736 = vadd.f32 %v598, %v295
    %v737 = vadd.f32 %v603, %v301
    %v738 = vadd.f32 %v608, %v307
    %v739 = vadd.f32 %v613, %v313
    %v740 = vadd.f32 %v618, %v319
    %v741 = vadd.f32 %v623, %v325
    %v742 = vadd.f32 %v628, %v331
    %v743 = vadd.f32 %v633, %v337
    %v744 = vadd.f32 %v638, %v343
    %v745 = vadd.f32 %v643, %v349
    %v746 = vadd.f32 %v648, %v355
    %v747 = vadd.f32 %v653, %v361
    %v748 = vadd.f32 %v658, %v367
    %v749 = vadd.f32 %v663, %v373
    %v750 = vadd.f32 %v668, %v379
    %v751 = vadd.f32 %v673, %v385
    %v752 = vadd.f32 %v678, %v391
    %v753 = vadd.f32 %v683, %v397
    %v754 = vadd.f32 %v688, %v403
    %v755 = vadd.f32 %v693, %v409
    %v756 = vadd.f32 %v698, %v415
    %v757 = vadd.f32 %v703, %v421
    %v758 = vadd.f32 %v708, %v427
    %v759 = vadd.f32 %v713, %v433
    %v760 = vadd.f32 %v718, %v439
    %v761 = vadd.f32 %v723, %v445
    %v762 = vadd.f32 %v728, %v451
    %763 = vadd.xlane.f32.xlu0 %v731
    %v764 = vpop.xlane.xlu0 %763
    %765 = vadd.xlane.f32.xlu0 %v732
    %v766 = vpop.xlane.xlu0 %765
    %767 = vadd.xlane.f32.xlu0 %v733
    %v768 = vpop.xlane.xlu0 %767
    %769 = vadd.xlane.f32.xlu0 %v734
    %v770 = vpop.xlane.xlu0 %769
    %771 = vadd.xlane.f32.xlu0 %v735
    %v772 = vpop.xlane.xlu0 %771
    %773 = vadd.xlane.f32.xlu0 %v736
    %v774 = vpop.xlane.xlu0 %773
    %775 = vadd.xlane.f32.xlu0 %v737
    %v776 = vpop.xlane.xlu0 %775
    %777 = vadd.xlane.f32.xlu0 %v738
    %v778 = vpop.xlane.xlu0 %777
    %779 = vadd.xlane.f32.xlu0 %v739
    %v780 = vpop.xlane.xlu0 %779
    %781 = vadd.xlane.f32.xlu0 %v740
    %v782 = vpop.xlane.xlu0 %781
    %783 = vadd.xlane.f32.xlu0 %v741
    %v784 = vpop.xlane.xlu0 %783
    %785 = vadd.xlane.f32.xlu0 %v742
    %v786 = vpop.xlane.xlu0 %785
    %787 = vadd.xlane.f32.xlu0 %v743
    %v788 = vpop.xlane.xlu0 %787
    %789 = vadd.xlane.f32.xlu0 %v744
    %v790 = vpop.xlane.xlu0 %789
    %791 = vadd.xlane.f32.xlu0 %v745
    %v792 = vpop.xlane.xlu0 %791
    %793 = vadd.xlane.f32.xlu0 %v746
    %v794 = vpop.xlane.xlu0 %793
    %795 = vadd.xlane.f32.xlu0 %v747
    %v796 = vpop.xlane.xlu0 %795
    %797 = vadd.xlane.f32.xlu0 %v748
    %v798 = vpop.xlane.xlu0 %797
    %799 = vadd.xlane.f32.xlu0 %v749
    %v800 = vpop.xlane.xlu0 %799
    %801 = vadd.xlane.f32.xlu0 %v750
    %v802 = vpop.xlane.xlu0 %801
    %803 = vadd.xlane.f32.xlu0 %v751
    %v804 = vpop.xlane.xlu0 %803
    %805 = vadd.xlane.f32.xlu0 %v752
    %v806 = vpop.xlane.xlu0 %805
    %807 = vadd.xlane.f32.xlu0 %v753
    %v808 = vpop.xlane.xlu0 %807
    %809 = vadd.xlane.f32.xlu0 %v754
    %v810 = vpop.xlane.xlu0 %809
    %811 = vadd.xlane.f32.xlu0 %v755
    %v812 = vpop.xlane.xlu0 %811
    %813 = vadd.xlane.f32.xlu0 %v756
    %v814 = vpop.xlane.xlu0 %813
    %815 = vadd.xlane.f32.xlu0 %v757
    %v816 = vpop.xlane.xlu0 %815
    %817 = vadd.xlane.f32.xlu0 %v758
    %v818 = vpop.xlane.xlu0 %817
    %819 = vadd.xlane.f32.xlu0 %v759
    %v820 = vpop.xlane.xlu0 %819
    %821 = vadd.xlane.f32.xlu0 %v760
    %v822 = vpop.xlane.xlu0 %821
    %823 = vadd.xlane.f32.xlu0 %v761
    %v824 = vpop.xlane.xlu0 %823
    %825 = vadd.xlane.f32.xlu0 %v762
    %v826 = vpop.xlane.xlu0 %825
    %v827 = vmul.f32 %v764, 0.041666668
    %v828 = vmul.f32 %v766, 0.041666668
    %v829 = vmul.f32 %v768, 0.041666668
    %v830 = vmul.f32 %v770, 0.041666668
    %v831 = vmul.f32 %v772, 0.041666668
    %v832 = vmul.f32 %v774, 0.041666668
    %v833 = vmul.f32 %v776, 0.041666668
    %v834 = vmul.f32 %v778, 0.041666668
    %v835 = vmul.f32 %v780, 0.041666668
    %v836 = vmul.f32 %v782, 0.041666668
    %v837 = vmul.f32 %v784, 0.041666668
    %v838 = vmul.f32 %v786, 0.041666668
    %v839 = vmul.f32 %v788, 0.041666668
    %v840 = vmul.f32 %v790, 0.041666668
    %v841 = vmul.f32 %v792, 0.041666668
    %v842 = vmul.f32 %v794, 0.041666668
    %v843 = vmul.f32 %v796, 0.041666668
    %v844 = vmul.f32 %v798, 0.041666668
    %v845 = vmul.f32 %v800, 0.041666668
    %v846 = vmul.f32 %v802, 0.041666668
    %v847 = vmul.f32 %v804, 0.041666668
    %v848 = vmul.f32 %v806, 0.041666668
    %v849 = vmul.f32 %v808, 0.041666668
    %v850 = vmul.f32 %v810, 0.041666668
    %v851 = vmul.f32 %v812, 0.041666668
    %v852 = vmul.f32 %v814, 0.041666668
    %v853 = vmul.f32 %v816, 0.041666668
    %v854 = vmul.f32 %v818, 0.041666668
    %v855 = vmul.f32 %v820, 0.041666668
    %v856 = vmul.f32 %v822, 0.041666668
    %v857 = vmul.f32 %v824, 0.041666668
    %v858 = vmul.f32 %v826, 0.041666668
    %v859 = vmul.f32 %v731, %v731
    %v860 = vmul.f32 %v732, %v732
    %v861 = vmul.f32 %v733, %v733
    %v862 = vmul.f32 %v734, %v734
    %v863 = vmul.f32 %v735, %v735
    %v864 = vmul.f32 %v736, %v736
    %v865 = vmul.f32 %v737, %v737
    %v866 = vmul.f32 %v738, %v738
    %v867 = vmul.f32 %v739, %v739
    %v868 = vmul.f32 %v740, %v740
    %v869 = vmul.f32 %v741, %v741
    %v870 = vmul.f32 %v742, %v742
    %v871 = vmul.f32 %v743, %v743
    %v872 = vmul.f32 %v744, %v744
    %v873 = vmul.f32 %v745, %v745
    %v874 = vmul.f32 %v746, %v746
    %v875 = vmul.f32 %v747, %v747
    %v876 = vmul.f32 %v748, %v748
    %v877 = vmul.f32 %v749, %v749
    %v878 = vmul.f32 %v750, %v750
    %v879 = vmul.f32 %v751, %v751
    %v880 = vmul.f32 %v752, %v752
    %v881 = vmul.f32 %v753, %v753
    %v882 = vmul.f32 %v754, %v754
    %v883 = vmul.f32 %v755, %v755
    %v884 = vmul.f32 %v756, %v756
    %v885 = vmul.f32 %v757, %v757
    %v886 = vmul.f32 %v758, %v758
    %v887 = vmul.f32 %v759, %v759
    %v888 = vmul.f32 %v760, %v760
    %v889 = vmul.f32 %v761, %v761
    %v890 = vmul.f32 %v762, %v762
    %891 = vadd.xlane.f32.xlu0 %v859
    %v892 = vpop.xlane.xlu0 %891
    %893 = vadd.xlane.f32.xlu0 %v860
    %v894 = vpop.xlane.xlu0 %893
    %895 = vadd.xlane.f32.xlu0 %v861
    %v896 = vpop.xlane.xlu0 %895
    %897 = vadd.xlane.f32.xlu0 %v862
    %v898 = vpop.xlane.xlu0 %897
    %899 = vadd.xlane.f32.xlu0 %v863
    %v900 = vpop.xlane.xlu0 %899
    %901 = vadd.xlane.f32.xlu0 %v864
    %v902 = vpop.xlane.xlu0 %901
    %903 = vadd.xlane.f32.xlu0 %v865
    %v904 = vpop.xlane.xlu0 %903
    %905 = vadd.xlane.f32.xlu0 %v866
    %v906 = vpop.xlane.xlu0 %905
    %907 = vadd.xlane.f32.xlu0 %v867
    %v908 = vpop.xlane.xlu0 %907
    %909 = vadd.xlane.f32.xlu0 %v868
    %v910 = vpop.xlane.xlu0 %909
    %911 = vadd.xlane.f32.xlu0 %v869
    %v912 = vpop.xlane.xlu0 %911
    %913 = vadd.xlane.f32.xlu0 %v870
    %v914 = vpop.xlane.xlu0 %913
    %915 = vadd.xlane.f32.xlu0 %v871
    %v916 = vpop.xlane.xlu0 %915
    %917 = vadd.xlane.f32.xlu0 %v872
    %v918 = vpop.xlane.xlu0 %917
    %919 = vadd.xlane.f32.xlu0 %v873
    %v920 = vpop.xlane.xlu0 %919
    %921 = vadd.xlane.f32.xlu0 %v874
    %v922 = vpop.xlane.xlu0 %921
    %923 = vadd.xlane.f32.xlu0 %v875
    %v924 = vpop.xlane.xlu0 %923
    %925 = vadd.xlane.f32.xlu0 %v876
    %v926 = vpop.xlane.xlu0 %925
    %927 = vadd.xlane.f32.xlu0 %v877
    %v928 = vpop.xlane.xlu0 %927
    %929 = vadd.xlane.f32.xlu0 %v878
    %v930 = vpop.xlane.xlu0 %929
    %931 = vadd.xlane.f32.xlu0 %v879
    %v932 = vpop.xlane.xlu0 %931
    %933 = vadd.xlane.f32.xlu0 %v880
    %v934 = vpop.xlane.xlu0 %933
    %935 = vadd.xlane.f32.xlu0 %v881
    %v936 = vpop.xlane.xlu0 %935
    %937 = vadd.xlane.f32.xlu0 %v882
    %v938 = vpop.xlane.xlu0 %937
    %939 = vadd.xlane.f32.xlu0 %v883
    %v940 = vpop.xlane.xlu0 %939
    %941 = vadd.xlane.f32.xlu0 %v884
    %v942 = vpop.xlane.xlu0 %941
    %943 = vadd.xlane.f32.xlu0 %v885
    %v944 = vpop.xlane.xlu0 %943
    %945 = vadd.xlane.f32.xlu0 %v886
    %v946 = vpop.xlane.xlu0 %945
    %947 = vadd.xlane.f32.xlu0 %v887
    %v948 = vpop.xlane.xlu0 %947
    %949 = vadd.xlane.f32.xlu0 %v888
    %v950 = vpop.xlane.xlu0 %949
    %951 = vadd.xlane.f32.xlu0 %v889
    %v952 = vpop.xlane.xlu0 %951
    %953 = vadd.xlane.f32.xlu0 %v890
    %v954 = vpop.xlane.xlu0 %953
    %v955 = vmul.f32 %v892, 0.041666668
    %v956 = vmul.f32 %v894, 0.041666668
    %v957 = vmul.f32 %v896, 0.041666668
    %v958 = vmul.f32 %v898, 0.041666668
    %v959 = vmul.f32 %v900, 0.041666668
    %v960 = vmul.f32 %v902, 0.041666668
    %v961 = vmul.f32 %v904, 0.041666668
    %v962 = vmul.f32 %v906, 0.041666668
    %v963 = vmul.f32 %v908, 0.041666668
    %v964 = vmul.f32 %v910, 0.041666668
    %v965 = vmul.f32 %v912, 0.041666668
    %v966 = vmul.f32 %v914, 0.041666668
    %v967 = vmul.f32 %v916, 0.041666668
    %v968 = vmul.f32 %v918, 0.041666668
    %v969 = vmul.f32 %v920, 0.041666668
    %v970 = vmul.f32 %v922, 0.041666668
    %v971 = vmul.f32 %v924, 0.041666668
    %v972 = vmul.f32 %v926, 0.041666668
    %v973 = vmul.f32 %v928, 0.041666668
    %v974 = vmul.f32 %v930, 0.041666668
    %v975 = vmul.f32 %v932, 0.041666668
    %v976 = vmul.f32 %v934, 0.041666668
    %v977 = vmul.f32 %v936, 0.041666668
    %v978 = vmul.f32 %v938, 0.041666668
    %v979 = vmul.f32 %v940, 0.041666668
    %v980 = vmul.f32 %v942, 0.041666668
    %v981 = vmul.f32 %v944, 0.041666668
    %v982 = vmul.f32 %v946, 0.041666668
    %v983 = vmul.f32 %v948, 0.041666668
    %v984 = vmul.f32 %v950, 0.041666668
    %v985 = vmul.f32 %v952, 0.041666668
    %v986 = vmul.f32 %v954, 0.041666668
    %v987 = vmul.f32 %v827, %v827
    %v988 = vmul.f32 %v828, %v828
    %v989 = vmul.f32 %v829, %v829
    %v990 = vmul.f32 %v830, %v830
    %v991 = vmul.f32 %v831, %v831
    %v992 = vmul.f32 %v832, %v832
    %v993 = vmul.f32 %v833, %v833
    %v994 = vmul.f32 %v834, %v834
    %v995 = vmul.f32 %v835, %v835
    %v996 = vmul.f32 %v836, %v836
    %v997 = vmul.f32 %v837, %v837
    %v998 = vmul.f32 %v838, %v838
    %v999 = vmul.f32 %v839, %v839
    %v1000 = vmul.f32 %v840, %v840
    %v1001 = vmul.f32 %v841, %v841
    %v1002 = vmul.f32 %v842, %v842
    %v1003 = vmul.f32 %v843, %v843
    %v1004 = vmul.f32 %v844, %v844
    %v1005 = vmul.f32 %v845, %v845
    %v1006 = vmul.f32 %v846, %v846
    %v1007 = vmul.f32 %v847, %v847
    %v1008 = vmul.f32 %v848, %v848
    %v1009 = vmul.f32 %v849, %v849
    %v1010 = vmul.f32 %v850, %v850
    %v1011 = vmul.f32 %v851, %v851
    %v1012 = vmul.f32 %v852, %v852
    %v1013 = vmul.f32 %v853, %v853
    %v1014 = vmul.f32 %v854, %v854
    %v1015 = vmul.f32 %v855, %v855
    %v1016 = vmul.f32 %v856, %v856
    %v1017 = vmul.f32 %v857, %v857
    %v1018 = vmul.f32 %v858, %v858
    %v1019 = vsub.f32 %v955, %v987
    %v1020 = vsub.f32 %v956, %v988
    %v1021 = vsub.f32 %v957, %v989
    %v1022 = vsub.f32 %v958, %v990
    %v1023 = vsub.f32 %v959, %v991
    %v1024 = vsub.f32 %v960, %v992
    %v1025 = vsub.f32 %v961, %v993
    %v1026 = vsub.f32 %v962, %v994
    %v1027 = vsub.f32 %v963, %v995
    %v1028 = vsub.f32 %v964, %v996
    %v1029 = vsub.f32 %v965, %v997
    %v1030 = vsub.f32 %v966, %v998
    %v1031 = vsub.f32 %v967, %v999
    %v1032 = vsub.f32 %v968, %v1000
    %v1033 = vsub.f32 %v969, %v1001
    %v1034 = vsub.f32 %v970, %v1002
    %v1035 = vsub.f32 %v971, %v1003
    %v1036 = vsub.f32 %v972, %v1004
    %v1037 = vsub.f32 %v973, %v1005
    %v1038 = vsub.f32 %v974, %v1006
    %v1039 = vsub.f32 %v975, %v1007
    %v1040 = vsub.f32 %v976, %v1008
    %v1041 = vsub.f32 %v977, %v1009
    %v1042 = vsub.f32 %v978, %v1010
    %v1043 = vsub.f32 %v979, %v1011
    %v1044 = vsub.f32 %v980, %v1012
    %v1045 = vsub.f32 %v981, %v1013
    %v1046 = vsub.f32 %v982, %v1014
    %v1047 = vsub.f32 %v983, %v1015
    %v1048 = vsub.f32 %v984, %v1016
    %v1049 = vsub.f32 %v985, %v1017
    %v1050 = vsub.f32 %v986, %v1018
    %v1051 = vmax.f32 %v1019, 0.0
    %v1052 = vmax.f32 %v1020, 0.0
    %v1053 = vmax.f32 %v1021, 0.0
    %v1054 = vmax.f32 %v1022, 0.0
    %v1055 = vmax.f32 %v1023, 0.0
    %v1056 = vmax.f32 %v1024, 0.0
    %v1057 = vmax.f32 %v1025, 0.0
    %v1058 = vmax.f32 %v1026, 0.0
    %v1059 = vmax.f32 %v1027, 0.0
    %v1060 = vmax.f32 %v1028, 0.0
    %v1061 = vmax.f32 %v1029, 0.0
    %v1062 = vmax.f32 %v1030, 0.0
    %v1063 = vmax.f32 %v1031, 0.0
    %v1064 = vmax.f32 %v1032, 0.0
    %v1065 = vmax.f32 %v1033, 0.0
    %v1066 = vmax.f32 %v1034, 0.0
    %v1067 = vmax.f32 %v1035, 0.0
    %v1068 = vmax.f32 %v1036, 0.0
    %v1069 = vmax.f32 %v1037, 0.0
    %v1070 = vmax.f32 %v1038, 0.0
    %v1071 = vmax.f32 %v1039, 0.0
    %v1072 = vmax.f32 %v1040, 0.0
    %v1073 = vmax.f32 %v1041, 0.0
    %v1074 = vmax.f32 %v1042, 0.0
    %v1075 = vmax.f32 %v1043, 0.0
    %v1076 = vmax.f32 %v1044, 0.0
    %v1077 = vmax.f32 %v1045, 0.0
    %v1078 = vmax.f32 %v1046, 0.0
    %v1079 = vmax.f32 %v1047, 0.0
    %v1080 = vmax.f32 %v1048, 0.0
    %v1081 = vmax.f32 %v1049, 0.0
    %v1082 = vmax.f32 %v1050, 0.0
    %v1083 = vsub.f32 %v731, %v827
    %v1084 = vsub.f32 %v732, %v828
    %v1085 = vsub.f32 %v733, %v829
    %v1086 = vsub.f32 %v734, %v830
    %v1087 = vsub.f32 %v735, %v831
    %v1088 = vsub.f32 %v736, %v832
    %v1089 = vsub.f32 %v737, %v833
    %v1090 = vsub.f32 %v738, %v834
    %v1091 = vsub.f32 %v739, %v835
    %v1092 = vsub.f32 %v740, %v836
    %v1093 = vsub.f32 %v741, %v837
    %v1094 = vsub.f32 %v742, %v838
    %v1095 = vsub.f32 %v743, %v839
    %v1096 = vsub.f32 %v744, %v840
    %v1097 = vsub.f32 %v745, %v841
    %v1098 = vsub.f32 %v746, %v842
    %v1099 = vsub.f32 %v747, %v843
    %v1100 = vsub.f32 %v748, %v844
    %v1101 = vsub.f32 %v749, %v845
    %v1102 = vsub.f32 %v750, %v846
    %v1103 = vsub.f32 %v751, %v847
    %v1104 = vsub.f32 %v752, %v848
    %v1105 = vsub.f32 %v753, %v849
    %v1106 = vsub.f32 %v754, %v850
    %v1107 = vsub.f32 %v755, %v851
    %v1108 = vsub.f32 %v756, %v852
    %v1109 = vsub.f32 %v757, %v853
    %v1110 = vsub.f32 %v758, %v854
    %v1111 = vsub.f32 %v759, %v855
    %v1112 = vsub.f32 %v760, %v856
    %v1113 = vsub.f32 %v761, %v857
    %v1114 = vsub.f32 %v762, %v858
    %v1115 = vadd.f32 %v1051, 1e-05
    %v1116 = vadd.f32 %v1052, 1e-05
    %v1117 = vadd.f32 %v1053, 1e-05
    %v1118 = vadd.f32 %v1054, 1e-05
    %v1119 = vadd.f32 %v1055, 1e-05
    %v1120 = vadd.f32 %v1056, 1e-05
    %v1121 = vadd.f32 %v1057, 1e-05
    %v1122 = vadd.f32 %v1058, 1e-05
    %v1123 = vadd.f32 %v1059, 1e-05
    %v1124 = vadd.f32 %v1060, 1e-05
    %v1125 = vadd.f32 %v1061, 1e-05
    %v1126 = vadd.f32 %v1062, 1e-05
    %v1127 = vadd.f32 %v1063, 1e-05
    %v1128 = vadd.f32 %v1064, 1e-05
    %v1129 = vadd.f32 %v1065, 1e-05
    %v1130 = vadd.f32 %v1066, 1e-05
    %v1131 = vadd.f32 %v1067, 1e-05
    %v1132 = vadd.f32 %v1068, 1e-05
    %v1133 = vadd.f32 %v1069, 1e-05
    %v1134 = vadd.f32 %v1070, 1e-05
    %v1135 = vadd.f32 %v1071, 1e-05
    %v1136 = vadd.f32 %v1072, 1e-05
    %v1137 = vadd.f32 %v1073, 1e-05
    %v1138 = vadd.f32 %v1074, 1e-05
    %v1139 = vadd.f32 %v1075, 1e-05
    %v1140 = vadd.f32 %v1076, 1e-05
    %v1141 = vadd.f32 %v1077, 1e-05
    %v1142 = vadd.f32 %v1078, 1e-05
    %v1143 = vadd.f32 %v1079, 1e-05
    %v1144 = vadd.f32 %v1080, 1e-05
    %v1145 = vadd.f32 %v1081, 1e-05
    %v1146 = vadd.f32 %v1082, 1e-05
    %v1147 = vrsqrt.pop %v1115
    %v1148 = vrsqrt.pop %v1116
    %v1149 = vrsqrt.pop %v1117
    %v1150 = vrsqrt.pop %v1118
    %v1151 = vrsqrt.pop %v1119
    %v1152 = vrsqrt.pop %v1120
    %v1153 = vrsqrt.pop %v1121
    %v1154 = vrsqrt.pop %v1122
    %v1155 = vrsqrt.pop %v1123
    %v1156 = vrsqrt.pop %v1124
    %v1157 = vrsqrt.pop %v1125
    %v1158 = vrsqrt.pop %v1126
    %v1159 = vrsqrt.pop %v1127
    %v1160 = vrsqrt.pop %v1128
    %v1161 = vrsqrt.pop %v1129
    %v1162 = vrsqrt.pop %v1130
    %v1163 = vrsqrt.pop %v1131
    %v1164 = vrsqrt.pop %v1132
    %v1165 = vrsqrt.pop %v1133
    %v1166 = vrsqrt.pop %v1134
    %v1167 = vrsqrt.pop %v1135
    %v1168 = vrsqrt.pop %v1136
    %v1169 = vrsqrt.pop %v1137
    %v1170 = vrsqrt.pop %v1138
    %v1171 = vrsqrt.pop %v1139
    %v1172 = vrsqrt.pop %v1140
    %v1173 = vrsqrt.pop %v1141
    %v1174 = vrsqrt.pop %v1142
    %v1175 = vrsqrt.pop %v1143
    %v1176 = vrsqrt.pop %v1144
    %v1177 = vrsqrt.pop %v1145
    %v1178 = vrsqrt.pop %v1146
    %v1179 = vmul.f32 %v1083, %v1147
    %v1180 = vmul.f32 %v1084, %v1148
    %v1181 = vmul.f32 %v1085, %v1149
    %v1182 = vmul.f32 %v1086, %v1150
    %v1183 = vmul.f32 %v1087, %v1151
    %v1184 = vmul.f32 %v1088, %v1152
    %v1185 = vmul.f32 %v1089, %v1153
    %v1186 = vmul.f32 %v1090, %v1154
    %v1187 = vmul.f32 %v1091, %v1155
    %v1188 = vmul.f32 %v1092, %v1156
    %v1189 = vmul.f32 %v1093, %v1157
    %v1190 = vmul.f32 %v1094, %v1158
    %v1191 = vmul.f32 %v1095, %v1159
    %v1192 = vmul.f32 %v1096, %v1160
    %v1193 = vmul.f32 %v1097, %v1161
    %v1194 = vmul.f32 %v1098, %v1162
    %v1195 = vmul.f32 %v1099, %v1163
    %v1196 = vmul.f32 %v1100, %v1164
    %v1197 = vmul.f32 %v1101, %v1165
    %v1198 = vmul.f32 %v1102, %v1166
    %v1199 = vmul.f32 %v1103, %v1167
    %v1200 = vmul.f32 %v1104, %v1168
    %v1201 = vmul.f32 %v1105, %v1169
    %v1202 = vmul.f32 %v1106, %v1170
    %v1203 = vmul.f32 %v1107, %v1171
    %v1204 = vmul.f32 %v1108, %v1172
    %v1205 = vmul.f32 %v1109, %v1173
    %v1206 = vmul.f32 %v1110, %v1174
    %v1207 = vmul.f32 %v1111, %v1175
    %v1208 = vmul.f32 %v1112, %v1176
    %v1209 = vmul.f32 %v1113, %v1177
    %v1210 = vmul.f32 %v1114, %v1178
    %v1211 = vlaneseq
    %v1212 = vshrl.u32 %v1211, 7
    %v1213 = vsub.s32 1, %v1212
    %v1214 = vrot.slane %v485, %v1213
    %v1215 = vmul.f32 %v1179, %v1214
    %v1216 = vmul.f32 %v1180, %v1214
    %v1217 = vmul.f32 %v1181, %v1214
    %v1218 = vmul.f32 %v1182, %v1214
    %v1219 = vmul.f32 %v1183, %v1214
    %v1220 = vmul.f32 %v1184, %v1214
    %v1221 = vmul.f32 %v1185, %v1214
    %v1222 = vmul.f32 %v1186, %v1214
    %v1223 = vmul.f32 %v1187, %v1214
    %v1224 = vmul.f32 %v1188, %v1214
    %v1225 = vmul.f32 %v1189, %v1214
    %v1226 = vmul.f32 %v1190, %v1214
    %v1227 = vmul.f32 %v1191, %v1214
    %v1228 = vmul.f32 %v1192, %v1214
    %v1229 = vmul.f32 %v1193, %v1214
    %v1230 = vmul.f32 %v1194, %v1214
    %v1231 = vmul.f32 %v1195, %v1214
    %v1232 = vmul.f32 %v1196, %v1214
    %v1233 = vmul.f32 %v1197, %v1214
    %v1234 = vmul.f32 %v1198, %v1214
    %v1235 = vmul.f32 %v1199, %v1214
    %v1236 = vmul.f32 %v1200, %v1214
    %v1237 = vmul.f32 %v1201, %v1214
    %v1238 = vmul.f32 %v1202, %v1214
    %v1239 = vmul.f32 %v1203, %v1214
    %v1240 = vmul.f32 %v1204, %v1214
    %v1241 = vmul.f32 %v1205, %v1214
    %v1242 = vmul.f32 %v1206, %v1214
    %v1243 = vmul.f32 %v1207, %v1214
    %v1244 = vmul.f32 %v1208, %v1214
    %v1245 = vmul.f32 %v1209, %v1214
    %v1246 = vmul.f32 %v1210, %v1214
    %v1247 = vlaneseq
    %v1248 = vshrl.u32 %v1247, 7
    %v1249 = vsub.s32 2, %v1248
    %v1250 = vrot.slane %v485, %v1249
    %v1251 = vadd.f32 %v1215, %v1250
    %v1252 = vadd.f32 %v1216, %v1250
    %v1253 = vadd.f32 %v1217, %v1250
    %v1254 = vadd.f32 %v1218, %v1250
    %v1255 = vadd.f32 %v1219, %v1250
    %v1256 = vadd.f32 %v1220, %v1250
    %v1257 = vadd.f32 %v1221, %v1250
    %v1258 = vadd.f32 %v1222, %v1250
    %v1259 = vadd.f32 %v1223, %v1250
    %v1260 = vadd.f32 %v1224, %v1250
    %v1261 = vadd.f32 %v1225, %v1250
    %v1262 = vadd.f32 %v1226, %v1250
    %v1263 = vadd.f32 %v1227, %v1250
    %v1264 = vadd.f32 %v1228, %v1250
    %v1265 = vadd.f32 %v1229, %v1250
    %v1266 = vadd.f32 %v1230, %v1250
    %v1267 = vadd.f32 %v1231, %v1250
    %v1268 = vadd.f32 %v1232, %v1250
    %v1269 = vadd.f32 %v1233, %v1250
    %v1270 = vadd.f32 %v1234, %v1250
    %v1271 = vadd.f32 %v1235, %v1250
    %v1272 = vadd.f32 %v1236, %v1250
    %v1273 = vadd.f32 %v1237, %v1250
    %v1274 = vadd.f32 %v1238, %v1250
    %v1275 = vadd.f32 %v1239, %v1250
    %v1276 = vadd.f32 %v1240, %v1250
    %v1277 = vadd.f32 %v1241, %v1250
    %v1278 = vadd.f32 %v1242, %v1250
    %v1279 = vadd.f32 %v1243, %v1250
    %v1280 = vadd.f32 %v1244, %v1250
    %v1281 = vadd.f32 %v1245, %v1250
    %v1282 = vadd.f32 %v1246, %v1250
    %v1283 = vld [vmem:[%s5] sm:$0xff]
    %v1284 = vld [vmem:[%s5 + $0x8] sm:$0xff]
    %v1285 = vld [vmem:[%s5 + $0x10] sm:$0xff]
    %v1286 = vld [vmem:[%s5 + $0x18] sm:$0xff]
    %v1287 = vld [vmem:[%s5 + $0x20] sm:$0xff]
    %v1288 = vld [vmem:[%s5 + $0x28] sm:$0xff]
    %v1289 = vld [vmem:[%s5 + $0x30] sm:$0xff]
    %v1290 = vld [vmem:[%s5 + $0x38] sm:$0xff]
    %v1291 = vld [vmem:[%s5 + $0x40] sm:$0xff]
    %v1292 = vld [vmem:[%s5 + $0x48] sm:$0xff]
    %v1293 = vld [vmem:[%s5 + $0x50] sm:$0xff]
    %v1294 = vld [vmem:[%s5 + $0x58] sm:$0xff]
    %v1295 = vld [vmem:[%s5 + $0x60] sm:$0xff]
    %v1296 = vld [vmem:[%s5 + $0x68] sm:$0xff]
    %v1297 = vld [vmem:[%s5 + $0x70] sm:$0xff]
    %v1298 = vld [vmem:[%s5 + $0x78] sm:$0xff]
    %v1299 = vld [vmem:[%s6] sm:$0x1]
    %v1301 = vlaneseq
    %v1302 = vshrl.u32 %v1301, 7
    %v1303 = vsub.s32 0, %v1302
    %v1304 = vrot.slane %v1299, %v1303
    %1306 = vmatprep.subr.mxu0 0.0
    %1307 = vmatpush1.msra.mxu0 %v1283
    %1308 = vmatprep.subr.mxu0 0.0
    %1309 = vmatpush1.msra.mxu0 %v1284
    %1310 = vmatprep.subr.mxu0 0.0
    %1311 = vmatpush1.msra.mxu0 %v1285
    %1312 = vmatprep.subr.mxu0 0.0
    %1313 = vmatpush1.msra.mxu0 %v1286
    %1314 = vmatprep.subr.mxu0 0.0
    %1315 = vmatpush1.msra.mxu0 %v1287
    %1316 = vmatprep.subr.mxu0 0.0
    %1317 = vmatpush1.msra.mxu0 %v1288
    %1318 = vmatprep.subr.mxu0 0.0
    %1319 = vmatpush1.msra.mxu0 %v1289
    %1320 = vmatprep.subr.mxu0 0.0
    %1321 = vmatpush1.msra.mxu0 %v1290
    %1322 = vmatprep.subr.mxu0 0.0
    %1323 = vmatpush1.msra.mxu0 %v1291
    %1324 = vmatprep.subr.mxu0 0.0
    %1325 = vmatpush1.msra.mxu0 %v1292
    %1326 = vmatprep.subr.mxu0 0.0
    %1327 = vmatpush1.msra.mxu0 %v1293
    %1328 = vmatprep.subr.mxu0 0.0
    %1329 = vmatpush1.msra.mxu0 %v1294
    %1330 = vmatprep.subr.mxu0 0.0
    %1331 = vmatpush1.msra.mxu0 %v1295
    %1332 = vmatprep.subr.mxu0 0.0
    %1333 = vmatpush1.msra.mxu0 %v1296
    %1334 = vmatprep.subr.mxu0 0.0
    %1335 = vmatpush1.msra.mxu0 %v1297
    %1336 = vmatprep.subr.mxu0 0.0
    %1337 = vmatpush1.msra.mxu0 %v1298
    %1338 = vmatprep.subr.mxu0 0.0
    %1339 = vmatpush1.msra.mxu0 0.0
    %1340 = vmatprep.subr.mxu0 0.0
    %1341 = vmatpush1.msra.mxu0 0.0
    %1342 = vmatprep.subr.mxu0 0.0
    %1343 = vmatpush1.msra.mxu0 0.0
    %1344 = vmatprep.subr.mxu0 0.0
    %1345 = vmatpush1.msra.mxu0 0.0
    %1346 = vmatprep.subr.mxu0 0.0
    %1347 = vmatpush1.msra.mxu0 0.0
    %1348 = vmatprep.subr.mxu0 0.0
    %1349 = vmatpush1.msra.mxu0 0.0
    %1350 = vmatprep.subr.mxu0 0.0
    %1351 = vmatpush1.msra.mxu0 0.0
    %1352 = vmatprep.subr.mxu0 0.0
    %1353 = vmatpush1.msra.mxu0 0.0
    %1354 = vmatprep.subr.mxu0 0.0
    %1355 = vmatpush1.msra.mxu0 0.0
    %1356 = vmatprep.subr.mxu0 0.0
    %1357 = vmatpush1.msra.mxu0 0.0
    %1358 = vmatprep.subr.mxu0 0.0
    %1359 = vmatpush1.msra.mxu0 0.0
    %1360 = vmatprep.subr.mxu0 0.0
    %1361 = vmatpush1.msra.mxu0 0.0
    %1362 = vmatprep.subr.mxu0 0.0
    %1363 = vmatpush1.msra.mxu0 0.0
    %1364 = vmatprep.subr.mxu0 0.0
    %1365 = vmatpush1.msra.mxu0 0.0
    %1366 = vmatprep.subr.mxu0 0.0
    %1367 = vmatpush1.msra.mxu0 0.0
    %1368 = vmatprep.subr.mxu0 0.0
    %1369 = vmatpush1.msra.mxu0 0.0
    %1370 = vmatprep.mubr.f32.mxu0 0.0
    %1371 = vmatmul.mubr.f32.gmra.mrb[0].mxu0 %v1251
    %v1372 = vpop.f32.mrb[0].mxu0
    %v1373 = vadd.f32 %v1304, %v1372
    %v1374 = vpop.f32.mrb[0].mxu0
    %1375 = vmatprep.mubr.f32.mxu0 0.0
    %1376 = vmatmul.mubr.f32.gmra.mrb[0].mxu0 %v1252
    %v1377 = vpop.f32.mrb[0].mxu0
    %v1378 = vadd.f32 %v1304, %v1377
    %v1379 = vpop.f32.mrb[0].mxu0
    %1380 = vmatprep.mubr.f32.mxu0 0.0
    %1381 = vmatmul.mubr.f32.gmra.mrb[0].mxu0 %v1253
    %v1382 = vpop.f32.mrb[0].mxu0
    %v1383 = vadd.f32 %v1304, %v1382
    %v1384 = vpop.f32.mrb[0].mxu0
    %1385 = vmatprep.mubr.f32.mxu0 0.0
    %1386 = vmatmul.mubr.f32.gmra.mrb[0].mxu0 %v1254
    %v1387 = vpop.f32.mrb[0].mxu0
    %v1388 = vadd.f32 %v1304, %v1387
    %v1389 = vpop.f32.mrb[0].mxu0
    %1390 = vmatprep.mubr.f32.mxu0 0.0
    %1391 = vmatmul.mubr.f32.gmra.mrb[0].mxu0 %v1255
    %v1392 = vpop.f32.mrb[0].mxu0
    %v1393 = vadd.f32 %v1304, %v1392
    %v1394 = vpop.f32.mrb[0].mxu0
    %1395 = vmatprep.mubr.f32.mxu0 0.0
    %1396 = vmatmul.mubr.f32.gmra.mrb[0].mxu0 %v1256
    %v1397 = vpop.f32.mrb[0].mxu0
    %v1398 = vadd.f32 %v1304, %v1397
    %v1399 = vpop.f32.mrb[0].mxu0
    %1400 = vmatprep.mubr.f32.mxu0 0.0
    %1401 = vmatmul.mubr.f32.gmra.mrb[0].mxu0 %v1257
    %v1402 = vpop.f32.mrb[0].mxu0
    %v1403 = vadd.f32 %v1304, %v1402
    %v1404 = vpop.f32.mrb[0].mxu0
    %1405 = vmatprep.mubr.f32.mxu0 0.0
    %1406 = vmatmul.mubr.f32.gmra.mrb[0].mxu0 %v1258
    %v1407 = vpop.f32.mrb[0].mxu0
    %v1408 = vadd.f32 %v1304, %v1407
    %v1409 = vpop.f32.mrb[0].mxu0
    %1410 = vmatprep.mubr.f32.mxu0 0.0
    %1411 = vmatmul.mubr.f32.gmra.mrb[0].mxu0 %v1259
    %v1412 = vpop.f32.mrb[0].mxu0
    %v1413 = vadd.f32 %v1304, %v1412
    %v1414 = vpop.f32.mrb[0].mxu0
    %1415 = vmatprep.mubr.f32.mxu0 0.0
    %1416 = vmatmul.mubr.f32.gmra.mrb[0].mxu0 %v1260
    %v1417 = vpop.f32.mrb[0].mxu0
    %v1418 = vadd.f32 %v1304, %v1417
    %v1419 = vpop.f32.mrb[0].mxu0
    %1420 = vmatprep.mubr.f32.mxu0 0.0
    %1421 = vmatmul.mubr.f32.gmra.mrb[0].mxu0 %v1261
    %v1422 = vpop.f32.mrb[0].mxu0
    %v1423 = vadd.f32 %v1304, %v1422
    %v1424 = vpop.f32.mrb[0].mxu0
    %1425 = vmatprep.mubr.f32.mxu0 0.0
    %1426 = vmatmul.mubr.f32.gmra.mrb[0].mxu0 %v1262
    %v1427 = vpop.f32.mrb[0].mxu0
    %v1428 = vadd.f32 %v1304, %v1427
    %v1429 = vpop.f32.mrb[0].mxu0
    %1430 = vmatprep.mubr.f32.mxu0 0.0
    %1431 = vmatmul.mubr.f32.gmra.mrb[0].mxu0 %v1263
    %v1432 = vpop.f32.mrb[0].mxu0
    %v1433 = vadd.f32 %v1304, %v1432
    %v1434 = vpop.f32.mrb[0].mxu0
    %1435 = vmatprep.mubr.f32.mxu0 0.0
    %1436 = vmatmul.mubr.f32.gmra.mrb[0].mxu0 %v1264
    %v1437 = vpop.f32.mrb[0].mxu0
    %v1438 = vadd.f32 %v1304, %v1437
    %v1439 = vpop.f32.mrb[0].mxu0
    %1440 = vmatprep.mubr.f32.mxu0 0.0
    %1441 = vmatmul.mubr.f32.gmra.mrb[0].mxu0 %v1265
    %v1442 = vpop.f32.mrb[0].mxu0
    %v1443 = vadd.f32 %v1304, %v1442
    %v1444 = vpop.f32.mrb[0].mxu0
    %1445 = vmatprep.mubr.f32.mxu0 0.0
    %1446 = vmatmul.mubr.f32.gmra.mrb[0].mxu0 %v1266
    %v1447 = vpop.f32.mrb[0].mxu0
    %v1448 = vadd.f32 %v1304, %v1447
    %v1449 = vpop.f32.mrb[0].mxu0
    %1450 = vmatprep.mubr.f32.mxu0 0.0
    %1451 = vmatmul.mubr.f32.gmra.mrb[0].mxu0 %v1267
    %v1452 = vpop.f32.mrb[0].mxu0
    %v1453 = vadd.f32 %v1304, %v1452
    %v1454 = vpop.f32.mrb[0].mxu0
    %1455 = vmatprep.mubr.f32.mxu0 0.0
    %1456 = vmatmul.mubr.f32.gmra.mrb[0].mxu0 %v1268
    %v1457 = vpop.f32.mrb[0].mxu0
    %v1458 = vadd.f32 %v1304, %v1457
    %v1459 = vpop.f32.mrb[0].mxu0
    %1460 = vmatprep.mubr.f32.mxu0 0.0
    %1461 = vmatmul.mubr.f32.gmra.mrb[0].mxu0 %v1269
    %v1462 = vpop.f32.mrb[0].mxu0
    %v1463 = vadd.f32 %v1304, %v1462
    %v1464 = vpop.f32.mrb[0].mxu0
    %1465 = vmatprep.mubr.f32.mxu0 0.0
    %1466 = vmatmul.mubr.f32.gmra.mrb[0].mxu0 %v1270
    %v1467 = vpop.f32.mrb[0].mxu0
    %v1468 = vadd.f32 %v1304, %v1467
    %v1469 = vpop.f32.mrb[0].mxu0
    %1470 = vmatprep.mubr.f32.mxu0 0.0
    %1471 = vmatmul.mubr.f32.gmra.mrb[0].mxu0 %v1271
    %v1472 = vpop.f32.mrb[0].mxu0
    %v1473 = vadd.f32 %v1304, %v1472
    %v1474 = vpop.f32.mrb[0].mxu0
    %1475 = vmatprep.mubr.f32.mxu0 0.0
    %1476 = vmatmul.mubr.f32.gmra.mrb[0].mxu0 %v1272
    %v1477 = vpop.f32.mrb[0].mxu0
    %v1478 = vadd.f32 %v1304, %v1477
    %v1479 = vpop.f32.mrb[0].mxu0
    %1480 = vmatprep.mubr.f32.mxu0 0.0
    %1481 = vmatmul.mubr.f32.gmra.mrb[0].mxu0 %v1273
    %v1482 = vpop.f32.mrb[0].mxu0
    %v1483 = vadd.f32 %v1304, %v1482
    %v1484 = vpop.f32.mrb[0].mxu0
    %1485 = vmatprep.mubr.f32.mxu0 0.0
    %1486 = vmatmul.mubr.f32.gmra.mrb[0].mxu0 %v1274
    %v1487 = vpop.f32.mrb[0].mxu0
    %v1488 = vadd.f32 %v1304, %v1487
    %v1489 = vpop.f32.mrb[0].mxu0
    %1490 = vmatprep.mubr.f32.mxu0 0.0
    %1491 = vmatmul.mubr.f32.gmra.mrb[0].mxu0 %v1275
    %v1492 = vpop.f32.mrb[0].mxu0
    %v1493 = vadd.f32 %v1304, %v1492
    %v1494 = vpop.f32.mrb[0].mxu0
    %1495 = vmatprep.mubr.f32.mxu0 0.0
    %1496 = vmatmul.mubr.f32.gmra.mrb[0].mxu0 %v1276
    %v1497 = vpop.f32.mrb[0].mxu0
    %v1498 = vadd.f32 %v1304, %v1497
    %v1499 = vpop.f32.mrb[0].mxu0
    %1500 = vmatprep.mubr.f32.mxu0 0.0
    %1501 = vmatmul.mubr.f32.gmra.mrb[0].mxu0 %v1277
    %v1502 = vpop.f32.mrb[0].mxu0
    %v1503 = vadd.f32 %v1304, %v1502
    %v1504 = vpop.f32.mrb[0].mxu0
    %1505 = vmatprep.mubr.f32.mxu0 0.0
    %1506 = vmatmul.mubr.f32.gmra.mrb[0].mxu0 %v1278
    %v1507 = vpop.f32.mrb[0].mxu0
    %v1508 = vadd.f32 %v1304, %v1507
    %v1509 = vpop.f32.mrb[0].mxu0
    %1510 = vmatprep.mubr.f32.mxu0 0.0
    %1511 = vmatmul.mubr.f32.gmra.mrb[0].mxu0 %v1279
    %v1512 = vpop.f32.mrb[0].mxu0
    %v1513 = vadd.f32 %v1304, %v1512
    %v1514 = vpop.f32.mrb[0].mxu0
    %1515 = vmatprep.mubr.f32.mxu0 0.0
    %1516 = vmatmul.mubr.f32.gmra.mrb[0].mxu0 %v1280
    %v1517 = vpop.f32.mrb[0].mxu0
    %v1518 = vadd.f32 %v1304, %v1517
    %v1519 = vpop.f32.mrb[0].mxu0
    %1520 = vmatprep.mubr.f32.mxu0 0.0
    %1521 = vmatmul.mubr.f32.gmra.mrb[0].mxu0 %v1281
    %v1522 = vpop.f32.mrb[0].mxu0
    %v1523 = vadd.f32 %v1304, %v1522
    %v1524 = vpop.f32.mrb[0].mxu0
    %1525 = vmatprep.mubr.f32.mxu0 0.0
    %1526 = vmatmul.mubr.f32.gmra.mrb[0].mxu0 %v1282
    %v1527 = vpop.f32.mrb[0].mxu0
    %v1528 = vadd.f32 %v1304, %v1527
    %v1529 = vpop.f32.mrb[0].mxu0
    %1530 = vdwg.mxu0
    %v1531 = vmax.f32 %v1373, 0.0
    %v1532 = vmax.f32 %v1378, 0.0
    %v1533 = vmax.f32 %v1383, 0.0
    %v1534 = vmax.f32 %v1388, 0.0
    %v1535 = vmax.f32 %v1393, 0.0
    %v1536 = vmax.f32 %v1398, 0.0
    %v1537 = vmax.f32 %v1403, 0.0
    %v1538 = vmax.f32 %v1408, 0.0
    %v1539 = vmax.f32 %v1413, 0.0
    %v1540 = vmax.f32 %v1418, 0.0
    %v1541 = vmax.f32 %v1423, 0.0
    %v1542 = vmax.f32 %v1428, 0.0
    %v1543 = vmax.f32 %v1433, 0.0
    %v1544 = vmax.f32 %v1438, 0.0
    %v1545 = vmax.f32 %v1443, 0.0
    %v1546 = vmax.f32 %v1448, 0.0
    %v1547 = vmax.f32 %v1453, 0.0
    %v1548 = vmax.f32 %v1458, 0.0
    %v1549 = vmax.f32 %v1463, 0.0
    %v1550 = vmax.f32 %v1468, 0.0
    %v1551 = vmax.f32 %v1473, 0.0
    %v1552 = vmax.f32 %v1478, 0.0
    %v1553 = vmax.f32 %v1483, 0.0
    %v1554 = vmax.f32 %v1488, 0.0
    %v1555 = vmax.f32 %v1493, 0.0
    %v1556 = vmax.f32 %v1498, 0.0
    %v1557 = vmax.f32 %v1503, 0.0
    %v1558 = vmax.f32 %v1508, 0.0
    %v1559 = vmax.f32 %v1513, 0.0
    %v1560 = vmax.f32 %v1518, 0.0
    %v1561 = vmax.f32 %v1523, 0.0
    %v1562 = vmax.f32 %v1528, 0.0
    %v1563 = vld [vmem:[%s8] sm:$0x7]
    %v1564 = vld [vmem:[#allocation2] sm:$0xff]
    %v1565 = vld [vmem:[#allocation2 + $0x8] sm:$0xff]
    %v1566 = vld [vmem:[#allocation2 + $0x10] sm:$0xff]
    %v1567 = vld [vmem:[#allocation2 + $0x18] sm:$0xff]
    %v1568 = vld [vmem:[#allocation2 + $0x20] sm:$0xff]
    %v1569 = vld [vmem:[#allocation2 + $0x28] sm:$0xff]
    %v1570 = vld [vmem:[#allocation2 + $0x30] sm:$0xff]
    %v1571 = vld [vmem:[#allocation2 + $0x38] sm:$0xff]
    %v1572 = vld [vmem:[#allocation2 + $0x40] sm:$0xff]
    %v1573 = vld [vmem:[#allocation2 + $0x48] sm:$0xff]
    %v1574 = vld [vmem:[#allocation2 + $0x50] sm:$0xff]
    %v1575 = vld [vmem:[#allocation2 + $0x58] sm:$0xff]
    %v1576 = vld [vmem:[#allocation2 + $0x60] sm:$0xff]
    %v1577 = vld [vmem:[#allocation2 + $0x68] sm:$0xff]
    %v1578 = vld [vmem:[#allocation2 + $0x70] sm:$0xff]
    %v1579 = vld [vmem:[#allocation2 + $0x78] sm:$0xff]
    %v1580 = vlaneseq
    %v1581 = vshrl.u32 %v1580, 7
    %v1582 = vsub.s32 0, %v1581
    %v1583 = vrot.slane %v1563, %v1582
    %1584 = vmatprep.subr.mxu0 0.0
    %1585 = vmatpush1.msra.mxu0 %v1564
    %1586 = vmatprep.subr.mxu0 0.0
    %1587 = vmatpush1.msra.mxu0 %v1565
    %1588 = vmatprep.subr.mxu0 0.0
    %1589 = vmatpush1.msra.mxu0 %v1566
    %1590 = vmatprep.subr.mxu0 0.0
    %1591 = vmatpush1.msra.mxu0 %v1567
    %1592 = vmatprep.subr.mxu0 0.0
    %1593 = vmatpush1.msra.mxu0 %v1568
    %1594 = vmatprep.subr.mxu0 0.0
    %1595 = vmatpush1.msra.mxu0 %v1569
    %1596 = vmatprep.subr.mxu0 0.0
    %1597 = vmatpush1.msra.mxu0 %v1570
    %1598 = vmatprep.subr.mxu0 0.0
    %1599 = vmatpush1.msra.mxu0 %v1571
    %1600 = vmatprep.subr.mxu0 0.0
    %1601 = vmatpush1.msra.mxu0 %v1572
    %1602 = vmatprep.subr.mxu0 0.0
    %1603 = vmatpush1.msra.mxu0 %v1573
    %1604 = vmatprep.subr.mxu0 0.0
    %1605 = vmatpush1.msra.mxu0 %v1574
    %1606 = vmatprep.subr.mxu0 0.0
    %1607 = vmatpush1.msra.mxu0 %v1575
    %1608 = vmatprep.subr.mxu0 0.0
    %1609 = vmatpush1.msra.mxu0 %v1576
    %1610 = vmatprep.subr.mxu0 0.0
    %1611 = vmatpush1.msra.mxu0 %v1577
    %1612 = vmatprep.subr.mxu0 0.0
    %1613 = vmatpush1.msra.mxu0 %v1578
    %1614 = vmatprep.subr.mxu0 0.0
    %1615 = vmatpush1.msra.mxu0 %v1579
    %1616 = vmatprep.subr.mxu0 0.0
    %1617 = vmatpush1.msra.mxu0 0.0
    %1618 = vmatprep.subr.mxu0 0.0
    %1619 = vmatpush1.msra.mxu0 0.0
    %1620 = vmatprep.subr.mxu0 0.0
    %1621 = vmatpush1.msra.mxu0 0.0
    %1622 = vmatprep.subr.mxu0 0.0
    %1623 = vmatpush1.msra.mxu0 0.0
    %1624 = vmatprep.subr.mxu0 0.0
    %1625 = vmatpush1.msra.mxu0 0.0
    %1626 = vmatprep.subr.mxu0 0.0
    %1627 = vmatpush1.msra.mxu0 0.0
    %1628 = vmatprep.subr.mxu0 0.0
    %1629 = vmatpush1.msra.mxu0 0.0
    %1630 = vmatprep.subr.mxu0 0.0
    %1631 = vmatpush1.msra.mxu0 0.0
    %1632 = vmatprep.subr.mxu0 0.0
    %1633 = vmatpush1.msra.mxu0 0.0
    %1634 = vmatprep.subr.mxu0 0.0
    %1635 = vmatpush1.msra.mxu0 0.0
    %1636 = vmatprep.subr.mxu0 0.0
    %1637 = vmatpush1.msra.mxu0 0.0
    %1638 = vmatprep.subr.mxu0 0.0
    %1639 = vmatpush1.msra.mxu0 0.0
    %1640 = vmatprep.subr.mxu0 0.0
    %1641 = vmatpush1.msra.mxu0 0.0
    %1642 = vmatprep.subr.mxu0 0.0
    %1643 = vmatpush1.msra.mxu0 0.0
    %1644 = vmatprep.subr.mxu0 0.0
    %1645 = vmatpush1.msra.mxu0 0.0
    %1646 = vmatprep.subr.mxu0 0.0
    %1647 = vmatpush1.msra.mxu0 0.0
    %1648 = vmatprep.mubr.f32.mxu0 0.0
    %1649 = vmatmul.mubr.f32.gmra.mrb[0].mxu0 %v1531
    %v1650 = vpop.f32.mrb[0].mxu0
    %v1651 = vadd.f32 %v1583, %v1650
    %v1652 = vpop.f32.mrb[0].mxu0
    %1653 = vmatprep.mubr.f32.mxu0 0.0
    %1654 = vmatmul.mubr.f32.gmra.mrb[0].mxu0 %v1532
    %v1655 = vpop.f32.mrb[0].mxu0
    %v1656 = vadd.f32 %v1583, %v1655
    %v1657 = vpop.f32.mrb[0].mxu0
    %1658 = vmatprep.mubr.f32.mxu0 0.0
    %1659 = vmatmul.mubr.f32.gmra.mrb[0].mxu0 %v1533
    %v1660 = vpop.f32.mrb[0].mxu0
    %v1661 = vadd.f32 %v1583, %v1660
    %v1662 = vpop.f32.mrb[0].mxu0
    %1663 = vmatprep.mubr.f32.mxu0 0.0
    %1664 = vmatmul.mubr.f32.gmra.mrb[0].mxu0 %v1534
    %v1665 = vpop.f32.mrb[0].mxu0
    %v1666 = vadd.f32 %v1583, %v1665
    %v1667 = vpop.f32.mrb[0].mxu0
    %1668 = vmatprep.mubr.f32.mxu0 0.0
    %1669 = vmatmul.mubr.f32.gmra.mrb[0].mxu0 %v1535
    %v1670 = vpop.f32.mrb[0].mxu0
    %v1671 = vadd.f32 %v1583, %v1670
    %v1672 = vpop.f32.mrb[0].mxu0
    %1673 = vmatprep.mubr.f32.mxu0 0.0
    %1674 = vmatmul.mubr.f32.gmra.mrb[0].mxu0 %v1536
    %v1675 = vpop.f32.mrb[0].mxu0
    %v1676 = vadd.f32 %v1583, %v1675
    %v1677 = vpop.f32.mrb[0].mxu0
    %1678 = vmatprep.mubr.f32.mxu0 0.0
    %1679 = vmatmul.mubr.f32.gmra.mrb[0].mxu0 %v1537
    %v1680 = vpop.f32.mrb[0].mxu0
    %v1681 = vadd.f32 %v1583, %v1680
    %v1682 = vpop.f32.mrb[0].mxu0
    %1683 = vmatprep.mubr.f32.mxu0 0.0
    %1684 = vmatmul.mubr.f32.gmra.mrb[0].mxu0 %v1538
    %v1685 = vpop.f32.mrb[0].mxu0
    %v1686 = vadd.f32 %v1583, %v1685
    %v1687 = vpop.f32.mrb[0].mxu0
    %1688 = vmatprep.mubr.f32.mxu0 0.0
    %1689 = vmatmul.mubr.f32.gmra.mrb[0].mxu0 %v1539
    %v1690 = vpop.f32.mrb[0].mxu0
    %v1691 = vadd.f32 %v1583, %v1690
    %v1692 = vpop.f32.mrb[0].mxu0
    %1693 = vmatprep.mubr.f32.mxu0 0.0
    %1694 = vmatmul.mubr.f32.gmra.mrb[0].mxu0 %v1540
    %v1695 = vpop.f32.mrb[0].mxu0
    %v1696 = vadd.f32 %v1583, %v1695
    %v1697 = vpop.f32.mrb[0].mxu0
    %1698 = vmatprep.mubr.f32.mxu0 0.0
    %1699 = vmatmul.mubr.f32.gmra.mrb[0].mxu0 %v1541
    %v1700 = vpop.f32.mrb[0].mxu0
    %v1701 = vadd.f32 %v1583, %v1700
    %v1702 = vpop.f32.mrb[0].mxu0
    %1703 = vmatprep.mubr.f32.mxu0 0.0
    %1704 = vmatmul.mubr.f32.gmra.mrb[0].mxu0 %v1542
    %v1705 = vpop.f32.mrb[0].mxu0
    %v1706 = vadd.f32 %v1583, %v1705
    %v1707 = vpop.f32.mrb[0].mxu0
    %1708 = vmatprep.mubr.f32.mxu0 0.0
    %1709 = vmatmul.mubr.f32.gmra.mrb[0].mxu0 %v1543
    %v1710 = vpop.f32.mrb[0].mxu0
    %v1711 = vadd.f32 %v1583, %v1710
    %v1712 = vpop.f32.mrb[0].mxu0
    %1713 = vmatprep.mubr.f32.mxu0 0.0
    %1714 = vmatmul.mubr.f32.gmra.mrb[0].mxu0 %v1544
    %v1715 = vpop.f32.mrb[0].mxu0
    %v1716 = vadd.f32 %v1583, %v1715
    %v1717 = vpop.f32.mrb[0].mxu0
    %1718 = vmatprep.mubr.f32.mxu0 0.0
    %1719 = vmatmul.mubr.f32.gmra.mrb[0].mxu0 %v1545
    %v1720 = vpop.f32.mrb[0].mxu0
    %v1721 = vadd.f32 %v1583, %v1720
    %v1722 = vpop.f32.mrb[0].mxu0
    %1723 = vmatprep.mubr.f32.mxu0 0.0
    %1724 = vmatmul.mubr.f32.gmra.mrb[0].mxu0 %v1546
    %v1725 = vpop.f32.mrb[0].mxu0
    %v1726 = vadd.f32 %v1583, %v1725
    %v1727 = vpop.f32.mrb[0].mxu0
    %1728 = vmatprep.mubr.f32.mxu0 0.0
    %1729 = vmatmul.mubr.f32.gmra.mrb[0].mxu0 %v1547
    %v1730 = vpop.f32.mrb[0].mxu0
    %v1731 = vadd.f32 %v1583, %v1730
    %v1732 = vpop.f32.mrb[0].mxu0
    %1733 = vmatprep.mubr.f32.mxu0 0.0
    %1734 = vmatmul.mubr.f32.gmra.mrb[0].mxu0 %v1548
    %v1735 = vpop.f32.mrb[0].mxu0
    %v1736 = vadd.f32 %v1583, %v1735
    %v1737 = vpop.f32.mrb[0].mxu0
    %1738 = vmatprep.mubr.f32.mxu0 0.0
    %1739 = vmatmul.mubr.f32.gmra.mrb[0].mxu0 %v1549
    %v1740 = vpop.f32.mrb[0].mxu0
    %v1741 = vadd.f32 %v1583, %v1740
    %v1742 = vpop.f32.mrb[0].mxu0
    %1743 = vmatprep.mubr.f32.mxu0 0.0
    %1744 = vmatmul.mubr.f32.gmra.mrb[0].mxu0 %v1550
    %v1745 = vpop.f32.mrb[0].mxu0
    %v1746 = vadd.f32 %v1583, %v1745
    %v1747 = vpop.f32.mrb[0].mxu0
    %1748 = vmatprep.mubr.f32.mxu0 0.0
    %1749 = vmatmul.mubr.f32.gmra.mrb[0].mxu0 %v1551
    %v1750 = vpop.f32.mrb[0].mxu0
    %v1751 = vadd.f32 %v1583, %v1750
    %v1752 = vpop.f32.mrb[0].mxu0
    %1753 = vmatprep.mubr.f32.mxu0 0.0
    %1754 = vmatmul.mubr.f32.gmra.mrb[0].mxu0 %v1552
    %v1755 = vpop.f32.mrb[0].mxu0
    %v1756 = vadd.f32 %v1583, %v1755
    %v1757 = vpop.f32.mrb[0].mxu0
    %1758 = vmatprep.mubr.f32.mxu0 0.0
    %1759 = vmatmul.mubr.f32.gmra.mrb[0].mxu0 %v1553
    %v1760 = vpop.f32.mrb[0].mxu0
    %v1761 = vadd.f32 %v1583, %v1760
    %v1762 = vpop.f32.mrb[0].mxu0
    %1763 = vmatprep.mubr.f32.mxu0 0.0
    %1764 = vmatmul.mubr.f32.gmra.mrb[0].mxu0 %v1554
    %v1765 = vpop.f32.mrb[0].mxu0
    %v1766 = vadd.f32 %v1583, %v1765
    %v1767 = vpop.f32.mrb[0].mxu0
    %1768 = vmatprep.mubr.f32.mxu0 0.0
    %1769 = vmatmul.mubr.f32.gmra.mrb[0].mxu0 %v1555
    %v1770 = vpop.f32.mrb[0].mxu0
    %v1771 = vadd.f32 %v1583, %v1770
    %v1772 = vpop.f32.mrb[0].mxu0
    %1773 = vmatprep.mubr.f32.mxu0 0.0
    %1774 = vmatmul.mubr.f32.gmra.mrb[0].mxu0 %v1556
    %v1775 = vpop.f32.mrb[0].mxu0
    %v1776 = vadd.f32 %v1583, %v1775
    %v1777 = vpop.f32.mrb[0].mxu0
    %1778 = vmatprep.mubr.f32.mxu0 0.0
    %1779 = vmatmul.mubr.f32.gmra.mrb[0].mxu0 %v1557
    %v1780 = vpop.f32.mrb[0].mxu0
    %v1781 = vadd.f32 %v1583, %v1780
    %v1782 = vpop.f32.mrb[0].mxu0
    %1783 = vmatprep.mubr.f32.mxu0 0.0
    %1784 = vmatmul.mubr.f32.gmra.mrb[0].mxu0 %v1558
    %v1785 = vpop.f32.mrb[0].mxu0
    %v1786 = vadd.f32 %v1583, %v1785
    %v1787 = vpop.f32.mrb[0].mxu0
    %1788 = vmatprep.mubr.f32.mxu0 0.0
    %1789 = vmatmul.mubr.f32.gmra.mrb[0].mxu0 %v1559
    %v1790 = vpop.f32.mrb[0].mxu0
    %v1791 = vadd.f32 %v1583, %v1790
    %v1792 = vpop.f32.mrb[0].mxu0
    %1793 = vmatprep.mubr.f32.mxu0 0.0
    %1794 = vmatmul.mubr.f32.gmra.mrb[0].mxu0 %v1560
    %v1795 = vpop.f32.mrb[0].mxu0
    %v1796 = vadd.f32 %v1583, %v1795
    %v1797 = vpop.f32.mrb[0].mxu0
    %1798 = vmatprep.mubr.f32.mxu0 0.0
    %1799 = vmatmul.mubr.f32.gmra.mrb[0].mxu0 %v1561
    %v1800 = vpop.f32.mrb[0].mxu0
    %v1801 = vadd.f32 %v1583, %v1800
    %v1802 = vpop.f32.mrb[0].mxu0
    %1803 = vmatprep.mubr.f32.mxu0 0.0
    %1804 = vmatmul.mubr.f32.gmra.mrb[0].mxu0 %v1562
    %v1805 = vpop.f32.mrb[0].mxu0
    %v1806 = vadd.f32 %v1583, %v1805
    %v1807 = vpop.f32.mrb[0].mxu0
    %1808 = vdwg.mxu0
    %v1809 = vadd.f32 %v1651, %v1251
    %v1810 = vadd.f32 %v1656, %v1252
    %v1811 = vadd.f32 %v1661, %v1253
    %v1812 = vadd.f32 %v1666, %v1254
    %v1813 = vadd.f32 %v1671, %v1255
    %v1814 = vadd.f32 %v1676, %v1256
    %v1815 = vadd.f32 %v1681, %v1257
    %v1816 = vadd.f32 %v1686, %v1258
    %v1817 = vadd.f32 %v1691, %v1259
    %v1818 = vadd.f32 %v1696, %v1260
    %v1819 = vadd.f32 %v1701, %v1261
    %v1820 = vadd.f32 %v1706, %v1262
    %v1821 = vadd.f32 %v1711, %v1263
    %v1822 = vadd.f32 %v1716, %v1264
    %v1823 = vadd.f32 %v1721, %v1265
    %v1824 = vadd.f32 %v1726, %v1266
    %v1825 = vadd.f32 %v1731, %v1267
    %v1826 = vadd.f32 %v1736, %v1268
    %v1827 = vadd.f32 %v1741, %v1269
    %v1828 = vadd.f32 %v1746, %v1270
    %v1829 = vadd.f32 %v1751, %v1271
    %v1830 = vadd.f32 %v1756, %v1272
    %v1831 = vadd.f32 %v1761, %v1273
    %v1832 = vadd.f32 %v1766, %v1274
    %v1833 = vadd.f32 %v1771, %v1275
    %v1834 = vadd.f32 %v1776, %v1276
    %v1835 = vadd.f32 %v1781, %v1277
    %v1836 = vadd.f32 %v1786, %v1278
    %v1837 = vadd.f32 %v1791, %v1279
    %v1838 = vadd.f32 %v1796, %v1280
    %v1839 = vadd.f32 %v1801, %v1281
    %v1840 = vadd.f32 %v1806, %v1282
    %1841 = vadd.xlane.f32.xlu0 %v1809
    %v1842 = vpop.xlane.xlu0 %1841
    %1843 = vadd.xlane.f32.xlu0 %v1810
    %v1844 = vpop.xlane.xlu0 %1843
    %1845 = vadd.xlane.f32.xlu0 %v1811
    %v1846 = vpop.xlane.xlu0 %1845
    %1847 = vadd.xlane.f32.xlu0 %v1812
    %v1848 = vpop.xlane.xlu0 %1847
    %1849 = vadd.xlane.f32.xlu0 %v1813
    %v1850 = vpop.xlane.xlu0 %1849
    %1851 = vadd.xlane.f32.xlu0 %v1814
    %v1852 = vpop.xlane.xlu0 %1851
    %1853 = vadd.xlane.f32.xlu0 %v1815
    %v1854 = vpop.xlane.xlu0 %1853
    %1855 = vadd.xlane.f32.xlu0 %v1816
    %v1856 = vpop.xlane.xlu0 %1855
    %1857 = vadd.xlane.f32.xlu0 %v1817
    %v1858 = vpop.xlane.xlu0 %1857
    %1859 = vadd.xlane.f32.xlu0 %v1818
    %v1860 = vpop.xlane.xlu0 %1859
    %1861 = vadd.xlane.f32.xlu0 %v1819
    %v1862 = vpop.xlane.xlu0 %1861
    %1863 = vadd.xlane.f32.xlu0 %v1820
    %v1864 = vpop.xlane.xlu0 %1863
    %1865 = vadd.xlane.f32.xlu0 %v1821
    %v1866 = vpop.xlane.xlu0 %1865
    %1867 = vadd.xlane.f32.xlu0 %v1822
    %v1868 = vpop.xlane.xlu0 %1867
    %1869 = vadd.xlane.f32.xlu0 %v1823
    %v1870 = vpop.xlane.xlu0 %1869
    %1871 = vadd.xlane.f32.xlu0 %v1824
    %v1872 = vpop.xlane.xlu0 %1871
    %1873 = vadd.xlane.f32.xlu0 %v1825
    %v1874 = vpop.xlane.xlu0 %1873
    %1875 = vadd.xlane.f32.xlu0 %v1826
    %v1876 = vpop.xlane.xlu0 %1875
    %1877 = vadd.xlane.f32.xlu0 %v1827
    %v1878 = vpop.xlane.xlu0 %1877
    %1879 = vadd.xlane.f32.xlu0 %v1828
    %v1880 = vpop.xlane.xlu0 %1879
    %1881 = vadd.xlane.f32.xlu0 %v1829
    %v1882 = vpop.xlane.xlu0 %1881
    %1883 = vadd.xlane.f32.xlu0 %v1830
    %v1884 = vpop.xlane.xlu0 %1883
    %1885 = vadd.xlane.f32.xlu0 %v1831
    %v1886 = vpop.xlane.xlu0 %1885
    %1887 = vadd.xlane.f32.xlu0 %v1832
    %v1888 = vpop.xlane.xlu0 %1887
    %1889 = vadd.xlane.f32.xlu0 %v1833
    %v1890 = vpop.xlane.xlu0 %1889
    %1891 = vadd.xlane.f32.xlu0 %v1834
    %v1892 = vpop.xlane.xlu0 %1891
    %1893 = vadd.xlane.f32.xlu0 %v1835
    %v1894 = vpop.xlane.xlu0 %1893
    %1895 = vadd.xlane.f32.xlu0 %v1836
    %v1896 = vpop.xlane.xlu0 %1895
    %1897 = vadd.xlane.f32.xlu0 %v1837
    %v1898 = vpop.xlane.xlu0 %1897
    %1899 = vadd.xlane.f32.xlu0 %v1838
    %v1900 = vpop.xlane.xlu0 %1899
    %1901 = vadd.xlane.f32.xlu0 %v1839
    %v1902 = vpop.xlane.xlu0 %1901
    %1903 = vadd.xlane.f32.xlu0 %v1840
    %v1904 = vpop.xlane.xlu0 %1903
    %v1905 = vmul.f32 %v1842, 0.041666668
    %v1906 = vmul.f32 %v1844, 0.041666668
    %v1907 = vmul.f32 %v1846, 0.041666668
    %v1908 = vmul.f32 %v1848, 0.041666668
    %v1909 = vmul.f32 %v1850, 0.041666668
    %v1910 = vmul.f32 %v1852, 0.041666668
    %v1911 = vmul.f32 %v1854, 0.041666668
    %v1912 = vmul.f32 %v1856, 0.041666668
    %v1913 = vmul.f32 %v1858, 0.041666668
    %v1914 = vmul.f32 %v1860, 0.041666668
    %v1915 = vmul.f32 %v1862, 0.041666668
    %v1916 = vmul.f32 %v1864, 0.041666668
    %v1917 = vmul.f32 %v1866, 0.041666668
    %v1918 = vmul.f32 %v1868, 0.041666668
    %v1919 = vmul.f32 %v1870, 0.041666668
    %v1920 = vmul.f32 %v1872, 0.041666668
    %v1921 = vmul.f32 %v1874, 0.041666668
    %v1922 = vmul.f32 %v1876, 0.041666668
    %v1923 = vmul.f32 %v1878, 0.041666668
    %v1924 = vmul.f32 %v1880, 0.041666668
    %v1925 = vmul.f32 %v1882, 0.041666668
    %v1926 = vmul.f32 %v1884, 0.041666668
    %v1927 = vmul.f32 %v1886, 0.041666668
    %v1928 = vmul.f32 %v1888, 0.041666668
    %v1929 = vmul.f32 %v1890, 0.041666668
    %v1930 = vmul.f32 %v1892, 0.041666668
    %v1931 = vmul.f32 %v1894, 0.041666668
    %v1932 = vmul.f32 %v1896, 0.041666668
    %v1933 = vmul.f32 %v1898, 0.041666668
    %v1934 = vmul.f32 %v1900, 0.041666668
    %v1935 = vmul.f32 %v1902, 0.041666668
    %v1936 = vmul.f32 %v1904, 0.041666668
    %v1937 = vmul.f32 %v1809, %v1809
    %v1938 = vmul.f32 %v1810, %v1810
    %v1939 = vmul.f32 %v1811, %v1811
    %v1940 = vmul.f32 %v1812, %v1812
    %v1941 = vmul.f32 %v1813, %v1813
    %v1942 = vmul.f32 %v1814, %v1814
    %v1943 = vmul.f32 %v1815, %v1815
    %v1944 = vmul.f32 %v1816, %v1816
    %v1945 = vmul.f32 %v1817, %v1817
    %v1946 = vmul.f32 %v1818, %v1818
    %v1947 = vmul.f32 %v1819, %v1819
    %v1948 = vmul.f32 %v1820, %v1820
    %v1949 = vmul.f32 %v1821, %v1821
    %v1950 = vmul.f32 %v1822, %v1822
    %v1951 = vmul.f32 %v1823, %v1823
    %v1952 = vmul.f32 %v1824, %v1824
    %v1953 = vmul.f32 %v1825, %v1825
    %v1954 = vmul.f32 %v1826, %v1826
    %v1955 = vmul.f32 %v1827, %v1827
    %v1956 = vmul.f32 %v1828, %v1828
    %v1957 = vmul.f32 %v1829, %v1829
    %v1958 = vmul.f32 %v1830, %v1830
    %v1959 = vmul.f32 %v1831, %v1831
    %v1960 = vmul.f32 %v1832, %v1832
    %v1961 = vmul.f32 %v1833, %v1833
    %v1962 = vmul.f32 %v1834, %v1834
    %v1963 = vmul.f32 %v1835, %v1835
    %v1964 = vmul.f32 %v1836, %v1836
    %v1965 = vmul.f32 %v1837, %v1837
    %v1966 = vmul.f32 %v1838, %v1838
    %v1967 = vmul.f32 %v1839, %v1839
    %v1968 = vmul.f32 %v1840, %v1840
    %1969 = vadd.xlane.f32.xlu0 %v1937
    %v1970 = vpop.xlane.xlu0 %1969
    %1971 = vadd.xlane.f32.xlu0 %v1938
    %v1972 = vpop.xlane.xlu0 %1971
    %1973 = vadd.xlane.f32.xlu0 %v1939
    %v1974 = vpop.xlane.xlu0 %1973
    %1975 = vadd.xlane.f32.xlu0 %v1940
    %v1976 = vpop.xlane.xlu0 %1975
    %1977 = vadd.xlane.f32.xlu0 %v1941
    %v1978 = vpop.xlane.xlu0 %1977
    %1979 = vadd.xlane.f32.xlu0 %v1942
    %v1980 = vpop.xlane.xlu0 %1979
    %1981 = vadd.xlane.f32.xlu0 %v1943
    %v1982 = vpop.xlane.xlu0 %1981
    %1983 = vadd.xlane.f32.xlu0 %v1944
    %v1984 = vpop.xlane.xlu0 %1983
    %1985 = vadd.xlane.f32.xlu0 %v1945
    %v1986 = vpop.xlane.xlu0 %1985
    %1987 = vadd.xlane.f32.xlu0 %v1946
    %v1988 = vpop.xlane.xlu0 %1987
    %1989 = vadd.xlane.f32.xlu0 %v1947
    %v1990 = vpop.xlane.xlu0 %1989
    %1991 = vadd.xlane.f32.xlu0 %v1948
    %v1992 = vpop.xlane.xlu0 %1991
    %1993 = vadd.xlane.f32.xlu0 %v1949
    %v1994 = vpop.xlane.xlu0 %1993
    %1995 = vadd.xlane.f32.xlu0 %v1950
    %v1996 = vpop.xlane.xlu0 %1995
    %1997 = vadd.xlane.f32.xlu0 %v1951
    %v1998 = vpop.xlane.xlu0 %1997
    %1999 = vadd.xlane.f32.xlu0 %v1952
    %v2000 = vpop.xlane.xlu0 %1999
    %2001 = vadd.xlane.f32.xlu0 %v1953
    %v2002 = vpop.xlane.xlu0 %2001
    %2003 = vadd.xlane.f32.xlu0 %v1954
    %v2004 = vpop.xlane.xlu0 %2003
    %2005 = vadd.xlane.f32.xlu0 %v1955
    %v2006 = vpop.xlane.xlu0 %2005
    %2007 = vadd.xlane.f32.xlu0 %v1956
    %v2008 = vpop.xlane.xlu0 %2007
    %2009 = vadd.xlane.f32.xlu0 %v1957
    %v2010 = vpop.xlane.xlu0 %2009
    %2011 = vadd.xlane.f32.xlu0 %v1958
    %v2012 = vpop.xlane.xlu0 %2011
    %2013 = vadd.xlane.f32.xlu0 %v1959
    %v2014 = vpop.xlane.xlu0 %2013
    %2015 = vadd.xlane.f32.xlu0 %v1960
    %v2016 = vpop.xlane.xlu0 %2015
    %2017 = vadd.xlane.f32.xlu0 %v1961
    %v2018 = vpop.xlane.xlu0 %2017
    %2019 = vadd.xlane.f32.xlu0 %v1962
    %v2020 = vpop.xlane.xlu0 %2019
    %2021 = vadd.xlane.f32.xlu0 %v1963
    %v2022 = vpop.xlane.xlu0 %2021
    %2023 = vadd.xlane.f32.xlu0 %v1964
    %v2024 = vpop.xlane.xlu0 %2023
    %2025 = vadd.xlane.f32.xlu0 %v1965
    %v2026 = vpop.xlane.xlu0 %2025
    %2027 = vadd.xlane.f32.xlu0 %v1966
    %v2028 = vpop.xlane.xlu0 %2027
    %2029 = vadd.xlane.f32.xlu0 %v1967
    %v2030 = vpop.xlane.xlu0 %2029
    %2031 = vadd.xlane.f32.xlu0 %v1968
    %v2032 = vpop.xlane.xlu0 %2031
    %v2033 = vmul.f32 %v1970, 0.041666668
    %v2034 = vmul.f32 %v1972, 0.041666668
    %v2035 = vmul.f32 %v1974, 0.041666668
    %v2036 = vmul.f32 %v1976, 0.041666668
    %v2037 = vmul.f32 %v1978, 0.041666668
    %v2038 = vmul.f32 %v1980, 0.041666668
    %v2039 = vmul.f32 %v1982, 0.041666668
    %v2040 = vmul.f32 %v1984, 0.041666668
    %v2041 = vmul.f32 %v1986, 0.041666668
    %v2042 = vmul.f32 %v1988, 0.041666668
    %v2043 = vmul.f32 %v1990, 0.041666668
    %v2044 = vmul.f32 %v1992, 0.041666668
    %v2045 = vmul.f32 %v1994, 0.041666668
    %v2046 = vmul.f32 %v1996, 0.041666668
    %v2047 = vmul.f32 %v1998, 0.041666668
    %v2048 = vmul.f32 %v2000, 0.041666668
    %v2049 = vmul.f32 %v2002, 0.041666668
    %v2050 = vmul.f32 %v2004, 0.041666668
    %v2051 = vmul.f32 %v2006, 0.041666668
    %v2052 = vmul.f32 %v2008, 0.041666668
    %v2053 = vmul.f32 %v2010, 0.041666668
    %v2054 = vmul.f32 %v2012, 0.041666668
    %v2055 = vmul.f32 %v2014, 0.041666668
    %v2056 = vmul.f32 %v2016, 0.041666668
    %v2057 = vmul.f32 %v2018, 0.041666668
    %v2058 = vmul.f32 %v2020, 0.041666668
    %v2059 = vmul.f32 %v2022, 0.041666668
    %v2060 = vmul.f32 %v2024, 0.041666668
    %v2061 = vmul.f32 %v2026, 0.041666668
    %v2062 = vmul.f32 %v2028, 0.041666668
    %v2063 = vmul.f32 %v2030, 0.041666668
    %v2064 = vmul.f32 %v2032, 0.041666668
    %v2065 = vmul.f32 %v1905, %v1905
    %v2066 = vmul.f32 %v1906, %v1906
    %v2067 = vmul.f32 %v1907, %v1907
    %v2068 = vmul.f32 %v1908, %v1908
    %v2069 = vmul.f32 %v1909, %v1909
    %v2070 = vmul.f32 %v1910, %v1910
    %v2071 = vmul.f32 %v1911, %v1911
    %v2072 = vmul.f32 %v1912, %v1912
    %v2073 = vmul.f32 %v1913, %v1913
    %v2074 = vmul.f32 %v1914, %v1914
    %v2075 = vmul.f32 %v1915, %v1915
    %v2076 = vmul.f32 %v1916, %v1916
    %v2077 = vmul.f32 %v1917, %v1917
    %v2078 = vmul.f32 %v1918, %v1918
    %v2079 = vmul.f32 %v1919, %v1919
    %v2080 = vmul.f32 %v1920, %v1920
    %v2081 = vmul.f32 %v1921, %v1921
    %v2082 = vmul.f32 %v1922, %v1922
    %v2083 = vmul.f32 %v1923, %v1923
    %v2084 = vmul.f32 %v1924, %v1924
    %v2085 = vmul.f32 %v1925, %v1925
    %v2086 = vmul.f32 %v1926, %v1926
    %v2087 = vmul.f32 %v1927, %v1927
    %v2088 = vmul.f32 %v1928, %v1928
    %v2089 = vmul.f32 %v1929, %v1929
    %v2090 = vmul.f32 %v1930, %v1930
    %v2091 = vmul.f32 %v1931, %v1931
    %v2092 = vmul.f32 %v1932, %v1932
    %v2093 = vmul.f32 %v1933, %v1933
    %v2094 = vmul.f32 %v1934, %v1934
    %v2095 = vmul.f32 %v1935, %v1935
    %v2096 = vmul.f32 %v1936, %v1936
    %v2097 = vsub.f32 %v2033, %v2065
    %v2098 = vsub.f32 %v2034, %v2066
    %v2099 = vsub.f32 %v2035, %v2067
    %v2100 = vsub.f32 %v2036, %v2068
    %v2101 = vsub.f32 %v2037, %v2069
    %v2102 = vsub.f32 %v2038, %v2070
    %v2103 = vsub.f32 %v2039, %v2071
    %v2104 = vsub.f32 %v2040, %v2072
    %v2105 = vsub.f32 %v2041, %v2073
    %v2106 = vsub.f32 %v2042, %v2074
    %v2107 = vsub.f32 %v2043, %v2075
    %v2108 = vsub.f32 %v2044, %v2076
    %v2109 = vsub.f32 %v2045, %v2077
    %v2110 = vsub.f32 %v2046, %v2078
    %v2111 = vsub.f32 %v2047, %v2079
    %v2112 = vsub.f32 %v2048, %v2080
    %v2113 = vsub.f32 %v2049, %v2081
    %v2114 = vsub.f32 %v2050, %v2082
    %v2115 = vsub.f32 %v2051, %v2083
    %v2116 = vsub.f32 %v2052, %v2084
    %v2117 = vsub.f32 %v2053, %v2085
    %v2118 = vsub.f32 %v2054, %v2086
    %v2119 = vsub.f32 %v2055, %v2087
    %v2120 = vsub.f32 %v2056, %v2088
    %v2121 = vsub.f32 %v2057, %v2089
    %v2122 = vsub.f32 %v2058, %v2090
    %v2123 = vsub.f32 %v2059, %v2091
    %v2124 = vsub.f32 %v2060, %v2092
    %v2125 = vsub.f32 %v2061, %v2093
    %v2126 = vsub.f32 %v2062, %v2094
    %v2127 = vsub.f32 %v2063, %v2095
    %v2128 = vsub.f32 %v2064, %v2096
    %v2129 = vmax.f32 %v2097, 0.0
    %v2130 = vmax.f32 %v2098, 0.0
    %v2131 = vmax.f32 %v2099, 0.0
    %v2132 = vmax.f32 %v2100, 0.0
    %v2133 = vmax.f32 %v2101, 0.0
    %v2134 = vmax.f32 %v2102, 0.0
    %v2135 = vmax.f32 %v2103, 0.0
    %v2136 = vmax.f32 %v2104, 0.0
    %v2137 = vmax.f32 %v2105, 0.0
    %v2138 = vmax.f32 %v2106, 0.0
    %v2139 = vmax.f32 %v2107, 0.0
    %v2140 = vmax.f32 %v2108, 0.0
    %v2141 = vmax.f32 %v2109, 0.0
    %v2142 = vmax.f32 %v2110, 0.0
    %v2143 = vmax.f32 %v2111, 0.0
    %v2144 = vmax.f32 %v2112, 0.0
    %v2145 = vmax.f32 %v2113, 0.0
    %v2146 = vmax.f32 %v2114, 0.0
    %v2147 = vmax.f32 %v2115, 0.0
    %v2148 = vmax.f32 %v2116, 0.0
    %v2149 = vmax.f32 %v2117, 0.0
    %v2150 = vmax.f32 %v2118, 0.0
    %v2151 = vmax.f32 %v2119, 0.0
    %v2152 = vmax.f32 %v2120, 0.0
    %v2153 = vmax.f32 %v2121, 0.0
    %v2154 = vmax.f32 %v2122, 0.0
    %v2155 = vmax.f32 %v2123, 0.0
    %v2156 = vmax.f32 %v2124, 0.0
    %v2157 = vmax.f32 %v2125, 0.0
    %v2158 = vmax.f32 %v2126, 0.0
    %v2159 = vmax.f32 %v2127, 0.0
    %v2160 = vmax.f32 %v2128, 0.0
    %v2161 = vsub.f32 %v1809, %v1905
    %v2162 = vsub.f32 %v1810, %v1906
    %v2163 = vsub.f32 %v1811, %v1907
    %v2164 = vsub.f32 %v1812, %v1908
    %v2165 = vsub.f32 %v1813, %v1909
    %v2166 = vsub.f32 %v1814, %v1910
    %v2167 = vsub.f32 %v1815, %v1911
    %v2168 = vsub.f32 %v1816, %v1912
    %v2169 = vsub.f32 %v1817, %v1913
    %v2170 = vsub.f32 %v1818, %v1914
    %v2171 = vsub.f32 %v1819, %v1915
    %v2172 = vsub.f32 %v1820, %v1916
    %v2173 = vsub.f32 %v1821, %v1917
    %v2174 = vsub.f32 %v1822, %v1918
    %v2175 = vsub.f32 %v1823, %v1919
    %v2176 = vsub.f32 %v1824, %v1920
    %v2177 = vsub.f32 %v1825, %v1921
    %v2178 = vsub.f32 %v1826, %v1922
    %v2179 = vsub.f32 %v1827, %v1923
    %v2180 = vsub.f32 %v1828, %v1924
    %v2181 = vsub.f32 %v1829, %v1925
    %v2182 = vsub.f32 %v1830, %v1926
    %v2183 = vsub.f32 %v1831, %v1927
    %v2184 = vsub.f32 %v1832, %v1928
    %v2185 = vsub.f32 %v1833, %v1929
    %v2186 = vsub.f32 %v1834, %v1930
    %v2187 = vsub.f32 %v1835, %v1931
    %v2188 = vsub.f32 %v1836, %v1932
    %v2189 = vsub.f32 %v1837, %v1933
    %v2190 = vsub.f32 %v1838, %v1934
    %v2191 = vsub.f32 %v1839, %v1935
    %v2192 = vsub.f32 %v1840, %v1936
    %v2193 = vadd.f32 %v2129, 1e-05
    %v2194 = vadd.f32 %v2130, 1e-05
    %v2195 = vadd.f32 %v2131, 1e-05
    %v2196 = vadd.f32 %v2132, 1e-05
    %v2197 = vadd.f32 %v2133, 1e-05
    %v2198 = vadd.f32 %v2134, 1e-05
    %v2199 = vadd.f32 %v2135, 1e-05
    %v2200 = vadd.f32 %v2136, 1e-05
    %v2201 = vadd.f32 %v2137, 1e-05
    %v2202 = vadd.f32 %v2138, 1e-05
    %v2203 = vadd.f32 %v2139, 1e-05
    %v2204 = vadd.f32 %v2140, 1e-05
    %v2205 = vadd.f32 %v2141, 1e-05
    %v2206 = vadd.f32 %v2142, 1e-05
    %v2207 = vadd.f32 %v2143, 1e-05
    %v2208 = vadd.f32 %v2144, 1e-05
    %v2209 = vadd.f32 %v2145, 1e-05
    %v2210 = vadd.f32 %v2146, 1e-05
    %v2211 = vadd.f32 %v2147, 1e-05
    %v2212 = vadd.f32 %v2148, 1e-05
    %v2213 = vadd.f32 %v2149, 1e-05
    %v2214 = vadd.f32 %v2150, 1e-05
    %v2215 = vadd.f32 %v2151, 1e-05
    %v2216 = vadd.f32 %v2152, 1e-05
    %v2217 = vadd.f32 %v2153, 1e-05
    %v2218 = vadd.f32 %v2154, 1e-05
    %v2219 = vadd.f32 %v2155, 1e-05
    %v2220 = vadd.f32 %v2156, 1e-05
    %v2221 = vadd.f32 %v2157, 1e-05
    %v2222 = vadd.f32 %v2158, 1e-05
    %v2223 = vadd.f32 %v2159, 1e-05
    %v2224 = vadd.f32 %v2160, 1e-05
    %v2225 = vrsqrt.pop %v2193
    %v2226 = vrsqrt.pop %v2194
    %v2227 = vrsqrt.pop %v2195
    %v2228 = vrsqrt.pop %v2196
    %v2229 = vrsqrt.pop %v2197
    %v2230 = vrsqrt.pop %v2198
    %v2231 = vrsqrt.pop %v2199
    %v2232 = vrsqrt.pop %v2200
    %v2233 = vrsqrt.pop %v2201
    %v2234 = vrsqrt.pop %v2202
    %v2235 = vrsqrt.pop %v2203
    %v2236 = vrsqrt.pop %v2204
    %v2237 = vrsqrt.pop %v2205
    %v2238 = vrsqrt.pop %v2206
    %v2239 = vrsqrt.pop %v2207
    %v2240 = vrsqrt.pop %v2208
    %v2241 = vrsqrt.pop %v2209
    %v2242 = vrsqrt.pop %v2210
    %v2243 = vrsqrt.pop %v2211
    %v2244 = vrsqrt.pop %v2212
    %v2245 = vrsqrt.pop %v2213
    %v2246 = vrsqrt.pop %v2214
    %v2247 = vrsqrt.pop %v2215
    %v2248 = vrsqrt.pop %v2216
    %v2249 = vrsqrt.pop %v2217
    %v2250 = vrsqrt.pop %v2218
    %v2251 = vrsqrt.pop %v2219
    %v2252 = vrsqrt.pop %v2220
    %v2253 = vrsqrt.pop %v2221
    %v2254 = vrsqrt.pop %v2222
    %v2255 = vrsqrt.pop %v2223
    %v2256 = vrsqrt.pop %v2224
    %v2257 = vmul.f32 %v2161, %v2225
    %v2258 = vmul.f32 %v2162, %v2226
    %v2259 = vmul.f32 %v2163, %v2227
    %v2260 = vmul.f32 %v2164, %v2228
    %v2261 = vmul.f32 %v2165, %v2229
    %v2262 = vmul.f32 %v2166, %v2230
    %v2263 = vmul.f32 %v2167, %v2231
    %v2264 = vmul.f32 %v2168, %v2232
    %v2265 = vmul.f32 %v2169, %v2233
    %v2266 = vmul.f32 %v2170, %v2234
    %v2267 = vmul.f32 %v2171, %v2235
    %v2268 = vmul.f32 %v2172, %v2236
    %v2269 = vmul.f32 %v2173, %v2237
    %v2270 = vmul.f32 %v2174, %v2238
    %v2271 = vmul.f32 %v2175, %v2239
    %v2272 = vmul.f32 %v2176, %v2240
    %v2273 = vmul.f32 %v2177, %v2241
    %v2274 = vmul.f32 %v2178, %v2242
    %v2275 = vmul.f32 %v2179, %v2243
    %v2276 = vmul.f32 %v2180, %v2244
    %v2277 = vmul.f32 %v2181, %v2245
    %v2278 = vmul.f32 %v2182, %v2246
    %v2279 = vmul.f32 %v2183, %v2247
    %v2280 = vmul.f32 %v2184, %v2248
    %v2281 = vmul.f32 %v2185, %v2249
    %v2282 = vmul.f32 %v2186, %v2250
    %v2283 = vmul.f32 %v2187, %v2251
    %v2284 = vmul.f32 %v2188, %v2252
    %v2285 = vmul.f32 %v2189, %v2253
    %v2286 = vmul.f32 %v2190, %v2254
    %v2287 = vmul.f32 %v2191, %v2255
    %v2288 = vmul.f32 %v2192, %v2256
    %v2289 = vlaneseq
    %v2290 = vshrl.u32 %v2289, 7
    %v2291 = vsub.s32 1, %v2290
    %v2292 = vrot.slane %v1563, %v2291
    %v2293 = vmul.f32 %v2257, %v2292
    %v2294 = vmul.f32 %v2258, %v2292
    %v2295 = vmul.f32 %v2259, %v2292
    %v2296 = vmul.f32 %v2260, %v2292
    %v2297 = vmul.f32 %v2261, %v2292
    %v2298 = vmul.f32 %v2262, %v2292
    %v2299 = vmul.f32 %v2263, %v2292
    %v2300 = vmul.f32 %v2264, %v2292
    %v2301 = vmul.f32 %v2265, %v2292
    %v2302 = vmul.f32 %v2266, %v2292
    %v2303 = vmul.f32 %v2267, %v2292
    %v2304 = vmul.f32 %v2268, %v2292
    %v2305 = vmul.f32 %v2269, %v2292
    %v2306 = vmul.f32 %v2270, %v2292
    %v2307 = vmul.f32 %v2271, %v2292
    %v2308 = vmul.f32 %v2272, %v2292
    %v2309 = vmul.f32 %v2273, %v2292
    %v2310 = vmul.f32 %v2274, %v2292
    %v2311 = vmul.f32 %v2275, %v2292
    %v2312 = vmul.f32 %v2276, %v2292
    %v2313 = vmul.f32 %v2277, %v2292
    %v2314 = vmul.f32 %v2278, %v2292
    %v2315 = vmul.f32 %v2279, %v2292
    %v2316 = vmul.f32 %v2280, %v2292
    %v2317 = vmul.f32 %v2281, %v2292
    %v2318 = vmul.f32 %v2282, %v2292
    %v2319 = vmul.f32 %v2283, %v2292
    %v2320 = vmul.f32 %v2284, %v2292
    %v2321 = vmul.f32 %v2285, %v2292
    %v2322 = vmul.f32 %v2286, %v2292
    %v2323 = vmul.f32 %v2287, %v2292
    %v2324 = vmul.f32 %v2288, %v2292
    %v2325 = vlaneseq
    %v2326 = vshrl.u32 %v2325, 7
    %v2327 = vsub.s32 2, %v2326
    %v2328 = vrot.slane %v1563, %v2327
    %v2329 = vadd.f32 %v2293, %v2328
    %v2330 = vadd.f32 %v2294, %v2328
    %v2331 = vadd.f32 %v2295, %v2328
    %v2332 = vadd.f32 %v2296, %v2328
    %v2333 = vadd.f32 %v2297, %v2328
    %v2334 = vadd.f32 %v2298, %v2328
    %v2335 = vadd.f32 %v2299, %v2328
    %v2336 = vadd.f32 %v2300, %v2328
    %v2337 = vadd.f32 %v2301, %v2328
    %v2338 = vadd.f32 %v2302, %v2328
    %v2339 = vadd.f32 %v2303, %v2328
    %v2340 = vadd.f32 %v2304, %v2328
    %v2341 = vadd.f32 %v2305, %v2328
    %v2342 = vadd.f32 %v2306, %v2328
    %v2343 = vadd.f32 %v2307, %v2328
    %v2344 = vadd.f32 %v2308, %v2328
    %v2345 = vadd.f32 %v2309, %v2328
    %v2346 = vadd.f32 %v2310, %v2328
    %v2347 = vadd.f32 %v2311, %v2328
    %v2348 = vadd.f32 %v2312, %v2328
    %v2349 = vadd.f32 %v2313, %v2328
    %v2350 = vadd.f32 %v2314, %v2328
    %v2351 = vadd.f32 %v2315, %v2328
    %v2352 = vadd.f32 %v2316, %v2328
    %v2353 = vadd.f32 %v2317, %v2328
    %v2354 = vadd.f32 %v2318, %v2328
    %v2355 = vadd.f32 %v2319, %v2328
    %v2356 = vadd.f32 %v2320, %v2328
    %v2357 = vadd.f32 %v2321, %v2328
    %v2358 = vadd.f32 %v2322, %v2328
    %v2359 = vadd.f32 %v2323, %v2328
    %v2360 = vadd.f32 %v2324, %v2328
    %2361 = vst [vmem:[#allocation5] sm:$0xff] %v2329
    %2362 = vst [vmem:[#allocation5 + $0x8] sm:$0xff] %v2330
    %2363 = vst [vmem:[#allocation5 + $0x10] sm:$0xff] %v2331
    %2364 = vst [vmem:[#allocation5 + $0x18] sm:$0xff] %v2332
    %2365 = vst [vmem:[#allocation5 + $0x20] sm:$0xff] %v2333
    %2366 = vst [vmem:[#allocation5 + $0x28] sm:$0xff] %v2334
    %2367 = vst [vmem:[#allocation5 + $0x30] sm:$0xff] %v2335
    %2368 = vst [vmem:[#allocation5 + $0x38] sm:$0xff] %v2336
    %2369 = vst [vmem:[#allocation5 + $0x40] sm:$0xff] %v2337
    %2370 = vst [vmem:[#allocation5 + $0x48] sm:$0xff] %v2338
    %2371 = vst [vmem:[#allocation5 + $0x50] sm:$0xff] %v2339
    %2372 = vst [vmem:[#allocation5 + $0x58] sm:$0xff] %v2340
    %2373 = vst [vmem:[#allocation5 + $0x60] sm:$0xff] %v2341
    %2374 = vst [vmem:[#allocation5 + $0x68] sm:$0xff] %v2342
    %2375 = vst [vmem:[#allocation5 + $0x70] sm:$0xff] %v2343
    %2376 = vst [vmem:[#allocation5 + $0x78] sm:$0xff] %v2344
    %2377 = vst [vmem:[#allocation5 + $0x80] sm:$0xff] %v2345
    %2378 = vst [vmem:[#allocation5 + $0x88] sm:$0xff] %v2346
    %2379 = vst [vmem:[#allocation5 + $0x90] sm:$0xff] %v2347
    %2380 = vst [vmem:[#allocation5 + $0x98] sm:$0xff] %v2348
    %2381 = vst [vmem:[#allocation5 + $0xa0] sm:$0xff] %v2349
    %2382 = vst [vmem:[#allocation5 + $0xa8] sm:$0xff] %v2350
    %2383 = vst [vmem:[#allocation5 + $0xb0] sm:$0xff] %v2351
    %2384 = vst [vmem:[#allocation5 + $0xb8] sm:$0xff] %v2352
    %2385 = vst [vmem:[#allocation5 + $0xc0] sm:$0xff] %v2353
    %2386 = vst [vmem:[#allocation5 + $0xc8] sm:$0xff] %v2354
    %2387 = vst [vmem:[#allocation5 + $0xd0] sm:$0xff] %v2355
    %2388 = vst [vmem:[#allocation5 + $0xd8] sm:$0xff] %v2356
    %2389 = vst [vmem:[#allocation5 + $0xe0] sm:$0xff] %v2357
    %2390 = vst [vmem:[#allocation5 + $0xe8] sm:$0xff] %v2358
    %2391 = vst [vmem:[#allocation5 + $0xf0] sm:$0xff] %v2359
    %2392 = vst [vmem:[#allocation5 + $0xf8] sm:$0xff] %v2360
    // Predicated region
    $region42: #{tpu_custom_call.1} parent=1 // pred_check
      _
    $region43: #{tpu_custom_call.1} parent=1 // pred_check_branch
      %2394 = sbr.rel (0) target = $region45
    $region44: #{tpu_custom_call.1} parent=1 // pred_region
      %s2396 = ssub.s32 4096, 4096
      %2397 = vsyncadd [#allocation4], %s2396
      %s2398 = sshll.u32 [#allocation5], 4
      %s2399 = int_to_ptr.vmem [resolvable:$true] %s2398
      %2404 = dma.vmem_to_hbm [thread:$0]  %s2399, 4096, %s9, [#allocation4], 128, 128, 8
    $region45: #{tpu_custom_call.1} parent=1 // pred_fallthru
      _
    // Predicated region
    $region46: #{tpu_custom_call.1} parent=1 // pred_check
      _
    $region47: #{tpu_custom_call.1} parent=1 // pred_check_branch
      %2406 = sbr.rel (0) target = $region49
    $region48: #{tpu_custom_call.1} parent=1 // pred_region
      %2407 = dma.done [#allocation4], 4096
    $region49: #{tpu_custom_call.1} parent=1 // pred_fallthru
      _
    %2408 = vsyncpa [#allocation3], 1
    %2409 = vsyncpa [#allocation4], 1

// kernel: tpu_custom_call.1
$region0: #{tpu_custom_call.1}
  #allocation0 [shape = 'u32[]', space=smem, size = 0x4, offset = 0x4, fixed_abs, tag = 'smem constant byte address 0x4 - core index']
  #allocation1 [shape = 'u32[144,128]{1,0:T(1,128)}', space=vmem, size = 0x12000, scoped, tag = 'internal scratch']
  %s0 = inlined_call_operand.vmem [shape: f32[256,32], index: 0, kind: input, shape index: {}]
  %s1 = inlined_call_operand.vmem [shape: f32[32,256], index: 1, kind: input, shape index: {}]
  %s2 = inlined_call_operand.vmem [shape: f32[1,256], index: 2, kind: input, shape index: {}]
  %s3 = inlined_call_operand.vmem [shape: f32[128,128], index: 3, kind: input, shape index: {}]
  %s4 = inlined_call_operand.vmem [shape: f32[3,128], index: 4, kind: input, shape index: {}]
  %s5 = inlined_call_operand.vmem [shape: f32[128,128], index: 5, kind: input, shape index: {}]
  %s6 = inlined_call_operand.vmem [shape: f32[1,128], index: 6, kind: input, shape index: {}]
  %s7 = inlined_call_operand.hbm [shape: f32[128,128], index: 7, kind: input, shape index: {}]
  %s8 = inlined_call_operand.vmem [shape: f32[3,128], index: 8, kind: input, shape index: {}]
  %s9 = inlined_call_operand.hbm [shape: f32[256,128], index: 9, kind: output, shape index: {}]
  %s10 = sld [smem:[#allocation0]]
  $region50: #{tpu_custom_call.1} parent=0
    _
  %s12 = ssub.s32 1, %s10
  %s13 = scalar_select 0, %s12, %s10
  $region1: #{tpu_custom_call.1} parent=0
    #allocation2 [shape = 'u8[65536]{0}', space=vmem, size = 0x10000, scoped, tag = 'input window, operand 7, single buffered']
    #allocation3 [shape = 's32[1]{0}', space=sflag, size = 0x4, scoped, tag = 'scoped memory for tpu_custom_call.1']
    #allocation4 [shape = 's32[1]{0}', space=sflag, size = 0x4, scoped, tag = 'scoped memory for tpu_custom_call.1']
    #allocation5 [shape = 'u8[131072]{0}', space=vmem, size = 0x20000, scoped, tag = 'output window, operand 0, single buffered']
    %14 = vsyncpa [#allocation3], 0
    %15 = vsyncpa [#allocation4], 0
    // Predicated region
    $region2: #{tpu_custom_call.1} parent=1 // pred_check
      _
    $region3: #{tpu_custom_call.1} parent=1 // pred_check_branch
      %17 = sbr.rel (0) target = $region5
    $region4: #{tpu_custom_call.1} parent=1 // pred_region
      _
    $region5: #{tpu_custom_call.1} parent=1 // pred_fallthru
      _
    // Predicated region
    $region6: #{tpu_custom_call.1} parent=1 // pred_check
      _
    $region7: #{tpu_custom_call.1} parent=1 // pred_check_branch
      %19 = sbr.rel (0) target = $region9
    $region8: #{tpu_custom_call.1} parent=1 // pred_region
      _
    $region9: #{tpu_custom_call.1} parent=1 // pred_fallthru
      _
    // Predicated region
    $region10: #{tpu_custom_call.1} parent=1 // pred_check
      _
    $region11: #{tpu_custom_call.1} parent=1 // pred_check_branch
      %21 = sbr.rel (0) target = $region13
    $region12: #{tpu_custom_call.1} parent=1 // pred_region
      _
    $region13: #{tpu_custom_call.1} parent=1 // pred_fallthru
      _
    // Predicated region
    $region14: #{tpu_custom_call.1} parent=1 // pred_check
      _
    $region15: #{tpu_custom_call.1} parent=1 // pred_check_branch
      %23 = sbr.rel (0) target = $region17
    $region16: #{tpu_custom_call.1} parent=1 // pred_region
      _
    $region17: #{tpu_custom_call.1} parent=1 // pred_fallthru
      _
    // Predicated region
    $region18: #{tpu_custom_call.1} parent=1 // pred_check
      _
    $region19: #{tpu_custom_call.1} parent=1 // pred_check_branch
      %25 = sbr.rel (0) target = $region21
    $region20: #{tpu_custom_call.1} parent=1 // pred_region
      _
    $region21: #{tpu_custom_call.1} parent=1 // pred_fallthru
      _
    // Predicated region
    $region22: #{tpu_custom_call.1} parent=1 // pred_check
      _
    $region23: #{tpu_custom_call.1} parent=1 // pred_check_branch
      %27 = sbr.rel (0) target = $region25
    $region24: #{tpu_custom_call.1} parent=1 // pred_region
      _
    $region25: #{tpu_custom_call.1} parent=1 // pred_fallthru
      _
    // Predicated region
    $region26: #{tpu_custom_call.1} parent=1 // pred_check
      _
    $region27: #{tpu_custom_call.1} parent=1 // pred_check_branch
      %29 = sbr.rel (0) target = $region29
    $region28: #{tpu_custom_call.1} parent=1 // pred_region
      _
    $region29: #{tpu_custom_call.1} parent=1 // pred_fallthru
      _
    // Predicated region
    $region30: #{tpu_custom_call.1} parent=1 // pred_check
      _
    $region31: #{tpu_custom_call.1} parent=1 // pred_check_branch
      %31 = sbr.rel (0) target = $region33
    $region32: #{tpu_custom_call.1} parent=1 // pred_region
      %s33 = ssub.s32 2048, 2048
      %34 = vsyncadd [#allocation3], %s33
      %s35 = sshll.u32 [#allocation2], 4
      %s36 = int_to_ptr.vmem [resolvable:$true] %s35
      %41 = dma.hbm_to_vmem [thread:$0]  %s7, 2048, %s36, [#allocation3], 128, 128, 8
    $region33: #{tpu_custom_call.1} parent=1 // pred_fallthru
      _
    // Predicated region
    $region34: #{tpu_custom_call.1} parent=1 // pred_check
      _
    $region35: #{tpu_custom_call.1} parent=1 // pred_check_branch
      %43 = sbr.rel (0) target = $region37
    $region36: #{tpu_custom_call.1} parent=1 // pred_region
      _
    $region37: #{tpu_custom_call.1} parent=1 // pred_fallthru
      _
    // Predicated region
    $region38: #{tpu_custom_call.1} parent=1 // pred_check
      _
    $region39: #{tpu_custom_call.1} parent=1 // pred_check_branch
      %45 = sbr.rel (0) target = $region41
    $region40: #{tpu_custom_call.1} parent=1 // pred_region
      %46 = dma.done [#allocation3], 2048
    $region41: #{tpu_custom_call.1} parent=1 // pred_fallthru
      _
    %v47 = vld [vmem:[%s0] sm:$0xff]
    %v48 = vld [vmem:[%s0 + $0x8] sm:$0xff]
    %v49 = vld [vmem:[%s0 + $0x10] sm:$0xff]
    %v50 = vld [vmem:[%s0 + $0x18] sm:$0xff]
    %v51 = vld [vmem:[%s0 + $0x20] sm:$0xff]
    %v52 = vld [vmem:[%s0 + $0x28] sm:$0xff]
    %v53 = vld [vmem:[%s0 + $0x30] sm:$0xff]
    %v54 = vld [vmem:[%s0 + $0x38] sm:$0xff]
    %v55 = vld [vmem:[%s0 + $0x40] sm:$0xff]
    %v56 = vld [vmem:[%s0 + $0x48] sm:$0xff]
    %v57 = vld [vmem:[%s0 + $0x50] sm:$0xff]
    %v58 = vld [vmem:[%s0 + $0x58] sm:$0xff]
    %v59 = vld [vmem:[%s0 + $0x60] sm:$0xff]
    %v60 = vld [vmem:[%s0 + $0x68] sm:$0xff]
    %v61 = vld [vmem:[%s0 + $0x70] sm:$0xff]
    %v62 = vld [vmem:[%s0 + $0x78] sm:$0xff]
    %v63 = vld [vmem:[%s0 + $0x80] sm:$0xff]
    %v64 = vld [vmem:[%s0 + $0x88] sm:$0xff]
    %v65 = vld [vmem:[%s0 + $0x90] sm:$0xff]
    %v66 = vld [vmem:[%s0 + $0x98] sm:$0xff]
    %v67 = vld [vmem:[%s0 + $0xa0] sm:$0xff]
    %v68 = vld [vmem:[%s0 + $0xa8] sm:$0xff]
    %v69 = vld [vmem:[%s0 + $0xb0] sm:$0xff]
    %v70 = vld [vmem:[%s0 + $0xb8] sm:$0xff]
    %v71 = vld [vmem:[%s0 + $0xc0] sm:$0xff]
    %v72 = vld [vmem:[%s0 + $0xc8] sm:$0xff]
    %v73 = vld [vmem:[%s0 + $0xd0] sm:$0xff]
    %v74 = vld [vmem:[%s0 + $0xd8] sm:$0xff]
    %v75 = vld [vmem:[%s0 + $0xe0] sm:$0xff]
    %v76 = vld [vmem:[%s0 + $0xe8] sm:$0xff]
    %v77 = vld [vmem:[%s0 + $0xf0] sm:$0xff]
    %v78 = vld [vmem:[%s0 + $0xf8] sm:$0xff]
    %v79 = vld [vmem:[%s1] sm:$0xff]
    %v80 = vld [vmem:[%s1 + $0x8] sm:$0xff]
    %v81 = vld [vmem:[%s1 + $0x10] sm:$0xff]
    %v82 = vld [vmem:[%s1 + $0x18] sm:$0xff]
    %v83 = vld [vmem:[%s1 + $0x20] sm:$0xff]
    %v84 = vld [vmem:[%s1 + $0x28] sm:$0xff]
    %v85 = vld [vmem:[%s1 + $0x30] sm:$0xff]
    %v86 = vld [vmem:[%s1 + $0x38] sm:$0xff]
    %v87 = vld [vmem:[%s2] sm:$0x3]
    %v89 = vlaneseq
    %v90 = vshrl.u32 %v89, 7
    %v91 = vsub.s32 0, %v90
    %v92 = vrot.slane %v87, %v91
    %v93 = vlaneseq
    %v94 = vshrl.u32 %v93, 7
    %v95 = vsub.s32 1, %v94
    %v96 = vrot.slane %v87, %v95
    %vm99 = vcmask 261120
    %v101 = vsel %vm99, %v47, 0
    %v104 = vsel %vm99, %v48, 0
    %v107 = vsel %vm99, %v49, 0
    %v110 = vsel %vm99, %v50, 0
    %v113 = vsel %vm99, %v51, 0
    %v116 = vsel %vm99, %v52, 0
    %v119 = vsel %vm99, %v53, 0
    %v122 = vsel %vm99, %v54, 0
    %v125 = vsel %vm99, %v55, 0
    %v128 = vsel %vm99, %v56, 0
    %v131 = vsel %vm99, %v57, 0
    %v134 = vsel %vm99, %v58, 0
    %v137 = vsel %vm99, %v59, 0
    %v140 = vsel %vm99, %v60, 0
    %v143 = vsel %vm99, %v61, 0
    %v146 = vsel %vm99, %v62, 0
    %v149 = vsel %vm99, %v63, 0
    %v152 = vsel %vm99, %v64, 0
    %v155 = vsel %vm99, %v65, 0
    %v158 = vsel %vm99, %v66, 0
    %v161 = vsel %vm99, %v67, 0
    %v164 = vsel %vm99, %v68, 0
    %v167 = vsel %vm99, %v69, 0
    %v170 = vsel %vm99, %v70, 0
    %v173 = vsel %vm99, %v71, 0
    %v176 = vsel %vm99, %v72, 0
    %v179 = vsel %vm99, %v73, 0
    %v182 = vsel %vm99, %v74, 0
    %v185 = vsel %vm99, %v75, 0
    %v188 = vsel %vm99, %v76, 0
    %v191 = vsel %vm99, %v77, 0
    %v194 = vsel %vm99, %v78, 0
    %196 = vmatprep.subr.mxu0 %v80
    %197 = vmatpush1.msra.mxu0 %v79
    %198 = vmatprep.subr.mxu0 %v82
    %199 = vmatpush1.msra.mxu0 %v81
    %200 = vmatprep.subr.mxu0 %v84
    %201 = vmatpush1.msra.mxu0 %v83
    %202 = vmatprep.subr.mxu0 %v86
    %203 = vmatpush1.msra.mxu0 %v85
    %204 = vmatprep.subr.mxu0 0.0
    %205 = vmatpush1.msra.mxu0 0.0
    %206 = vmatprep.subr.mxu0 0.0
    %207 = vmatpush1.msra.mxu0 0.0
    %208 = vmatprep.subr.mxu0 0.0
    %209 = vmatpush1.msra.mxu0 0.0
    %210 = vmatprep.subr.mxu0 0.0
    %211 = vmatpush1.msra.mxu0 0.0
    %212 = vmatprep.subr.mxu0 0.0
    %213 = vmatpush1.msra.mxu0 0.0
    %214 = vmatprep.subr.mxu0 0.0
    %215 = vmatpush1.msra.mxu0 0.0
    %216 = vmatprep.subr.mxu0 0.0
    %217 = vmatpush1.msra.mxu0 0.0
    %218 = vmatprep.subr.mxu0 0.0
    %219 = vmatpush1.msra.mxu0 0.0
    %220 = vmatprep.subr.mxu0 0.0
    %221 = vmatpush1.msra.mxu0 0.0
    %222 = vmatprep.subr.mxu0 0.0
    %223 = vmatpush1.msra.mxu0 0.0
    %224 = vmatprep.subr.mxu0 0.0
    %225 = vmatpush1.msra.mxu0 0.0
    %226 = vmatprep.subr.mxu0 0.0
    %227 = vmatpush1.msra.mxu0 0.0
    %228 = vmatprep.subr.mxu0 0.0
    %229 = vmatpush1.msra.mxu0 0.0
    %230 = vmatprep.subr.mxu0 0.0
    %231 = vmatpush1.msra.mxu0 0.0
    %232 = vmatprep.subr.mxu0 0.0
    %233 = vmatpush1.msra.mxu0 0.0
    %234 = vmatprep.subr.mxu0 0.0
    %235 = vmatpush1.msra.mxu0 0.0
    %236 = vmatprep.subr.mxu0 0.0
    %237 = vmatpush1.msra.mxu0 0.0
    %238 = vmatprep.subr.mxu0 0.0
    %239 = vmatpush1.msra.mxu0 0.0
    %240 = vmatprep.subr.mxu0 0.0
    %241 = vmatpush1.msra.mxu0 0.0
    %242 = vmatprep.subr.mxu0 0.0
    %243 = vmatpush1.msra.mxu0 0.0
    %244 = vmatprep.subr.mxu0 0.0
    %245 = vmatpush1.msra.mxu0 0.0
    %246 = vmatprep.subr.mxu0 0.0
    %247 = vmatpush1.msra.mxu0 0.0
    %248 = vmatprep.subr.mxu0 0.0
    %249 = vmatpush1.msra.mxu0 0.0
    %250 = vmatprep.subr.mxu0 0.0
    %251 = vmatpush1.msra.mxu0 0.0
    %252 = vmatprep.subr.mxu0 0.0
    %253 = vmatpush1.msra.mxu0 0.0
    %254 = vmatprep.subr.mxu0 0.0
    %255 = vmatpush1.msra.mxu0 0.0
    %256 = vmatprep.subr.mxu0 0.0
    %257 = vmatpush1.msra.mxu0 0.0
    %258 = vmatprep.subr.mxu0 0.0
    %259 = vmatpush1.msra.mxu0 0.0
    %260 = vmatprep.mubr.f32.mxu0 0.0
    %261 = vmatmul.mubr.f32.gmra.mrb[0].mxu0 %v101
    %v262 = vpop.f32.mrb[0].mxu0
    %v263 = vadd.f32 %v92, %v262
    %v264 = vpop.f32.mrb[0].mxu0
    %v265 = vadd.f32 %v96, %v264
    %266 = vmatprep.mubr.f32.mxu0 0.0
    %267 = vmatmul.mubr.f32.gmra.mrb[0].mxu0 %v104
    %v268 = vpop.f32.mrb[0].mxu0
    %v269 = vadd.f32 %v92, %v268
    %v270 = vpop.f32.mrb[0].mxu0
    %v271 = vadd.f32 %v96, %v270
    %272 = vmatprep.mubr.f32.mxu0 0.0
    %273 = vmatmul.mubr.f32.gmra.mrb[0].mxu0 %v107
    %v274 = vpop.f32.mrb[0].mxu0
    %v275 = vadd.f32 %v92, %v274
    %v276 = vpop.f32.mrb[0].mxu0
    %v277 = vadd.f32 %v96, %v276
    %278 = vmatprep.mubr.f32.mxu0 0.0
    %279 = vmatmul.mubr.f32.gmra.mrb[0].mxu0 %v110
    %v280 = vpop.f32.mrb[0].mxu0
    %v281 = vadd.f32 %v92, %v280
    %v282 = vpop.f32.mrb[0].mxu0
    %v283 = vadd.f32 %v96, %v282
    %284 = vmatprep.mubr.f32.mxu0 0.0
    %285 = vmatmul.mubr.f32.gmra.mrb[0].mxu0 %v113
    %v286 = vpop.f32.mrb[0].mxu0
    %v287 = vadd.f32 %v92, %v286
    %v288 = vpop.f32.mrb[0].mxu0
    %v289 = vadd.f32 %v96, %v288
    %290 = vmatprep.mubr.f32.mxu0 0.0
    %291 = vmatmul.mubr.f32.gmra.mrb[0].mxu0 %v116
    %v292 = vpop.f32.mrb[0].mxu0
    %v293 = vadd.f32 %v92, %v292
    %v294 = vpop.f32.mrb[0].mxu0
    %v295 = vadd.f32 %v96, %v294
    %296 = vmatprep.mubr.f32.mxu0 0.0
    %297 = vmatmul.mubr.f32.gmra.mrb[0].mxu0 %v119
    %v298 = vpop.f32.mrb[0].mxu0
    %v299 = vadd.f32 %v92, %v298
    %v300 = vpop.f32.mrb[0].mxu0
    %v301 = vadd.f32 %v96, %v300
    %302 = vmatprep.mubr.f32.mxu0 0.0
    %303 = vmatmul.mubr.f32.gmra.mrb[0].mxu0 %v122
    %v304 = vpop.f32.mrb[0].mxu0
    %v305 = vadd.f32 %v92, %v304
    %v306 = vpop.f32.mrb[0].mxu0
    %v307 = vadd.f32 %v96, %v306
    %308 = vmatprep.mubr.f32.mxu0 0.0
    %309 = vmatmul.mubr.f32.gmra.mrb[0].mxu0 %v125
    %v310 = vpop.f32.mrb[0].mxu0
    %v311 = vadd.f32 %v92, %v310
    %v312 = vpop.f32.mrb[0].mxu0
    %v313 = vadd.f32 %v96, %v312
    %314 = vmatprep.mubr.f32.mxu0 0.0
    %315 = vmatmul.mubr.f32.gmra.mrb[0].mxu0 %v128
    %v316 = vpop.f32.mrb[0].mxu0
    %v317 = vadd.f32 %v92, %v316
    %v318 = vpop.f32.mrb[0].mxu0
    %v319 = vadd.f32 %v96, %v318
    %320 = vmatprep.mubr.f32.mxu0 0.0
    %321 = vmatmul.mubr.f32.gmra.mrb[0].mxu0 %v131
    %v322 = vpop.f32.mrb[0].mxu0
    %v323 = vadd.f32 %v92, %v322
    %v324 = vpop.f32.mrb[0].mxu0
    %v325 = vadd.f32 %v96, %v324
    %326 = vmatprep.mubr.f32.mxu0 0.0
    %327 = vmatmul.mubr.f32.gmra.mrb[0].mxu0 %v134
    %v328 = vpop.f32.mrb[0].mxu0
    %v329 = vadd.f32 %v92, %v328
    %v330 = vpop.f32.mrb[0].mxu0
    %v331 = vadd.f32 %v96, %v330
    %332 = vmatprep.mubr.f32.mxu0 0.0
    %333 = vmatmul.mubr.f32.gmra.mrb[0].mxu0 %v137
    %v334 = vpop.f32.mrb[0].mxu0
    %v335 = vadd.f32 %v92, %v334
    %v336 = vpop.f32.mrb[0].mxu0
    %v337 = vadd.f32 %v96, %v336
    %338 = vmatprep.mubr.f32.mxu0 0.0
    %339 = vmatmul.mubr.f32.gmra.mrb[0].mxu0 %v140
    %v340 = vpop.f32.mrb[0].mxu0
    %v341 = vadd.f32 %v92, %v340
    %v342 = vpop.f32.mrb[0].mxu0
    %v343 = vadd.f32 %v96, %v342
    %344 = vmatprep.mubr.f32.mxu0 0.0
    %345 = vmatmul.mubr.f32.gmra.mrb[0].mxu0 %v143
    %v346 = vpop.f32.mrb[0].mxu0
    %v347 = vadd.f32 %v92, %v346
    %v348 = vpop.f32.mrb[0].mxu0
    %v349 = vadd.f32 %v96, %v348
    %350 = vmatprep.mubr.f32.mxu0 0.0
    %351 = vmatmul.mubr.f32.gmra.mrb[0].mxu0 %v146
    %v352 = vpop.f32.mrb[0].mxu0
    %v353 = vadd.f32 %v92, %v352
    %v354 = vpop.f32.mrb[0].mxu0
    %v355 = vadd.f32 %v96, %v354
    %356 = vmatprep.mubr.f32.mxu0 0.0
    %357 = vmatmul.mubr.f32.gmra.mrb[0].mxu0 %v149
    %v358 = vpop.f32.mrb[0].mxu0
    %v359 = vadd.f32 %v92, %v358
    %v360 = vpop.f32.mrb[0].mxu0
    %v361 = vadd.f32 %v96, %v360
    %362 = vmatprep.mubr.f32.mxu0 0.0
    %363 = vmatmul.mubr.f32.gmra.mrb[0].mxu0 %v152
    %v364 = vpop.f32.mrb[0].mxu0
    %v365 = vadd.f32 %v92, %v364
    %v366 = vpop.f32.mrb[0].mxu0
    %v367 = vadd.f32 %v96, %v366
    %368 = vmatprep.mubr.f32.mxu0 0.0
    %369 = vmatmul.mubr.f32.gmra.mrb[0].mxu0 %v155
    %v370 = vpop.f32.mrb[0].mxu0
    %v371 = vadd.f32 %v92, %v370
    %v372 = vpop.f32.mrb[0].mxu0
    %v373 = vadd.f32 %v96, %v372
    %374 = vmatprep.mubr.f32.mxu0 0.0
    %375 = vmatmul.mubr.f32.gmra.mrb[0].mxu0 %v158
    %v376 = vpop.f32.mrb[0].mxu0
    %v377 = vadd.f32 %v92, %v376
    %v378 = vpop.f32.mrb[0].mxu0
    %v379 = vadd.f32 %v96, %v378
    %380 = vmatprep.mubr.f32.mxu0 0.0
    %381 = vmatmul.mubr.f32.gmra.mrb[0].mxu0 %v161
    %v382 = vpop.f32.mrb[0].mxu0
    %v383 = vadd.f32 %v92, %v382
    %v384 = vpop.f32.mrb[0].mxu0
    %v385 = vadd.f32 %v96, %v384
    %386 = vmatprep.mubr.f32.mxu0 0.0
    %387 = vmatmul.mubr.f32.gmra.mrb[0].mxu0 %v164
    %v388 = vpop.f32.mrb[0].mxu0
    %v389 = vadd.f32 %v92, %v388
    %v390 = vpop.f32.mrb[0].mxu0
    %v391 = vadd.f32 %v96, %v390
    %392 = vmatprep.mubr.f32.mxu0 0.0
    %393 = vmatmul.mubr.f32.gmra.mrb[0].mxu0 %v167
    %v394 = vpop.f32.mrb[0].mxu0
    %v395 = vadd.f32 %v92, %v394
    %v396 = vpop.f32.mrb[0].mxu0
    %v397 = vadd.f32 %v96, %v396
    %398 = vmatprep.mubr.f32.mxu0 0.0
    %399 = vmatmul.mubr.f32.gmra.mrb[0].mxu0 %v170
    %v400 = vpop.f32.mrb[0].mxu0
    %v401 = vadd.f32 %v92, %v400
    %v402 = vpop.f32.mrb[0].mxu0
    %v403 = vadd.f32 %v96, %v402
    %404 = vmatprep.mubr.f32.mxu0 0.0
    %405 = vmatmul.mubr.f32.gmra.mrb[0].mxu0 %v173
    %v406 = vpop.f32.mrb[0].mxu0
    %v407 = vadd.f32 %v92, %v406
    %v408 = vpop.f32.mrb[0].mxu0
    %v409 = vadd.f32 %v96, %v408
    %410 = vmatprep.mubr.f32.mxu0 0.0
    %411 = vmatmul.mubr.f32.gmra.mrb[0].mxu0 %v176
    %v412 = vpop.f32.mrb[0].mxu0
    %v413 = vadd.f32 %v92, %v412
    %v414 = vpop.f32.mrb[0].mxu0
    %v415 = vadd.f32 %v96, %v414
    %416 = vmatprep.mubr.f32.mxu0 0.0
    %417 = vmatmul.mubr.f32.gmra.mrb[0].mxu0 %v179
    %v418 = vpop.f32.mrb[0].mxu0
    %v419 = vadd.f32 %v92, %v418
    %v420 = vpop.f32.mrb[0].mxu0
    %v421 = vadd.f32 %v96, %v420
    %422 = vmatprep.mubr.f32.mxu0 0.0
    %423 = vmatmul.mubr.f32.gmra.mrb[0].mxu0 %v182
    %v424 = vpop.f32.mrb[0].mxu0
    %v425 = vadd.f32 %v92, %v424
    %v426 = vpop.f32.mrb[0].mxu0
    %v427 = vadd.f32 %v96, %v426
    %428 = vmatprep.mubr.f32.mxu0 0.0
    %429 = vmatmul.mubr.f32.gmra.mrb[0].mxu0 %v185
    %v430 = vpop.f32.mrb[0].mxu0
    %v431 = vadd.f32 %v92, %v430
    %v432 = vpop.f32.mrb[0].mxu0
    %v433 = vadd.f32 %v96, %v432
    %434 = vmatprep.mubr.f32.mxu0 0.0
    %435 = vmatmul.mubr.f32.gmra.mrb[0].mxu0 %v188
    %v436 = vpop.f32.mrb[0].mxu0
    %v437 = vadd.f32 %v92, %v436
    %v438 = vpop.f32.mrb[0].mxu0
    %v439 = vadd.f32 %v96, %v438
    %440 = vmatprep.mubr.f32.mxu0 0.0
    %441 = vmatmul.mubr.f32.gmra.mrb[0].mxu0 %v191
    %v442 = vpop.f32.mrb[0].mxu0
    %v443 = vadd.f32 %v92, %v442
    %v444 = vpop.f32.mrb[0].mxu0
    %v445 = vadd.f32 %v96, %v444
    %446 = vmatprep.mubr.f32.mxu0 0.0
    %447 = vmatmul.mubr.f32.gmra.mrb[0].mxu0 %v194
    %v448 = vpop.f32.mrb[0].mxu0
    %v449 = vadd.f32 %v92, %v448
    %v450 = vpop.f32.mrb[0].mxu0
    %v451 = vadd.f32 %v96, %v450
    %452 = vdwg.mxu0
    %v453 = vmax.f32 %v263, 0.0
    %v454 = vmax.f32 %v269, 0.0
    %v455 = vmax.f32 %v275, 0.0
    %v456 = vmax.f32 %v281, 0.0
    %v457 = vmax.f32 %v287, 0.0
    %v458 = vmax.f32 %v293, 0.0
    %v459 = vmax.f32 %v299, 0.0
    %v460 = vmax.f32 %v305, 0.0
    %v461 = vmax.f32 %v311, 0.0
    %v462 = vmax.f32 %v317, 0.0
    %v463 = vmax.f32 %v323, 0.0
    %v464 = vmax.f32 %v329, 0.0
    %v465 = vmax.f32 %v335, 0.0
    %v466 = vmax.f32 %v341, 0.0
    %v467 = vmax.f32 %v347, 0.0
    %v468 = vmax.f32 %v353, 0.0
    %v469 = vmax.f32 %v359, 0.0
    %v470 = vmax.f32 %v365, 0.0
    %v471 = vmax.f32 %v371, 0.0
    %v472 = vmax.f32 %v377, 0.0
    %v473 = vmax.f32 %v383, 0.0
    %v474 = vmax.f32 %v389, 0.0
    %v475 = vmax.f32 %v395, 0.0
    %v476 = vmax.f32 %v401, 0.0
    %v477 = vmax.f32 %v407, 0.0
    %v478 = vmax.f32 %v413, 0.0
    %v479 = vmax.f32 %v419, 0.0
    %v480 = vmax.f32 %v425, 0.0
    %v481 = vmax.f32 %v431, 0.0
    %v482 = vmax.f32 %v437, 0.0
    %v483 = vmax.f32 %v443, 0.0
    %v484 = vmax.f32 %v449, 0.0
    %v485 = vld [vmem:[%s4] sm:$0x7]
    %v486 = vld [vmem:[%s3] sm:$0xff]
    %v487 = vld [vmem:[%s3 + $0x8] sm:$0xff]
    %v488 = vld [vmem:[%s3 + $0x10] sm:$0xff]
    %v489 = vld [vmem:[%s3 + $0x18] sm:$0xff]
    %v490 = vld [vmem:[%s3 + $0x20] sm:$0xff]
    %v491 = vld [vmem:[%s3 + $0x28] sm:$0xff]
    %v492 = vld [vmem:[%s3 + $0x30] sm:$0xff]
    %v493 = vld [vmem:[%s3 + $0x38] sm:$0xff]
    %v494 = vld [vmem:[%s3 + $0x40] sm:$0xff]
    %v495 = vld [vmem:[%s3 + $0x48] sm:$0xff]
    %v496 = vld [vmem:[%s3 + $0x50] sm:$0xff]
    %v497 = vld [vmem:[%s3 + $0x58] sm:$0xff]
    %v498 = vld [vmem:[%s3 + $0x60] sm:$0xff]
    %v499 = vld [vmem:[%s3 + $0x68] sm:$0xff]
    %v500 = vld [vmem:[%s3 + $0x70] sm:$0xff]
    %v501 = vld [vmem:[%s3 + $0x78] sm:$0xff]
    %v502 = vlaneseq
    %v503 = vshrl.u32 %v502, 7
    %v504 = vsub.s32 0, %v503
    %v505 = vrot.slane %v485, %v504
    %506 = vmatprep.subr.mxu0 0.0
    %507 = vmatpush1.msra.mxu0 %v486
    %508 = vmatprep.subr.mxu0 0.0
    %509 = vmatpush1.msra.mxu0 %v487
    %510 = vmatprep.subr.mxu0 0.0
    %511 = vmatpush1.msra.mxu0 %v488
    %512 = vmatprep.subr.mxu0 0.0
    %513 = vmatpush1.msra.mxu0 %v489
    %514 = vmatprep.subr.mxu0 0.0
    %515 = vmatpush1.msra.mxu0 %v490
    %516 = vmatprep.subr.mxu0 0.0
    %517 = vmatpush1.msra.mxu0 %v491
    %518 = vmatprep.subr.mxu0 0.0
    %519 = vmatpush1.msra.mxu0 %v492
    %520 = vmatprep.subr.mxu0 0.0
    %521 = vmatpush1.msra.mxu0 %v493
    %522 = vmatprep.subr.mxu0 0.0
    %523 = vmatpush1.msra.mxu0 %v494
    %524 = vmatprep.subr.mxu0 0.0
    %525 = vmatpush1.msra.mxu0 %v495
    %526 = vmatprep.subr.mxu0 0.0
    %527 = vmatpush1.msra.mxu0 %v496
    %528 = vmatprep.subr.mxu0 0.0
    %529 = vmatpush1.msra.mxu0 %v497
    %530 = vmatprep.subr.mxu0 0.0
    %531 = vmatpush1.msra.mxu0 %v498
    %532 = vmatprep.subr.mxu0 0.0
    %533 = vmatpush1.msra.mxu0 %v499
    %534 = vmatprep.subr.mxu0 0.0
    %535 = vmatpush1.msra.mxu0 %v500
    %536 = vmatprep.subr.mxu0 0.0
    %537 = vmatpush1.msra.mxu0 %v501
    %538 = vmatprep.subr.mxu0 0.0
    %539 = vmatpush1.msra.mxu0 0.0
    %540 = vmatprep.subr.mxu0 0.0
    %541 = vmatpush1.msra.mxu0 0.0
    %542 = vmatprep.subr.mxu0 0.0
    %543 = vmatpush1.msra.mxu0 0.0
    %544 = vmatprep.subr.mxu0 0.0
    %545 = vmatpush1.msra.mxu0 0.0
    %546 = vmatprep.subr.mxu0 0.0
    %547 = vmatpush1.msra.mxu0 0.0
    %548 = vmatprep.subr.mxu0 0.0
    %549 = vmatpush1.msra.mxu0 0.0
    %550 = vmatprep.subr.mxu0 0.0
    %551 = vmatpush1.msra.mxu0 0.0
    %552 = vmatprep.subr.mxu0 0.0
    %553 = vmatpush1.msra.mxu0 0.0
    %554 = vmatprep.subr.mxu0 0.0
    %555 = vmatpush1.msra.mxu0 0.0
    %556 = vmatprep.subr.mxu0 0.0
    %557 = vmatpush1.msra.mxu0 0.0
    %558 = vmatprep.subr.mxu0 0.0
    %559 = vmatpush1.msra.mxu0 0.0
    %560 = vmatprep.subr.mxu0 0.0
    %561 = vmatpush1.msra.mxu0 0.0
    %562 = vmatprep.subr.mxu0 0.0
    %563 = vmatpush1.msra.mxu0 0.0
    %564 = vmatprep.subr.mxu0 0.0
    %565 = vmatpush1.msra.mxu0 0.0
    %566 = vmatprep.subr.mxu0 0.0
    %567 = vmatpush1.msra.mxu0 0.0
    %568 = vmatprep.subr.mxu0 0.0
    %569 = vmatpush1.msra.mxu0 0.0
    %570 = vmatprep.mubr.f32.mxu0 0.0
    %571 = vmatmul.mubr.f32.gmra.mrb[0].mxu0 %v453
    %v572 = vpop.f32.mrb[0].mxu0
    %v573 = vadd.f32 %v505, %v572
    %v574 = vpop.f32.mrb[0].mxu0
    %575 = vmatprep.mubr.f32.mxu0 0.0
    %576 = vmatmul.mubr.f32.gmra.mrb[0].mxu0 %v454
    %v577 = vpop.f32.mrb[0].mxu0
    %v578 = vadd.f32 %v505, %v577
    %v579 = vpop.f32.mrb[0].mxu0
    %580 = vmatprep.mubr.f32.mxu0 0.0
    %581 = vmatmul.mubr.f32.gmra.mrb[0].mxu0 %v455
    %v582 = vpop.f32.mrb[0].mxu0
    %v583 = vadd.f32 %v505, %v582
    %v584 = vpop.f32.mrb[0].mxu0
    %585 = vmatprep.mubr.f32.mxu0 0.0
    %586 = vmatmul.mubr.f32.gmra.mrb[0].mxu0 %v456
    %v587 = vpop.f32.mrb[0].mxu0
    %v588 = vadd.f32 %v505, %v587
    %v589 = vpop.f32.mrb[0].mxu0
    %590 = vmatprep.mubr.f32.mxu0 0.0
    %591 = vmatmul.mubr.f32.gmra.mrb[0].mxu0 %v457
    %v592 = vpop.f32.mrb[0].mxu0
    %v593 = vadd.f32 %v505, %v592
    %v594 = vpop.f32.mrb[0].mxu0
    %595 = vmatprep.mubr.f32.mxu0 0.0
    %596 = vmatmul.mubr.f32.gmra.mrb[0].mxu0 %v458
    %v597 = vpop.f32.mrb[0].mxu0
    %v598 = vadd.f32 %v505, %v597
    %v599 = vpop.f32.mrb[0].mxu0
    %600 = vmatprep.mubr.f32.mxu0 0.0
    %601 = vmatmul.mubr.f32.gmra.mrb[0].mxu0 %v459
    %v602 = vpop.f32.mrb[0].mxu0
    %v603 = vadd.f32 %v505, %v602
    %v604 = vpop.f32.mrb[0].mxu0
    %605 = vmatprep.mubr.f32.mxu0 0.0
    %606 = vmatmul.mubr.f32.gmra.mrb[0].mxu0 %v460
    %v607 = vpop.f32.mrb[0].mxu0
    %v608 = vadd.f32 %v505, %v607
    %v609 = vpop.f32.mrb[0].mxu0
    %610 = vmatprep.mubr.f32.mxu0 0.0
    %611 = vmatmul.mubr.f32.gmra.mrb[0].mxu0 %v461
    %v612 = vpop.f32.mrb[0].mxu0
    %v613 = vadd.f32 %v505, %v612
    %v614 = vpop.f32.mrb[0].mxu0
    %615 = vmatprep.mubr.f32.mxu0 0.0
    %616 = vmatmul.mubr.f32.gmra.mrb[0].mxu0 %v462
    %v617 = vpop.f32.mrb[0].mxu0
    %v618 = vadd.f32 %v505, %v617
    %v619 = vpop.f32.mrb[0].mxu0
    %620 = vmatprep.mubr.f32.mxu0 0.0
    %621 = vmatmul.mubr.f32.gmra.mrb[0].mxu0 %v463
    %v622 = vpop.f32.mrb[0].mxu0
    %v623 = vadd.f32 %v505, %v622
    %v624 = vpop.f32.mrb[0].mxu0
    %625 = vmatprep.mubr.f32.mxu0 0.0
    %626 = vmatmul.mubr.f32.gmra.mrb[0].mxu0 %v464
    %v627 = vpop.f32.mrb[0].mxu0
    %v628 = vadd.f32 %v505, %v627
    %v629 = vpop.f32.mrb[0].mxu0
    %630 = vmatprep.mubr.f32.mxu0 0.0
    %631 = vmatmul.mubr.f32.gmra.mrb[0].mxu0 %v465
    %v632 = vpop.f32.mrb[0].mxu0
    %v633 = vadd.f32 %v505, %v632
    %v634 = vpop.f32.mrb[0].mxu0
    %635 = vmatprep.mubr.f32.mxu0 0.0
    %636 = vmatmul.mubr.f32.gmra.mrb[0].mxu0 %v466
    %v637 = vpop.f32.mrb[0].mxu0
    %v638 = vadd.f32 %v505, %v637
    %v639 = vpop.f32.mrb[0].mxu0
    %640 = vmatprep.mubr.f32.mxu0 0.0
    %641 = vmatmul.mubr.f32.gmra.mrb[0].mxu0 %v467
    %v642 = vpop.f32.mrb[0].mxu0
    %v643 = vadd.f32 %v505, %v642
    %v644 = vpop.f32.mrb[0].mxu0
    %645 = vmatprep.mubr.f32.mxu0 0.0
    %646 = vmatmul.mubr.f32.gmra.mrb[0].mxu0 %v468
    %v647 = vpop.f32.mrb[0].mxu0
    %v648 = vadd.f32 %v505, %v647
    %v649 = vpop.f32.mrb[0].mxu0
    %650 = vmatprep.mubr.f32.mxu0 0.0
    %651 = vmatmul.mubr.f32.gmra.mrb[0].mxu0 %v469
    %v652 = vpop.f32.mrb[0].mxu0
    %v653 = vadd.f32 %v505, %v652
    %v654 = vpop.f32.mrb[0].mxu0
    %655 = vmatprep.mubr.f32.mxu0 0.0
    %656 = vmatmul.mubr.f32.gmra.mrb[0].mxu0 %v470
    %v657 = vpop.f32.mrb[0].mxu0
    %v658 = vadd.f32 %v505, %v657
    %v659 = vpop.f32.mrb[0].mxu0
    %660 = vmatprep.mubr.f32.mxu0 0.0
    %661 = vmatmul.mubr.f32.gmra.mrb[0].mxu0 %v471
    %v662 = vpop.f32.mrb[0].mxu0
    %v663 = vadd.f32 %v505, %v662
    %v664 = vpop.f32.mrb[0].mxu0
    %665 = vmatprep.mubr.f32.mxu0 0.0
    %666 = vmatmul.mubr.f32.gmra.mrb[0].mxu0 %v472
    %v667 = vpop.f32.mrb[0].mxu0
    %v668 = vadd.f32 %v505, %v667
    %v669 = vpop.f32.mrb[0].mxu0
    %670 = vmatprep.mubr.f32.mxu0 0.0
    %671 = vmatmul.mubr.f32.gmra.mrb[0].mxu0 %v473
    %v672 = vpop.f32.mrb[0].mxu0
    %v673 = vadd.f32 %v505, %v672
    %v674 = vpop.f32.mrb[0].mxu0
    %675 = vmatprep.mubr.f32.mxu0 0.0
    %676 = vmatmul.mubr.f32.gmra.mrb[0].mxu0 %v474
    %v677 = vpop.f32.mrb[0].mxu0
    %v678 = vadd.f32 %v505, %v677
    %v679 = vpop.f32.mrb[0].mxu0
    %680 = vmatprep.mubr.f32.mxu0 0.0
    %681 = vmatmul.mubr.f32.gmra.mrb[0].mxu0 %v475
    %v682 = vpop.f32.mrb[0].mxu0
    %v683 = vadd.f32 %v505, %v682
    %v684 = vpop.f32.mrb[0].mxu0
    %685 = vmatprep.mubr.f32.mxu0 0.0
    %686 = vmatmul.mubr.f32.gmra.mrb[0].mxu0 %v476
    %v687 = vpop.f32.mrb[0].mxu0
    %v688 = vadd.f32 %v505, %v687
    %v689 = vpop.f32.mrb[0].mxu0
    %690 = vmatprep.mubr.f32.mxu0 0.0
    %691 = vmatmul.mubr.f32.gmra.mrb[0].mxu0 %v477
    %v692 = vpop.f32.mrb[0].mxu0
    %v693 = vadd.f32 %v505, %v692
    %v694 = vpop.f32.mrb[0].mxu0
    %695 = vmatprep.mubr.f32.mxu0 0.0
    %696 = vmatmul.mubr.f32.gmra.mrb[0].mxu0 %v478
    %v697 = vpop.f32.mrb[0].mxu0
    %v698 = vadd.f32 %v505, %v697
    %v699 = vpop.f32.mrb[0].mxu0
    %700 = vmatprep.mubr.f32.mxu0 0.0
    %701 = vmatmul.mubr.f32.gmra.mrb[0].mxu0 %v479
    %v702 = vpop.f32.mrb[0].mxu0
    %v703 = vadd.f32 %v505, %v702
    %v704 = vpop.f32.mrb[0].mxu0
    %705 = vmatprep.mubr.f32.mxu0 0.0
    %706 = vmatmul.mubr.f32.gmra.mrb[0].mxu0 %v480
    %v707 = vpop.f32.mrb[0].mxu0
    %v708 = vadd.f32 %v505, %v707
    %v709 = vpop.f32.mrb[0].mxu0
    %710 = vmatprep.mubr.f32.mxu0 0.0
    %711 = vmatmul.mubr.f32.gmra.mrb[0].mxu0 %v481
    %v712 = vpop.f32.mrb[0].mxu0
    %v713 = vadd.f32 %v505, %v712
    %v714 = vpop.f32.mrb[0].mxu0
    %715 = vmatprep.mubr.f32.mxu0 0.0
    %716 = vmatmul.mubr.f32.gmra.mrb[0].mxu0 %v482
    %v717 = vpop.f32.mrb[0].mxu0
    %v718 = vadd.f32 %v505, %v717
    %v719 = vpop.f32.mrb[0].mxu0
    %720 = vmatprep.mubr.f32.mxu0 0.0
    %721 = vmatmul.mubr.f32.gmra.mrb[0].mxu0 %v483
    %v722 = vpop.f32.mrb[0].mxu0
    %v723 = vadd.f32 %v505, %v722
    %v724 = vpop.f32.mrb[0].mxu0
    %725 = vmatprep.mubr.f32.mxu0 0.0
    %726 = vmatmul.mubr.f32.gmra.mrb[0].mxu0 %v484
    %v727 = vpop.f32.mrb[0].mxu0
    %v728 = vadd.f32 %v505, %v727
    %v729 = vpop.f32.mrb[0].mxu0
    %730 = vdwg.mxu0
    %v731 = vadd.f32 %v573, %v265
    %v732 = vadd.f32 %v578, %v271
    %v733 = vadd.f32 %v583, %v277
    %v734 = vadd.f32 %v588, %v283
    %v735 = vadd.f32 %v593, %v289
    %v736 = vadd.f32 %v598, %v295
    %v737 = vadd.f32 %v603, %v301
    %v738 = vadd.f32 %v608, %v307
    %v739 = vadd.f32 %v613, %v313
    %v740 = vadd.f32 %v618, %v319
    %v741 = vadd.f32 %v623, %v325
    %v742 = vadd.f32 %v628, %v331
    %v743 = vadd.f32 %v633, %v337
    %v744 = vadd.f32 %v638, %v343
    %v745 = vadd.f32 %v643, %v349
    %v746 = vadd.f32 %v648, %v355
    %v747 = vadd.f32 %v653, %v361
    %v748 = vadd.f32 %v658, %v367
    %v749 = vadd.f32 %v663, %v373
    %v750 = vadd.f32 %v668, %v379
    %v751 = vadd.f32 %v673, %v385
    %v752 = vadd.f32 %v678, %v391
    %v753 = vadd.f32 %v683, %v397
    %v754 = vadd.f32 %v688, %v403
    %v755 = vadd.f32 %v693, %v409
    %v756 = vadd.f32 %v698, %v415
    %v757 = vadd.f32 %v703, %v421
    %v758 = vadd.f32 %v708, %v427
    %v759 = vadd.f32 %v713, %v433
    %v760 = vadd.f32 %v718, %v439
    %v761 = vadd.f32 %v723, %v445
    %v762 = vadd.f32 %v728, %v451
    %763 = vadd.xlane.f32.xlu0 %v731
    %v764 = vpop.xlane.xlu0 %763
    %765 = vadd.xlane.f32.xlu0 %v732
    %v766 = vpop.xlane.xlu0 %765
    %767 = vadd.xlane.f32.xlu0 %v733
    %v768 = vpop.xlane.xlu0 %767
    %769 = vadd.xlane.f32.xlu0 %v734
    %v770 = vpop.xlane.xlu0 %769
    %771 = vadd.xlane.f32.xlu0 %v735
    %v772 = vpop.xlane.xlu0 %771
    %773 = vadd.xlane.f32.xlu0 %v736
    %v774 = vpop.xlane.xlu0 %773
    %775 = vadd.xlane.f32.xlu0 %v737
    %v776 = vpop.xlane.xlu0 %775
    %777 = vadd.xlane.f32.xlu0 %v738
    %v778 = vpop.xlane.xlu0 %777
    %779 = vadd.xlane.f32.xlu0 %v739
    %v780 = vpop.xlane.xlu0 %779
    %781 = vadd.xlane.f32.xlu0 %v740
    %v782 = vpop.xlane.xlu0 %781
    %783 = vadd.xlane.f32.xlu0 %v741
    %v784 = vpop.xlane.xlu0 %783
    %785 = vadd.xlane.f32.xlu0 %v742
    %v786 = vpop.xlane.xlu0 %785
    %787 = vadd.xlane.f32.xlu0 %v743
    %v788 = vpop.xlane.xlu0 %787
    %789 = vadd.xlane.f32.xlu0 %v744
    %v790 = vpop.xlane.xlu0 %789
    %791 = vadd.xlane.f32.xlu0 %v745
    %v792 = vpop.xlane.xlu0 %791
    %793 = vadd.xlane.f32.xlu0 %v746
    %v794 = vpop.xlane.xlu0 %793
    %795 = vadd.xlane.f32.xlu0 %v747
    %v796 = vpop.xlane.xlu0 %795
    %797 = vadd.xlane.f32.xlu0 %v748
    %v798 = vpop.xlane.xlu0 %797
    %799 = vadd.xlane.f32.xlu0 %v749
    %v800 = vpop.xlane.xlu0 %799
    %801 = vadd.xlane.f32.xlu0 %v750
    %v802 = vpop.xlane.xlu0 %801
    %803 = vadd.xlane.f32.xlu0 %v751
    %v804 = vpop.xlane.xlu0 %803
    %805 = vadd.xlane.f32.xlu0 %v752
    %v806 = vpop.xlane.xlu0 %805
    %807 = vadd.xlane.f32.xlu0 %v753
    %v808 = vpop.xlane.xlu0 %807
    %809 = vadd.xlane.f32.xlu0 %v754
    %v810 = vpop.xlane.xlu0 %809
    %811 = vadd.xlane.f32.xlu0 %v755
    %v812 = vpop.xlane.xlu0 %811
    %813 = vadd.xlane.f32.xlu0 %v756
    %v814 = vpop.xlane.xlu0 %813
    %815 = vadd.xlane.f32.xlu0 %v757
    %v816 = vpop.xlane.xlu0 %815
    %817 = vadd.xlane.f32.xlu0 %v758
    %v818 = vpop.xlane.xlu0 %817
    %819 = vadd.xlane.f32.xlu0 %v759
    %v820 = vpop.xlane.xlu0 %819
    %821 = vadd.xlane.f32.xlu0 %v760
    %v822 = vpop.xlane.xlu0 %821
    %823 = vadd.xlane.f32.xlu0 %v761
    %v824 = vpop.xlane.xlu0 %823
    %825 = vadd.xlane.f32.xlu0 %v762
    %v826 = vpop.xlane.xlu0 %825
    %v827 = vmul.f32 %v764, 0.041666668
    %v828 = vmul.f32 %v766, 0.041666668
    %v829 = vmul.f32 %v768, 0.041666668
    %v830 = vmul.f32 %v770, 0.041666668
    %v831 = vmul.f32 %v772, 0.041666668
    %v832 = vmul.f32 %v774, 0.041666668
    %v833 = vmul.f32 %v776, 0.041666668
    %v834 = vmul.f32 %v778, 0.041666668
    %v835 = vmul.f32 %v780, 0.041666668
    %v836 = vmul.f32 %v782, 0.041666668
    %v837 = vmul.f32 %v784, 0.041666668
    %v838 = vmul.f32 %v786, 0.041666668
    %v839 = vmul.f32 %v788, 0.041666668
    %v840 = vmul.f32 %v790, 0.041666668
    %v841 = vmul.f32 %v792, 0.041666668
    %v842 = vmul.f32 %v794, 0.041666668
    %v843 = vmul.f32 %v796, 0.041666668
    %v844 = vmul.f32 %v798, 0.041666668
    %v845 = vmul.f32 %v800, 0.041666668
    %v846 = vmul.f32 %v802, 0.041666668
    %v847 = vmul.f32 %v804, 0.041666668
    %v848 = vmul.f32 %v806, 0.041666668
    %v849 = vmul.f32 %v808, 0.041666668
    %v850 = vmul.f32 %v810, 0.041666668
    %v851 = vmul.f32 %v812, 0.041666668
    %v852 = vmul.f32 %v814, 0.041666668
    %v853 = vmul.f32 %v816, 0.041666668
    %v854 = vmul.f32 %v818, 0.041666668
    %v855 = vmul.f32 %v820, 0.041666668
    %v856 = vmul.f32 %v822, 0.041666668
    %v857 = vmul.f32 %v824, 0.041666668
    %v858 = vmul.f32 %v826, 0.041666668
    %v859 = vmul.f32 %v731, %v731
    %v860 = vmul.f32 %v732, %v732
    %v861 = vmul.f32 %v733, %v733
    %v862 = vmul.f32 %v734, %v734
    %v863 = vmul.f32 %v735, %v735
    %v864 = vmul.f32 %v736, %v736
    %v865 = vmul.f32 %v737, %v737
    %v866 = vmul.f32 %v738, %v738
    %v867 = vmul.f32 %v739, %v739
    %v868 = vmul.f32 %v740, %v740
    %v869 = vmul.f32 %v741, %v741
    %v870 = vmul.f32 %v742, %v742
    %v871 = vmul.f32 %v743, %v743
    %v872 = vmul.f32 %v744, %v744
    %v873 = vmul.f32 %v745, %v745
    %v874 = vmul.f32 %v746, %v746
    %v875 = vmul.f32 %v747, %v747
    %v876 = vmul.f32 %v748, %v748
    %v877 = vmul.f32 %v749, %v749
    %v878 = vmul.f32 %v750, %v750
    %v879 = vmul.f32 %v751, %v751
    %v880 = vmul.f32 %v752, %v752
    %v881 = vmul.f32 %v753, %v753
    %v882 = vmul.f32 %v754, %v754
    %v883 = vmul.f32 %v755, %v755
    %v884 = vmul.f32 %v756, %v756
    %v885 = vmul.f32 %v757, %v757
    %v886 = vmul.f32 %v758, %v758
    %v887 = vmul.f32 %v759, %v759
    %v888 = vmul.f32 %v760, %v760
    %v889 = vmul.f32 %v761, %v761
    %v890 = vmul.f32 %v762, %v762
    %891 = vadd.xlane.f32.xlu0 %v859
    %v892 = vpop.xlane.xlu0 %891
    %893 = vadd.xlane.f32.xlu0 %v860
    %v894 = vpop.xlane.xlu0 %893
    %895 = vadd.xlane.f32.xlu0 %v861
    %v896 = vpop.xlane.xlu0 %895
    %897 = vadd.xlane.f32.xlu0 %v862
    %v898 = vpop.xlane.xlu0 %897
    %899 = vadd.xlane.f32.xlu0 %v863
    %v900 = vpop.xlane.xlu0 %899
    %901 = vadd.xlane.f32.xlu0 %v864
    %v902 = vpop.xlane.xlu0 %901
    %903 = vadd.xlane.f32.xlu0 %v865
    %v904 = vpop.xlane.xlu0 %903
    %905 = vadd.xlane.f32.xlu0 %v866
    %v906 = vpop.xlane.xlu0 %905
    %907 = vadd.xlane.f32.xlu0 %v867
    %v908 = vpop.xlane.xlu0 %907
    %909 = vadd.xlane.f32.xlu0 %v868
    %v910 = vpop.xlane.xlu0 %909
    %911 = vadd.xlane.f32.xlu0 %v869
    %v912 = vpop.xlane.xlu0 %911
    %913 = vadd.xlane.f32.xlu0 %v870
    %v914 = vpop.xlane.xlu0 %913
    %915 = vadd.xlane.f32.xlu0 %v871
    %v916 = vpop.xlane.xlu0 %915
    %917 = vadd.xlane.f32.xlu0 %v872
    %v918 = vpop.xlane.xlu0 %917
    %919 = vadd.xlane.f32.xlu0 %v873
    %v920 = vpop.xlane.xlu0 %919
    %921 = vadd.xlane.f32.xlu0 %v874
    %v922 = vpop.xlane.xlu0 %921
    %923 = vadd.xlane.f32.xlu0 %v875
    %v924 = vpop.xlane.xlu0 %923
    %925 = vadd.xlane.f32.xlu0 %v876
    %v926 = vpop.xlane.xlu0 %925
    %927 = vadd.xlane.f32.xlu0 %v877
    %v928 = vpop.xlane.xlu0 %927
    %929 = vadd.xlane.f32.xlu0 %v878
    %v930 = vpop.xlane.xlu0 %929
    %931 = vadd.xlane.f32.xlu0 %v879
    %v932 = vpop.xlane.xlu0 %931
    %933 = vadd.xlane.f32.xlu0 %v880
    %v934 = vpop.xlane.xlu0 %933
    %935 = vadd.xlane.f32.xlu0 %v881
    %v936 = vpop.xlane.xlu0 %935
    %937 = vadd.xlane.f32.xlu0 %v882
    %v938 = vpop.xlane.xlu0 %937
    %939 = vadd.xlane.f32.xlu0 %v883
    %v940 = vpop.xlane.xlu0 %939
    %941 = vadd.xlane.f32.xlu0 %v884
    %v942 = vpop.xlane.xlu0 %941
    %943 = vadd.xlane.f32.xlu0 %v885
    %v944 = vpop.xlane.xlu0 %943
    %945 = vadd.xlane.f32.xlu0 %v886
    %v946 = vpop.xlane.xlu0 %945
    %947 = vadd.xlane.f32.xlu0 %v887
    %v948 = vpop.xlane.xlu0 %947
    %949 = vadd.xlane.f32.xlu0 %v888
    %v950 = vpop.xlane.xlu0 %949
    %951 = vadd.xlane.f32.xlu0 %v889
    %v952 = vpop.xlane.xlu0 %951
    %953 = vadd.xlane.f32.xlu0 %v890
    %v954 = vpop.xlane.xlu0 %953
    %v955 = vmul.f32 %v892, 0.041666668
    %v956 = vmul.f32 %v894, 0.041666668
    %v957 = vmul.f32 %v896, 0.041666668
    %v958 = vmul.f32 %v898, 0.041666668
    %v959 = vmul.f32 %v900, 0.041666668
    %v960 = vmul.f32 %v902, 0.041666668
    %v961 = vmul.f32 %v904, 0.041666668
    %v962 = vmul.f32 %v906, 0.041666668
    %v963 = vmul.f32 %v908, 0.041666668
    %v964 = vmul.f32 %v910, 0.041666668
    %v965 = vmul.f32 %v912, 0.041666668
    %v966 = vmul.f32 %v914, 0.041666668
    %v967 = vmul.f32 %v916, 0.041666668
    %v968 = vmul.f32 %v918, 0.041666668
    %v969 = vmul.f32 %v920, 0.041666668
    %v970 = vmul.f32 %v922, 0.041666668
    %v971 = vmul.f32 %v924, 0.041666668
    %v972 = vmul.f32 %v926, 0.041666668
    %v973 = vmul.f32 %v928, 0.041666668
    %v974 = vmul.f32 %v930, 0.041666668
    %v975 = vmul.f32 %v932, 0.041666668
    %v976 = vmul.f32 %v934, 0.041666668
    %v977 = vmul.f32 %v936, 0.041666668
    %v978 = vmul.f32 %v938, 0.041666668
    %v979 = vmul.f32 %v940, 0.041666668
    %v980 = vmul.f32 %v942, 0.041666668
    %v981 = vmul.f32 %v944, 0.041666668
    %v982 = vmul.f32 %v946, 0.041666668
    %v983 = vmul.f32 %v948, 0.041666668
    %v984 = vmul.f32 %v950, 0.041666668
    %v985 = vmul.f32 %v952, 0.041666668
    %v986 = vmul.f32 %v954, 0.041666668
    %v987 = vmul.f32 %v827, %v827
    %v988 = vmul.f32 %v828, %v828
    %v989 = vmul.f32 %v829, %v829
    %v990 = vmul.f32 %v830, %v830
    %v991 = vmul.f32 %v831, %v831
    %v992 = vmul.f32 %v832, %v832
    %v993 = vmul.f32 %v833, %v833
    %v994 = vmul.f32 %v834, %v834
    %v995 = vmul.f32 %v835, %v835
    %v996 = vmul.f32 %v836, %v836
    %v997 = vmul.f32 %v837, %v837
    %v998 = vmul.f32 %v838, %v838
    %v999 = vmul.f32 %v839, %v839
    %v1000 = vmul.f32 %v840, %v840
    %v1001 = vmul.f32 %v841, %v841
    %v1002 = vmul.f32 %v842, %v842
    %v1003 = vmul.f32 %v843, %v843
    %v1004 = vmul.f32 %v844, %v844
    %v1005 = vmul.f32 %v845, %v845
    %v1006 = vmul.f32 %v846, %v846
    %v1007 = vmul.f32 %v847, %v847
    %v1008 = vmul.f32 %v848, %v848
    %v1009 = vmul.f32 %v849, %v849
    %v1010 = vmul.f32 %v850, %v850
    %v1011 = vmul.f32 %v851, %v851
    %v1012 = vmul.f32 %v852, %v852
    %v1013 = vmul.f32 %v853, %v853
    %v1014 = vmul.f32 %v854, %v854
    %v1015 = vmul.f32 %v855, %v855
    %v1016 = vmul.f32 %v856, %v856
    %v1017 = vmul.f32 %v857, %v857
    %v1018 = vmul.f32 %v858, %v858
    %v1019 = vsub.f32 %v955, %v987
    %v1020 = vsub.f32 %v956, %v988
    %v1021 = vsub.f32 %v957, %v989
    %v1022 = vsub.f32 %v958, %v990
    %v1023 = vsub.f32 %v959, %v991
    %v1024 = vsub.f32 %v960, %v992
    %v1025 = vsub.f32 %v961, %v993
    %v1026 = vsub.f32 %v962, %v994
    %v1027 = vsub.f32 %v963, %v995
    %v1028 = vsub.f32 %v964, %v996
    %v1029 = vsub.f32 %v965, %v997
    %v1030 = vsub.f32 %v966, %v998
    %v1031 = vsub.f32 %v967, %v999
    %v1032 = vsub.f32 %v968, %v1000
    %v1033 = vsub.f32 %v969, %v1001
    %v1034 = vsub.f32 %v970, %v1002
    %v1035 = vsub.f32 %v971, %v1003
    %v1036 = vsub.f32 %v972, %v1004
    %v1037 = vsub.f32 %v973, %v1005
    %v1038 = vsub.f32 %v974, %v1006
    %v1039 = vsub.f32 %v975, %v1007
    %v1040 = vsub.f32 %v976, %v1008
    %v1041 = vsub.f32 %v977, %v1009
    %v1042 = vsub.f32 %v978, %v1010
    %v1043 = vsub.f32 %v979, %v1011
    %v1044 = vsub.f32 %v980, %v1012
    %v1045 = vsub.f32 %v981, %v1013
    %v1046 = vsub.f32 %v982, %v1014
    %v1047 = vsub.f32 %v983, %v1015
    %v1048 = vsub.f32 %v984, %v1016
    %v1049 = vsub.f32 %v985, %v1017
    %v1050 = vsub.f32 %v986, %v1018
    %v1051 = vmax.f32 %v1019, 0.0
    %v1052 = vmax.f32 %v1020, 0.0
    %v1053 = vmax.f32 %v1021, 0.0
    %v1054 = vmax.f32 %v1022, 0.0
    %v1055 = vmax.f32 %v1023, 0.0
    %v1056 = vmax.f32 %v1024, 0.0
    %v1057 = vmax.f32 %v1025, 0.0
    %v1058 = vmax.f32 %v1026, 0.0
    %v1059 = vmax.f32 %v1027, 0.0
    %v1060 = vmax.f32 %v1028, 0.0
    %v1061 = vmax.f32 %v1029, 0.0
    %v1062 = vmax.f32 %v1030, 0.0
    %v1063 = vmax.f32 %v1031, 0.0
    %v1064 = vmax.f32 %v1032, 0.0
    %v1065 = vmax.f32 %v1033, 0.0
    %v1066 = vmax.f32 %v1034, 0.0
    %v1067 = vmax.f32 %v1035, 0.0
    %v1068 = vmax.f32 %v1036, 0.0
    %v1069 = vmax.f32 %v1037, 0.0
    %v1070 = vmax.f32 %v1038, 0.0
    %v1071 = vmax.f32 %v1039, 0.0
    %v1072 = vmax.f32 %v1040, 0.0
    %v1073 = vmax.f32 %v1041, 0.0
    %v1074 = vmax.f32 %v1042, 0.0
    %v1075 = vmax.f32 %v1043, 0.0
    %v1076 = vmax.f32 %v1044, 0.0
    %v1077 = vmax.f32 %v1045, 0.0
    %v1078 = vmax.f32 %v1046, 0.0
    %v1079 = vmax.f32 %v1047, 0.0
    %v1080 = vmax.f32 %v1048, 0.0
    %v1081 = vmax.f32 %v1049, 0.0
    %v1082 = vmax.f32 %v1050, 0.0
    %v1083 = vsub.f32 %v731, %v827
    %v1084 = vsub.f32 %v732, %v828
    %v1085 = vsub.f32 %v733, %v829
    %v1086 = vsub.f32 %v734, %v830
    %v1087 = vsub.f32 %v735, %v831
    %v1088 = vsub.f32 %v736, %v832
    %v1089 = vsub.f32 %v737, %v833
    %v1090 = vsub.f32 %v738, %v834
    %v1091 = vsub.f32 %v739, %v835
    %v1092 = vsub.f32 %v740, %v836
    %v1093 = vsub.f32 %v741, %v837
    %v1094 = vsub.f32 %v742, %v838
    %v1095 = vsub.f32 %v743, %v839
    %v1096 = vsub.f32 %v744, %v840
    %v1097 = vsub.f32 %v745, %v841
    %v1098 = vsub.f32 %v746, %v842
    %v1099 = vsub.f32 %v747, %v843
    %v1100 = vsub.f32 %v748, %v844
    %v1101 = vsub.f32 %v749, %v845
    %v1102 = vsub.f32 %v750, %v846
    %v1103 = vsub.f32 %v751, %v847
    %v1104 = vsub.f32 %v752, %v848
    %v1105 = vsub.f32 %v753, %v849
    %v1106 = vsub.f32 %v754, %v850
    %v1107 = vsub.f32 %v755, %v851
    %v1108 = vsub.f32 %v756, %v852
    %v1109 = vsub.f32 %v757, %v853
    %v1110 = vsub.f32 %v758, %v854
    %v1111 = vsub.f32 %v759, %v855
    %v1112 = vsub.f32 %v760, %v856
    %v1113 = vsub.f32 %v761, %v857
    %v1114 = vsub.f32 %v762, %v858
    %v1115 = vadd.f32 %v1051, 1e-05
    %v1116 = vadd.f32 %v1052, 1e-05
    %v1117 = vadd.f32 %v1053, 1e-05
    %v1118 = vadd.f32 %v1054, 1e-05
    %v1119 = vadd.f32 %v1055, 1e-05
    %v1120 = vadd.f32 %v1056, 1e-05
    %v1121 = vadd.f32 %v1057, 1e-05
    %v1122 = vadd.f32 %v1058, 1e-05
    %v1123 = vadd.f32 %v1059, 1e-05
    %v1124 = vadd.f32 %v1060, 1e-05
    %v1125 = vadd.f32 %v1061, 1e-05
    %v1126 = vadd.f32 %v1062, 1e-05
    %v1127 = vadd.f32 %v1063, 1e-05
    %v1128 = vadd.f32 %v1064, 1e-05
    %v1129 = vadd.f32 %v1065, 1e-05
    %v1130 = vadd.f32 %v1066, 1e-05
    %v1131 = vadd.f32 %v1067, 1e-05
    %v1132 = vadd.f32 %v1068, 1e-05
    %v1133 = vadd.f32 %v1069, 1e-05
    %v1134 = vadd.f32 %v1070, 1e-05
    %v1135 = vadd.f32 %v1071, 1e-05
    %v1136 = vadd.f32 %v1072, 1e-05
    %v1137 = vadd.f32 %v1073, 1e-05
    %v1138 = vadd.f32 %v1074, 1e-05
    %v1139 = vadd.f32 %v1075, 1e-05
    %v1140 = vadd.f32 %v1076, 1e-05
    %v1141 = vadd.f32 %v1077, 1e-05
    %v1142 = vadd.f32 %v1078, 1e-05
    %v1143 = vadd.f32 %v1079, 1e-05
    %v1144 = vadd.f32 %v1080, 1e-05
    %v1145 = vadd.f32 %v1081, 1e-05
    %v1146 = vadd.f32 %v1082, 1e-05
    %v1147 = vrsqrt.pop %v1115
    %v1148 = vrsqrt.pop %v1116
    %v1149 = vrsqrt.pop %v1117
    %v1150 = vrsqrt.pop %v1118
    %v1151 = vrsqrt.pop %v1119
    %v1152 = vrsqrt.pop %v1120
    %v1153 = vrsqrt.pop %v1121
    %v1154 = vrsqrt.pop %v1122
    %v1155 = vrsqrt.pop %v1123
    %v1156 = vrsqrt.pop %v1124
    %v1157 = vrsqrt.pop %v1125
    %v1158 = vrsqrt.pop %v1126
    %v1159 = vrsqrt.pop %v1127
    %v1160 = vrsqrt.pop %v1128
    %v1161 = vrsqrt.pop %v1129
    %v1162 = vrsqrt.pop %v1130
    %v1163 = vrsqrt.pop %v1131
    %v1164 = vrsqrt.pop %v1132
    %v1165 = vrsqrt.pop %v1133
    %v1166 = vrsqrt.pop %v1134
    %v1167 = vrsqrt.pop %v1135
    %v1168 = vrsqrt.pop %v1136
    %v1169 = vrsqrt.pop %v1137
    %v1170 = vrsqrt.pop %v1138
    %v1171 = vrsqrt.pop %v1139
    %v1172 = vrsqrt.pop %v1140
    %v1173 = vrsqrt.pop %v1141
    %v1174 = vrsqrt.pop %v1142
    %v1175 = vrsqrt.pop %v1143
    %v1176 = vrsqrt.pop %v1144
    %v1177 = vrsqrt.pop %v1145
    %v1178 = vrsqrt.pop %v1146
    %v1179 = vmul.f32 %v1083, %v1147
    %v1180 = vmul.f32 %v1084, %v1148
    %v1181 = vmul.f32 %v1085, %v1149
    %v1182 = vmul.f32 %v1086, %v1150
    %v1183 = vmul.f32 %v1087, %v1151
    %v1184 = vmul.f32 %v1088, %v1152
    %v1185 = vmul.f32 %v1089, %v1153
    %v1186 = vmul.f32 %v1090, %v1154
    %v1187 = vmul.f32 %v1091, %v1155
    %v1188 = vmul.f32 %v1092, %v1156
    %v1189 = vmul.f32 %v1093, %v1157
    %v1190 = vmul.f32 %v1094, %v1158
    %v1191 = vmul.f32 %v1095, %v1159
    %v1192 = vmul.f32 %v1096, %v1160
    %v1193 = vmul.f32 %v1097, %v1161
    %v1194 = vmul.f32 %v1098, %v1162
    %v1195 = vmul.f32 %v1099, %v1163
    %v1196 = vmul.f32 %v1100, %v1164
    %v1197 = vmul.f32 %v1101, %v1165
    %v1198 = vmul.f32 %v1102, %v1166
    %v1199 = vmul.f32 %v1103, %v1167
    %v1200 = vmul.f32 %v1104, %v1168
    %v1201 = vmul.f32 %v1105, %v1169
    %v1202 = vmul.f32 %v1106, %v1170
    %v1203 = vmul.f32 %v1107, %v1171
    %v1204 = vmul.f32 %v1108, %v1172
    %v1205 = vmul.f32 %v1109, %v1173
    %v1206 = vmul.f32 %v1110, %v1174
    %v1207 = vmul.f32 %v1111, %v1175
    %v1208 = vmul.f32 %v1112, %v1176
    %v1209 = vmul.f32 %v1113, %v1177
    %v1210 = vmul.f32 %v1114, %v1178
    %v1211 = vlaneseq
    %v1212 = vshrl.u32 %v1211, 7
    %v1213 = vsub.s32 1, %v1212
    %v1214 = vrot.slane %v485, %v1213
    %v1215 = vmul.f32 %v1179, %v1214
    %v1216 = vmul.f32 %v1180, %v1214
    %v1217 = vmul.f32 %v1181, %v1214
    %v1218 = vmul.f32 %v1182, %v1214
    %v1219 = vmul.f32 %v1183, %v1214
    %v1220 = vmul.f32 %v1184, %v1214
    %v1221 = vmul.f32 %v1185, %v1214
    %v1222 = vmul.f32 %v1186, %v1214
    %v1223 = vmul.f32 %v1187, %v1214
    %v1224 = vmul.f32 %v1188, %v1214
    %v1225 = vmul.f32 %v1189, %v1214
    %v1226 = vmul.f32 %v1190, %v1214
    %v1227 = vmul.f32 %v1191, %v1214
    %v1228 = vmul.f32 %v1192, %v1214
    %v1229 = vmul.f32 %v1193, %v1214
    %v1230 = vmul.f32 %v1194, %v1214
    %v1231 = vmul.f32 %v1195, %v1214
    %v1232 = vmul.f32 %v1196, %v1214
    %v1233 = vmul.f32 %v1197, %v1214
    %v1234 = vmul.f32 %v1198, %v1214
    %v1235 = vmul.f32 %v1199, %v1214
    %v1236 = vmul.f32 %v1200, %v1214
    %v1237 = vmul.f32 %v1201, %v1214
    %v1238 = vmul.f32 %v1202, %v1214
    %v1239 = vmul.f32 %v1203, %v1214
    %v1240 = vmul.f32 %v1204, %v1214
    %v1241 = vmul.f32 %v1205, %v1214
    %v1242 = vmul.f32 %v1206, %v1214
    %v1243 = vmul.f32 %v1207, %v1214
    %v1244 = vmul.f32 %v1208, %v1214
    %v1245 = vmul.f32 %v1209, %v1214
    %v1246 = vmul.f32 %v1210, %v1214
    %v1247 = vlaneseq
    %v1248 = vshrl.u32 %v1247, 7
    %v1249 = vsub.s32 2, %v1248
    %v1250 = vrot.slane %v485, %v1249
    %v1251 = vadd.f32 %v1215, %v1250
    %v1252 = vadd.f32 %v1216, %v1250
    %v1253 = vadd.f32 %v1217, %v1250
    %v1254 = vadd.f32 %v1218, %v1250
    %v1255 = vadd.f32 %v1219, %v1250
    %v1256 = vadd.f32 %v1220, %v1250
    %v1257 = vadd.f32 %v1221, %v1250
    %v1258 = vadd.f32 %v1222, %v1250
    %v1259 = vadd.f32 %v1223, %v1250
    %v1260 = vadd.f32 %v1224, %v1250
    %v1261 = vadd.f32 %v1225, %v1250
    %v1262 = vadd.f32 %v1226, %v1250
    %v1263 = vadd.f32 %v1227, %v1250
    %v1264 = vadd.f32 %v1228, %v1250
    %v1265 = vadd.f32 %v1229, %v1250
    %v1266 = vadd.f32 %v1230, %v1250
    %v1267 = vadd.f32 %v1231, %v1250
    %v1268 = vadd.f32 %v1232, %v1250
    %v1269 = vadd.f32 %v1233, %v1250
    %v1270 = vadd.f32 %v1234, %v1250
    %v1271 = vadd.f32 %v1235, %v1250
    %v1272 = vadd.f32 %v1236, %v1250
    %v1273 = vadd.f32 %v1237, %v1250
    %v1274 = vadd.f32 %v1238, %v1250
    %v1275 = vadd.f32 %v1239, %v1250
    %v1276 = vadd.f32 %v1240, %v1250
    %v1277 = vadd.f32 %v1241, %v1250
    %v1278 = vadd.f32 %v1242, %v1250
    %v1279 = vadd.f32 %v1243, %v1250
    %v1280 = vadd.f32 %v1244, %v1250
    %v1281 = vadd.f32 %v1245, %v1250
    %v1282 = vadd.f32 %v1246, %v1250
    %v1283 = vld [vmem:[%s5] sm:$0xff]
    %v1284 = vld [vmem:[%s5 + $0x8] sm:$0xff]
    %v1285 = vld [vmem:[%s5 + $0x10] sm:$0xff]
    %v1286 = vld [vmem:[%s5 + $0x18] sm:$0xff]
    %v1287 = vld [vmem:[%s5 + $0x20] sm:$0xff]
    %v1288 = vld [vmem:[%s5 + $0x28] sm:$0xff]
    %v1289 = vld [vmem:[%s5 + $0x30] sm:$0xff]
    %v1290 = vld [vmem:[%s5 + $0x38] sm:$0xff]
    %v1291 = vld [vmem:[%s5 + $0x40] sm:$0xff]
    %v1292 = vld [vmem:[%s5 + $0x48] sm:$0xff]
    %v1293 = vld [vmem:[%s5 + $0x50] sm:$0xff]
    %v1294 = vld [vmem:[%s5 + $0x58] sm:$0xff]
    %v1295 = vld [vmem:[%s5 + $0x60] sm:$0xff]
    %v1296 = vld [vmem:[%s5 + $0x68] sm:$0xff]
    %v1297 = vld [vmem:[%s5 + $0x70] sm:$0xff]
    %v1298 = vld [vmem:[%s5 + $0x78] sm:$0xff]
    %v1299 = vld [vmem:[%s6] sm:$0x1]
    %v1301 = vlaneseq
    %v1302 = vshrl.u32 %v1301, 7
    %v1303 = vsub.s32 0, %v1302
    %v1304 = vrot.slane %v1299, %v1303
    %1306 = vmatprep.subr.mxu0 0.0
    %1307 = vmatpush1.msra.mxu0 %v1283
    %1308 = vmatprep.subr.mxu0 0.0
    %1309 = vmatpush1.msra.mxu0 %v1284
    %1310 = vmatprep.subr.mxu0 0.0
    %1311 = vmatpush1.msra.mxu0 %v1285
    %1312 = vmatprep.subr.mxu0 0.0
    %1313 = vmatpush1.msra.mxu0 %v1286
    %1314 = vmatprep.subr.mxu0 0.0
    %1315 = vmatpush1.msra.mxu0 %v1287
    %1316 = vmatprep.subr.mxu0 0.0
    %1317 = vmatpush1.msra.mxu0 %v1288
    %1318 = vmatprep.subr.mxu0 0.0
    %1319 = vmatpush1.msra.mxu0 %v1289
    %1320 = vmatprep.subr.mxu0 0.0
    %1321 = vmatpush1.msra.mxu0 %v1290
    %1322 = vmatprep.subr.mxu0 0.0
    %1323 = vmatpush1.msra.mxu0 %v1291
    %1324 = vmatprep.subr.mxu0 0.0
    %1325 = vmatpush1.msra.mxu0 %v1292
    %1326 = vmatprep.subr.mxu0 0.0
    %1327 = vmatpush1.msra.mxu0 %v1293
    %1328 = vmatprep.subr.mxu0 0.0
    %1329 = vmatpush1.msra.mxu0 %v1294
    %1330 = vmatprep.subr.mxu0 0.0
    %1331 = vmatpush1.msra.mxu0 %v1295
    %1332 = vmatprep.subr.mxu0 0.0
    %1333 = vmatpush1.msra.mxu0 %v1296
    %1334 = vmatprep.subr.mxu0 0.0
    %1335 = vmatpush1.msra.mxu0 %v1297
    %1336 = vmatprep.subr.mxu0 0.0
    %1337 = vmatpush1.msra.mxu0 %v1298
    %1338 = vmatprep.subr.mxu0 0.0
    %1339 = vmatpush1.msra.mxu0 0.0
    %1340 = vmatprep.subr.mxu0 0.0
    %1341 = vmatpush1.msra.mxu0 0.0
    %1342 = vmatprep.subr.mxu0 0.0
    %1343 = vmatpush1.msra.mxu0 0.0
    %1344 = vmatprep.subr.mxu0 0.0
    %1345 = vmatpush1.msra.mxu0 0.0
    %1346 = vmatprep.subr.mxu0 0.0
    %1347 = vmatpush1.msra.mxu0 0.0
    %1348 = vmatprep.subr.mxu0 0.0
    %1349 = vmatpush1.msra.mxu0 0.0
    %1350 = vmatprep.subr.mxu0 0.0
    %1351 = vmatpush1.msra.mxu0 0.0
    %1352 = vmatprep.subr.mxu0 0.0
    %1353 = vmatpush1.msra.mxu0 0.0
    %1354 = vmatprep.subr.mxu0 0.0
    %1355 = vmatpush1.msra.mxu0 0.0
    %1356 = vmatprep.subr.mxu0 0.0
    %1357 = vmatpush1.msra.mxu0 0.0
    %1358 = vmatprep.subr.mxu0 0.0
    %1359 = vmatpush1.msra.mxu0 0.0
    %1360 = vmatprep.subr.mxu0 0.0
    %1361 = vmatpush1.msra.mxu0 0.0
    %1362 = vmatprep.subr.mxu0 0.0
    %1363 = vmatpush1.msra.mxu0 0.0
    %1364 = vmatprep.subr.mxu0 0.0
    %1365 = vmatpush1.msra.mxu0 0.0
    %1366 = vmatprep.subr.mxu0 0.0
    %1367 = vmatpush1.msra.mxu0 0.0
    %1368 = vmatprep.subr.mxu0 0.0
    %1369 = vmatpush1.msra.mxu0 0.0
    %1370 = vmatprep.mubr.f32.mxu0 0.0
    %1371 = vmatmul.mubr.f32.gmra.mrb[0].mxu0 %v1251
    %v1372 = vpop.f32.mrb[0].mxu0
    %v1373 = vadd.f32 %v1304, %v1372
    %v1374 = vpop.f32.mrb[0].mxu0
    %1375 = vmatprep.mubr.f32.mxu0 0.0
    %1376 = vmatmul.mubr.f32.gmra.mrb[0].mxu0 %v1252
    %v1377 = vpop.f32.mrb[0].mxu0
    %v1378 = vadd.f32 %v1304, %v1377
    %v1379 = vpop.f32.mrb[0].mxu0
    %1380 = vmatprep.mubr.f32.mxu0 0.0
    %1381 = vmatmul.mubr.f32.gmra.mrb[0].mxu0 %v1253
    %v1382 = vpop.f32.mrb[0].mxu0
    %v1383 = vadd.f32 %v1304, %v1382
    %v1384 = vpop.f32.mrb[0].mxu0
    %1385 = vmatprep.mubr.f32.mxu0 0.0
    %1386 = vmatmul.mubr.f32.gmra.mrb[0].mxu0 %v1254
    %v1387 = vpop.f32.mrb[0].mxu0
    %v1388 = vadd.f32 %v1304, %v1387
    %v1389 = vpop.f32.mrb[0].mxu0
    %1390 = vmatprep.mubr.f32.mxu0 0.0
    %1391 = vmatmul.mubr.f32.gmra.mrb[0].mxu0 %v1255
    %v1392 = vpop.f32.mrb[0].mxu0
    %v1393 = vadd.f32 %v1304, %v1392
    %v1394 = vpop.f32.mrb[0].mxu0
    %1395 = vmatprep.mubr.f32.mxu0 0.0
    %1396 = vmatmul.mubr.f32.gmra.mrb[0].mxu0 %v1256
    %v1397 = vpop.f32.mrb[0].mxu0
    %v1398 = vadd.f32 %v1304, %v1397
    %v1399 = vpop.f32.mrb[0].mxu0
    %1400 = vmatprep.mubr.f32.mxu0 0.0
    %1401 = vmatmul.mubr.f32.gmra.mrb[0].mxu0 %v1257
    %v1402 = vpop.f32.mrb[0].mxu0
    %v1403 = vadd.f32 %v1304, %v1402
    %v1404 = vpop.f32.mrb[0].mxu0
    %1405 = vmatprep.mubr.f32.mxu0 0.0
    %1406 = vmatmul.mubr.f32.gmra.mrb[0].mxu0 %v1258
    %v1407 = vpop.f32.mrb[0].mxu0
    %v1408 = vadd.f32 %v1304, %v1407
    %v1409 = vpop.f32.mrb[0].mxu0
    %1410 = vmatprep.mubr.f32.mxu0 0.0
    %1411 = vmatmul.mubr.f32.gmra.mrb[0].mxu0 %v1259
    %v1412 = vpop.f32.mrb[0].mxu0
    %v1413 = vadd.f32 %v1304, %v1412
    %v1414 = vpop.f32.mrb[0].mxu0
    %1415 = vmatprep.mubr.f32.mxu0 0.0
    %1416 = vmatmul.mubr.f32.gmra.mrb[0].mxu0 %v1260
    %v1417 = vpop.f32.mrb[0].mxu0
    %v1418 = vadd.f32 %v1304, %v1417
    %v1419 = vpop.f32.mrb[0].mxu0
    %1420 = vmatprep.mubr.f32.mxu0 0.0
    %1421 = vmatmul.mubr.f32.gmra.mrb[0].mxu0 %v1261
    %v1422 = vpop.f32.mrb[0].mxu0
    %v1423 = vadd.f32 %v1304, %v1422
    %v1424 = vpop.f32.mrb[0].mxu0
    %1425 = vmatprep.mubr.f32.mxu0 0.0
    %1426 = vmatmul.mubr.f32.gmra.mrb[0].mxu0 %v1262
    %v1427 = vpop.f32.mrb[0].mxu0
    %v1428 = vadd.f32 %v1304, %v1427
    %v1429 = vpop.f32.mrb[0].mxu0
    %1430 = vmatprep.mubr.f32.mxu0 0.0
    %1431 = vmatmul.mubr.f32.gmra.mrb[0].mxu0 %v1263
    %v1432 = vpop.f32.mrb[0].mxu0
    %v1433 = vadd.f32 %v1304, %v1432
    %v1434 = vpop.f32.mrb[0].mxu0
    %1435 = vmatprep.mubr.f32.mxu0 0.0
    %1436 = vmatmul.mubr.f32.gmra.mrb[0].mxu0 %v1264
    %v1437 = vpop.f32.mrb[0].mxu0
    %v1438 = vadd.f32 %v1304, %v1437
    %v1439 = vpop.f32.mrb[0].mxu0
    %1440 = vmatprep.mubr.f32.mxu0 0.0
    %1441 = vmatmul.mubr.f32.gmra.mrb[0].mxu0 %v1265
    %v1442 = vpop.f32.mrb[0].mxu0
    %v1443 = vadd.f32 %v1304, %v1442
    %v1444 = vpop.f32.mrb[0].mxu0
    %1445 = vmatprep.mubr.f32.mxu0 0.0
    %1446 = vmatmul.mubr.f32.gmra.mrb[0].mxu0 %v1266
    %v1447 = vpop.f32.mrb[0].mxu0
    %v1448 = vadd.f32 %v1304, %v1447
    %v1449 = vpop.f32.mrb[0].mxu0
    %1450 = vmatprep.mubr.f32.mxu0 0.0
    %1451 = vmatmul.mubr.f32.gmra.mrb[0].mxu0 %v1267
    %v1452 = vpop.f32.mrb[0].mxu0
    %v1453 = vadd.f32 %v1304, %v1452
    %v1454 = vpop.f32.mrb[0].mxu0
    %1455 = vmatprep.mubr.f32.mxu0 0.0
    %1456 = vmatmul.mubr.f32.gmra.mrb[0].mxu0 %v1268
    %v1457 = vpop.f32.mrb[0].mxu0
    %v1458 = vadd.f32 %v1304, %v1457
    %v1459 = vpop.f32.mrb[0].mxu0
    %1460 = vmatprep.mubr.f32.mxu0 0.0
    %1461 = vmatmul.mubr.f32.gmra.mrb[0].mxu0 %v1269
    %v1462 = vpop.f32.mrb[0].mxu0
    %v1463 = vadd.f32 %v1304, %v1462
    %v1464 = vpop.f32.mrb[0].mxu0
    %1465 = vmatprep.mubr.f32.mxu0 0.0
    %1466 = vmatmul.mubr.f32.gmra.mrb[0].mxu0 %v1270
    %v1467 = vpop.f32.mrb[0].mxu0
    %v1468 = vadd.f32 %v1304, %v1467
    %v1469 = vpop.f32.mrb[0].mxu0
    %1470 = vmatprep.mubr.f32.mxu0 0.0
    %1471 = vmatmul.mubr.f32.gmra.mrb[0].mxu0 %v1271
    %v1472 = vpop.f32.mrb[0].mxu0
    %v1473 = vadd.f32 %v1304, %v1472
    %v1474 = vpop.f32.mrb[0].mxu0
    %1475 = vmatprep.mubr.f32.mxu0 0.0
    %1476 = vmatmul.mubr.f32.gmra.mrb[0].mxu0 %v1272
    %v1477 = vpop.f32.mrb[0].mxu0
    %v1478 = vadd.f32 %v1304, %v1477
    %v1479 = vpop.f32.mrb[0].mxu0
    %1480 = vmatprep.mubr.f32.mxu0 0.0
    %1481 = vmatmul.mubr.f32.gmra.mrb[0].mxu0 %v1273
    %v1482 = vpop.f32.mrb[0].mxu0
    %v1483 = vadd.f32 %v1304, %v1482
    %v1484 = vpop.f32.mrb[0].mxu0
    %1485 = vmatprep.mubr.f32.mxu0 0.0
    %1486 = vmatmul.mubr.f32.gmra.mrb[0].mxu0 %v1274
    %v1487 = vpop.f32.mrb[0].mxu0
    %v1488 = vadd.f32 %v1304, %v1487
    %v1489 = vpop.f32.mrb[0].mxu0
    %1490 = vmatprep.mubr.f32.mxu0 0.0
    %1491 = vmatmul.mubr.f32.gmra.mrb[0].mxu0 %v1275
    %v1492 = vpop.f32.mrb[0].mxu0
    %v1493 = vadd.f32 %v1304, %v1492
    %v1494 = vpop.f32.mrb[0].mxu0
    %1495 = vmatprep.mubr.f32.mxu0 0.0
    %1496 = vmatmul.mubr.f32.gmra.mrb[0].mxu0 %v1276
    %v1497 = vpop.f32.mrb[0].mxu0
    %v1498 = vadd.f32 %v1304, %v1497
    %v1499 = vpop.f32.mrb[0].mxu0
    %1500 = vmatprep.mubr.f32.mxu0 0.0
    %1501 = vmatmul.mubr.f32.gmra.mrb[0].mxu0 %v1277
    %v1502 = vpop.f32.mrb[0].mxu0
    %v1503 = vadd.f32 %v1304, %v1502
    %v1504 = vpop.f32.mrb[0].mxu0
    %1505 = vmatprep.mubr.f32.mxu0 0.0
    %1506 = vmatmul.mubr.f32.gmra.mrb[0].mxu0 %v1278
    %v1507 = vpop.f32.mrb[0].mxu0
    %v1508 = vadd.f32 %v1304, %v1507
    %v1509 = vpop.f32.mrb[0].mxu0
    %1510 = vmatprep.mubr.f32.mxu0 0.0
    %1511 = vmatmul.mubr.f32.gmra.mrb[0].mxu0 %v1279
    %v1512 = vpop.f32.mrb[0].mxu0
    %v1513 = vadd.f32 %v1304, %v1512
    %v1514 = vpop.f32.mrb[0].mxu0
    %1515 = vmatprep.mubr.f32.mxu0 0.0
    %1516 = vmatmul.mubr.f32.gmra.mrb[0].mxu0 %v1280
    %v1517 = vpop.f32.mrb[0].mxu0
    %v1518 = vadd.f32 %v1304, %v1517
    %v1519 = vpop.f32.mrb[0].mxu0
    %1520 = vmatprep.mubr.f32.mxu0 0.0
    %1521 = vmatmul.mubr.f32.gmra.mrb[0].mxu0 %v1281
    %v1522 = vpop.f32.mrb[0].mxu0
    %v1523 = vadd.f32 %v1304, %v1522
    %v1524 = vpop.f32.mrb[0].mxu0
    %1525 = vmatprep.mubr.f32.mxu0 0.0
    %1526 = vmatmul.mubr.f32.gmra.mrb[0].mxu0 %v1282
    %v1527 = vpop.f32.mrb[0].mxu0
    %v1528 = vadd.f32 %v1304, %v1527
    %v1529 = vpop.f32.mrb[0].mxu0
    %1530 = vdwg.mxu0
    %v1531 = vmax.f32 %v1373, 0.0
    %v1532 = vmax.f32 %v1378, 0.0
    %v1533 = vmax.f32 %v1383, 0.0
    %v1534 = vmax.f32 %v1388, 0.0
    %v1535 = vmax.f32 %v1393, 0.0
    %v1536 = vmax.f32 %v1398, 0.0
    %v1537 = vmax.f32 %v1403, 0.0
    %v1538 = vmax.f32 %v1408, 0.0
    %v1539 = vmax.f32 %v1413, 0.0
    %v1540 = vmax.f32 %v1418, 0.0
    %v1541 = vmax.f32 %v1423, 0.0
    %v1542 = vmax.f32 %v1428, 0.0
    %v1543 = vmax.f32 %v1433, 0.0
    %v1544 = vmax.f32 %v1438, 0.0
    %v1545 = vmax.f32 %v1443, 0.0
    %v1546 = vmax.f32 %v1448, 0.0
    %v1547 = vmax.f32 %v1453, 0.0
    %v1548 = vmax.f32 %v1458, 0.0
    %v1549 = vmax.f32 %v1463, 0.0
    %v1550 = vmax.f32 %v1468, 0.0
    %v1551 = vmax.f32 %v1473, 0.0
    %v1552 = vmax.f32 %v1478, 0.0
    %v1553 = vmax.f32 %v1483, 0.0
    %v1554 = vmax.f32 %v1488, 0.0
    %v1555 = vmax.f32 %v1493, 0.0
    %v1556 = vmax.f32 %v1498, 0.0
    %v1557 = vmax.f32 %v1503, 0.0
    %v1558 = vmax.f32 %v1508, 0.0
    %v1559 = vmax.f32 %v1513, 0.0
    %v1560 = vmax.f32 %v1518, 0.0
    %v1561 = vmax.f32 %v1523, 0.0
    %v1562 = vmax.f32 %v1528, 0.0
    %v1563 = vld [vmem:[%s8] sm:$0x7]
    %v1564 = vld [vmem:[#allocation2] sm:$0xff]
    %v1565 = vld [vmem:[#allocation2 + $0x8] sm:$0xff]
    %v1566 = vld [vmem:[#allocation2 + $0x10] sm:$0xff]
    %v1567 = vld [vmem:[#allocation2 + $0x18] sm:$0xff]
    %v1568 = vld [vmem:[#allocation2 + $0x20] sm:$0xff]
    %v1569 = vld [vmem:[#allocation2 + $0x28] sm:$0xff]
    %v1570 = vld [vmem:[#allocation2 + $0x30] sm:$0xff]
    %v1571 = vld [vmem:[#allocation2 + $0x38] sm:$0xff]
    %v1572 = vld [vmem:[#allocation2 + $0x40] sm:$0xff]
    %v1573 = vld [vmem:[#allocation2 + $0x48] sm:$0xff]
    %v1574 = vld [vmem:[#allocation2 + $0x50] sm:$0xff]
    %v1575 = vld [vmem:[#allocation2 + $0x58] sm:$0xff]
    %v1576 = vld [vmem:[#allocation2 + $0x60] sm:$0xff]
    %v1577 = vld [vmem:[#allocation2 + $0x68] sm:$0xff]
    %v1578 = vld [vmem:[#allocation2 + $0x70] sm:$0xff]
    %v1579 = vld [vmem:[#allocation2 + $0x78] sm:$0xff]
    %v1580 = vlaneseq
    %v1581 = vshrl.u32 %v1580, 7
    %v1582 = vsub.s32 0, %v1581
    %v1583 = vrot.slane %v1563, %v1582
    %1584 = vmatprep.subr.mxu0 0.0
    %1585 = vmatpush1.msra.mxu0 %v1564
    %1586 = vmatprep.subr.mxu0 0.0
    %1587 = vmatpush1.msra.mxu0 %v1565
    %1588 = vmatprep.subr.mxu0 0.0
    %1589 = vmatpush1.msra.mxu0 %v1566
    %1590 = vmatprep.subr.mxu0 0.0
    %1591 = vmatpush1.msra.mxu0 %v1567
    %1592 = vmatprep.subr.mxu0 0.0
    %1593 = vmatpush1.msra.mxu0 %v1568
    %1594 = vmatprep.subr.mxu0 0.0
    %1595 = vmatpush1.msra.mxu0 %v1569
    %1596 = vmatprep.subr.mxu0 0.0
    %1597 = vmatpush1.msra.mxu0 %v1570
    %1598 = vmatprep.subr.mxu0 0.0
    %1599 = vmatpush1.msra.mxu0 %v1571
    %1600 = vmatprep.subr.mxu0 0.0
    %1601 = vmatpush1.msra.mxu0 %v1572
    %1602 = vmatprep.subr.mxu0 0.0
    %1603 = vmatpush1.msra.mxu0 %v1573
    %1604 = vmatprep.subr.mxu0 0.0
    %1605 = vmatpush1.msra.mxu0 %v1574
    %1606 = vmatprep.subr.mxu0 0.0
    %1607 = vmatpush1.msra.mxu0 %v1575
    %1608 = vmatprep.subr.mxu0 0.0
    %1609 = vmatpush1.msra.mxu0 %v1576
    %1610 = vmatprep.subr.mxu0 0.0
    %1611 = vmatpush1.msra.mxu0 %v1577
    %1612 = vmatprep.subr.mxu0 0.0
    %1613 = vmatpush1.msra.mxu0 %v1578
    %1614 = vmatprep.subr.mxu0 0.0
    %1615 = vmatpush1.msra.mxu0 %v1579
    %1616 = vmatprep.subr.mxu0 0.0
    %1617 = vmatpush1.msra.mxu0 0.0
    %1618 = vmatprep.subr.mxu0 0.0
    %1619 = vmatpush1.msra.mxu0 0.0
    %1620 = vmatprep.subr.mxu0 0.0
    %1621 = vmatpush1.msra.mxu0 0.0
    %1622 = vmatprep.subr.mxu0 0.0
    %1623 = vmatpush1.msra.mxu0 0.0
    %1624 = vmatprep.subr.mxu0 0.0
    %1625 = vmatpush1.msra.mxu0 0.0
    %1626 = vmatprep.subr.mxu0 0.0
    %1627 = vmatpush1.msra.mxu0 0.0
    %1628 = vmatprep.subr.mxu0 0.0
    %1629 = vmatpush1.msra.mxu0 0.0
    %1630 = vmatprep.subr.mxu0 0.0
    %1631 = vmatpush1.msra.mxu0 0.0
    %1632 = vmatprep.subr.mxu0 0.0
    %1633 = vmatpush1.msra.mxu0 0.0
    %1634 = vmatprep.subr.mxu0 0.0
    %1635 = vmatpush1.msra.mxu0 0.0
    %1636 = vmatprep.subr.mxu0 0.0
    %1637 = vmatpush1.msra.mxu0 0.0
    %1638 = vmatprep.subr.mxu0 0.0
    %1639 = vmatpush1.msra.mxu0 0.0
    %1640 = vmatprep.subr.mxu0 0.0
    %1641 = vmatpush1.msra.mxu0 0.0
    %1642 = vmatprep.subr.mxu0 0.0
    %1643 = vmatpush1.msra.mxu0 0.0
    %1644 = vmatprep.subr.mxu0 0.0
    %1645 = vmatpush1.msra.mxu0 0.0
    %1646 = vmatprep.subr.mxu0 0.0
    %1647 = vmatpush1.msra.mxu0 0.0
    %1648 = vmatprep.mubr.f32.mxu0 0.0
    %1649 = vmatmul.mubr.f32.gmra.mrb[0].mxu0 %v1531
    %v1650 = vpop.f32.mrb[0].mxu0
    %v1651 = vadd.f32 %v1583, %v1650
    %v1652 = vpop.f32.mrb[0].mxu0
    %1653 = vmatprep.mubr.f32.mxu0 0.0
    %1654 = vmatmul.mubr.f32.gmra.mrb[0].mxu0 %v1532
    %v1655 = vpop.f32.mrb[0].mxu0
    %v1656 = vadd.f32 %v1583, %v1655
    %v1657 = vpop.f32.mrb[0].mxu0
    %1658 = vmatprep.mubr.f32.mxu0 0.0
    %1659 = vmatmul.mubr.f32.gmra.mrb[0].mxu0 %v1533
    %v1660 = vpop.f32.mrb[0].mxu0
    %v1661 = vadd.f32 %v1583, %v1660
    %v1662 = vpop.f32.mrb[0].mxu0
    %1663 = vmatprep.mubr.f32.mxu0 0.0
    %1664 = vmatmul.mubr.f32.gmra.mrb[0].mxu0 %v1534
    %v1665 = vpop.f32.mrb[0].mxu0
    %v1666 = vadd.f32 %v1583, %v1665
    %v1667 = vpop.f32.mrb[0].mxu0
    %1668 = vmatprep.mubr.f32.mxu0 0.0
    %1669 = vmatmul.mubr.f32.gmra.mrb[0].mxu0 %v1535
    %v1670 = vpop.f32.mrb[0].mxu0
    %v1671 = vadd.f32 %v1583, %v1670
    %v1672 = vpop.f32.mrb[0].mxu0
    %1673 = vmatprep.mubr.f32.mxu0 0.0
    %1674 = vmatmul.mubr.f32.gmra.mrb[0].mxu0 %v1536
    %v1675 = vpop.f32.mrb[0].mxu0
    %v1676 = vadd.f32 %v1583, %v1675
    %v1677 = vpop.f32.mrb[0].mxu0
    %1678 = vmatprep.mubr.f32.mxu0 0.0
    %1679 = vmatmul.mubr.f32.gmra.mrb[0].mxu0 %v1537
    %v1680 = vpop.f32.mrb[0].mxu0
    %v1681 = vadd.f32 %v1583, %v1680
    %v1682 = vpop.f32.mrb[0].mxu0
    %1683 = vmatprep.mubr.f32.mxu0 0.0
    %1684 = vmatmul.mubr.f32.gmra.mrb[0].mxu0 %v1538
    %v1685 = vpop.f32.mrb[0].mxu0
    %v1686 = vadd.f32 %v1583, %v1685
    %v1687 = vpop.f32.mrb[0].mxu0
    %1688 = vmatprep.mubr.f32.mxu0 0.0
    %1689 = vmatmul.mubr.f32.gmra.mrb[0].mxu0 %v1539
    %v1690 = vpop.f32.mrb[0].mxu0
    %v1691 = vadd.f32 %v1583, %v1690
    %v1692 = vpop.f32.mrb[0].mxu0
    %1693 = vmatprep.mubr.f32.mxu0 0.0
    %1694 = vmatmul.mubr.f32.gmra.mrb[0].mxu0 %v1540
    %v1695 = vpop.f32.mrb[0].mxu0
    %v1696 = vadd.f32 %v1583, %v1695
    %v1697 = vpop.f32.mrb[0].mxu0
    %1698 = vmatprep.mubr.f32.mxu0 0.0
    %1699 = vmatmul.mubr.f32.gmra.mrb[0].mxu0 %v1541
    %v1700 = vpop.f32.mrb[0].mxu0
    %v1701 = vadd.f32 %v1583, %v1700
    %v1702 = vpop.f32.mrb[0].mxu0
    %1703 = vmatprep.mubr.f32.mxu0 0.0
    %1704 = vmatmul.mubr.f32.gmra.mrb[0].mxu0 %v1542
    %v1705 = vpop.f32.mrb[0].mxu0
    %v1706 = vadd.f32 %v1583, %v1705
    %v1707 = vpop.f32.mrb[0].mxu0
    %1708 = vmatprep.mubr.f32.mxu0 0.0
    %1709 = vmatmul.mubr.f32.gmra.mrb[0].mxu0 %v1543
    %v1710 = vpop.f32.mrb[0].mxu0
    %v1711 = vadd.f32 %v1583, %v1710
    %v1712 = vpop.f32.mrb[0].mxu0
    %1713 = vmatprep.mubr.f32.mxu0 0.0
    %1714 = vmatmul.mubr.f32.gmra.mrb[0].mxu0 %v1544
    %v1715 = vpop.f32.mrb[0].mxu0
    %v1716 = vadd.f32 %v1583, %v1715
    %v1717 = vpop.f32.mrb[0].mxu0
    %1718 = vmatprep.mubr.f32.mxu0 0.0
    %1719 = vmatmul.mubr.f32.gmra.mrb[0].mxu0 %v1545
    %v1720 = vpop.f32.mrb[0].mxu0
    %v1721 = vadd.f32 %v1583, %v1720
    %v1722 = vpop.f32.mrb[0].mxu0
    %1723 = vmatprep.mubr.f32.mxu0 0.0
    %1724 = vmatmul.mubr.f32.gmra.mrb[0].mxu0 %v1546
    %v1725 = vpop.f32.mrb[0].mxu0
    %v1726 = vadd.f32 %v1583, %v1725
    %v1727 = vpop.f32.mrb[0].mxu0
    %1728 = vmatprep.mubr.f32.mxu0 0.0
    %1729 = vmatmul.mubr.f32.gmra.mrb[0].mxu0 %v1547
    %v1730 = vpop.f32.mrb[0].mxu0
    %v1731 = vadd.f32 %v1583, %v1730
    %v1732 = vpop.f32.mrb[0].mxu0
    %1733 = vmatprep.mubr.f32.mxu0 0.0
    %1734 = vmatmul.mubr.f32.gmra.mrb[0].mxu0 %v1548
    %v1735 = vpop.f32.mrb[0].mxu0
    %v1736 = vadd.f32 %v1583, %v1735
    %v1737 = vpop.f32.mrb[0].mxu0
    %1738 = vmatprep.mubr.f32.mxu0 0.0
    %1739 = vmatmul.mubr.f32.gmra.mrb[0].mxu0 %v1549
    %v1740 = vpop.f32.mrb[0].mxu0
    %v1741 = vadd.f32 %v1583, %v1740
    %v1742 = vpop.f32.mrb[0].mxu0
    %1743 = vmatprep.mubr.f32.mxu0 0.0
    %1744 = vmatmul.mubr.f32.gmra.mrb[0].mxu0 %v1550
    %v1745 = vpop.f32.mrb[0].mxu0
    %v1746 = vadd.f32 %v1583, %v1745
    %v1747 = vpop.f32.mrb[0].mxu0
    %1748 = vmatprep.mubr.f32.mxu0 0.0
    %1749 = vmatmul.mubr.f32.gmra.mrb[0].mxu0 %v1551
    %v1750 = vpop.f32.mrb[0].mxu0
    %v1751 = vadd.f32 %v1583, %v1750
    %v1752 = vpop.f32.mrb[0].mxu0
    %1753 = vmatprep.mubr.f32.mxu0 0.0
    %1754 = vmatmul.mubr.f32.gmra.mrb[0].mxu0 %v1552
    %v1755 = vpop.f32.mrb[0].mxu0
    %v1756 = vadd.f32 %v1583, %v1755
    %v1757 = vpop.f32.mrb[0].mxu0
    %1758 = vmatprep.mubr.f32.mxu0 0.0
    %1759 = vmatmul.mubr.f32.gmra.mrb[0].mxu0 %v1553
    %v1760 = vpop.f32.mrb[0].mxu0
    %v1761 = vadd.f32 %v1583, %v1760
    %v1762 = vpop.f32.mrb[0].mxu0
    %1763 = vmatprep.mubr.f32.mxu0 0.0
    %1764 = vmatmul.mubr.f32.gmra.mrb[0].mxu0 %v1554
    %v1765 = vpop.f32.mrb[0].mxu0
    %v1766 = vadd.f32 %v1583, %v1765
    %v1767 = vpop.f32.mrb[0].mxu0
    %1768 = vmatprep.mubr.f32.mxu0 0.0
    %1769 = vmatmul.mubr.f32.gmra.mrb[0].mxu0 %v1555
    %v1770 = vpop.f32.mrb[0].mxu0
    %v1771 = vadd.f32 %v1583, %v1770
    %v1772 = vpop.f32.mrb[0].mxu0
    %1773 = vmatprep.mubr.f32.mxu0 0.0
    %1774 = vmatmul.mubr.f32.gmra.mrb[0].mxu0 %v1556
    %v1775 = vpop.f32.mrb[0].mxu0
    %v1776 = vadd.f32 %v1583, %v1775
    %v1777 = vpop.f32.mrb[0].mxu0
    %1778 = vmatprep.mubr.f32.mxu0 0.0
    %1779 = vmatmul.mubr.f32.gmra.mrb[0].mxu0 %v1557
    %v1780 = vpop.f32.mrb[0].mxu0
    %v1781 = vadd.f32 %v1583, %v1780
    %v1782 = vpop.f32.mrb[0].mxu0
    %1783 = vmatprep.mubr.f32.mxu0 0.0
    %1784 = vmatmul.mubr.f32.gmra.mrb[0].mxu0 %v1558
    %v1785 = vpop.f32.mrb[0].mxu0
    %v1786 = vadd.f32 %v1583, %v1785
    %v1787 = vpop.f32.mrb[0].mxu0
    %1788 = vmatprep.mubr.f32.mxu0 0.0
    %1789 = vmatmul.mubr.f32.gmra.mrb[0].mxu0 %v1559
    %v1790 = vpop.f32.mrb[0].mxu0
    %v1791 = vadd.f32 %v1583, %v1790
    %v1792 = vpop.f32.mrb[0].mxu0
    %1793 = vmatprep.mubr.f32.mxu0 0.0
    %1794 = vmatmul.mubr.f32.gmra.mrb[0].mxu0 %v1560
    %v1795 = vpop.f32.mrb[0].mxu0
    %v1796 = vadd.f32 %v1583, %v1795
    %v1797 = vpop.f32.mrb[0].mxu0
    %1798 = vmatprep.mubr.f32.mxu0 0.0
    %1799 = vmatmul.mubr.f32.gmra.mrb[0].mxu0 %v1561
    %v1800 = vpop.f32.mrb[0].mxu0
    %v1801 = vadd.f32 %v1583, %v1800
    %v1802 = vpop.f32.mrb[0].mxu0
    %1803 = vmatprep.mubr.f32.mxu0 0.0
    %1804 = vmatmul.mubr.f32.gmra.mrb[0].mxu0 %v1562
    %v1805 = vpop.f32.mrb[0].mxu0
    %v1806 = vadd.f32 %v1583, %v1805
    %v1807 = vpop.f32.mrb[0].mxu0
    %1808 = vdwg.mxu0
    %v1809 = vadd.f32 %v1651, %v1251
    %v1810 = vadd.f32 %v1656, %v1252
    %v1811 = vadd.f32 %v1661, %v1253
    %v1812 = vadd.f32 %v1666, %v1254
    %v1813 = vadd.f32 %v1671, %v1255
    %v1814 = vadd.f32 %v1676, %v1256
    %v1815 = vadd.f32 %v1681, %v1257
    %v1816 = vadd.f32 %v1686, %v1258
    %v1817 = vadd.f32 %v1691, %v1259
    %v1818 = vadd.f32 %v1696, %v1260
    %v1819 = vadd.f32 %v1701, %v1261
    %v1820 = vadd.f32 %v1706, %v1262
    %v1821 = vadd.f32 %v1711, %v1263
    %v1822 = vadd.f32 %v1716, %v1264
    %v1823 = vadd.f32 %v1721, %v1265
    %v1824 = vadd.f32 %v1726, %v1266
    %v1825 = vadd.f32 %v1731, %v1267
    %v1826 = vadd.f32 %v1736, %v1268
    %v1827 = vadd.f32 %v1741, %v1269
    %v1828 = vadd.f32 %v1746, %v1270
    %v1829 = vadd.f32 %v1751, %v1271
    %v1830 = vadd.f32 %v1756, %v1272
    %v1831 = vadd.f32 %v1761, %v1273
    %v1832 = vadd.f32 %v1766, %v1274
    %v1833 = vadd.f32 %v1771, %v1275
    %v1834 = vadd.f32 %v1776, %v1276
    %v1835 = vadd.f32 %v1781, %v1277
    %v1836 = vadd.f32 %v1786, %v1278
    %v1837 = vadd.f32 %v1791, %v1279
    %v1838 = vadd.f32 %v1796, %v1280
    %v1839 = vadd.f32 %v1801, %v1281
    %v1840 = vadd.f32 %v1806, %v1282
    %1841 = vadd.xlane.f32.xlu0 %v1809
    %v1842 = vpop.xlane.xlu0 %1841
    %1843 = vadd.xlane.f32.xlu0 %v1810
    %v1844 = vpop.xlane.xlu0 %1843
    %1845 = vadd.xlane.f32.xlu0 %v1811
    %v1846 = vpop.xlane.xlu0 %1845
    %1847 = vadd.xlane.f32.xlu0 %v1812
    %v1848 = vpop.xlane.xlu0 %1847
    %1849 = vadd.xlane.f32.xlu0 %v1813
    %v1850 = vpop.xlane.xlu0 %1849
    %1851 = vadd.xlane.f32.xlu0 %v1814
    %v1852 = vpop.xlane.xlu0 %1851
    %1853 = vadd.xlane.f32.xlu0 %v1815
    %v1854 = vpop.xlane.xlu0 %1853
    %1855 = vadd.xlane.f32.xlu0 %v1816
    %v1856 = vpop.xlane.xlu0 %1855
    %1857 = vadd.xlane.f32.xlu0 %v1817
    %v1858 = vpop.xlane.xlu0 %1857
    %1859 = vadd.xlane.f32.xlu0 %v1818
    %v1860 = vpop.xlane.xlu0 %1859
    %1861 = vadd.xlane.f32.xlu0 %v1819
    %v1862 = vpop.xlane.xlu0 %1861
    %1863 = vadd.xlane.f32.xlu0 %v1820
    %v1864 = vpop.xlane.xlu0 %1863
    %1865 = vadd.xlane.f32.xlu0 %v1821
    %v1866 = vpop.xlane.xlu0 %1865
    %1867 = vadd.xlane.f32.xlu0 %v1822
    %v1868 = vpop.xlane.xlu0 %1867
    %1869 = vadd.xlane.f32.xlu0 %v1823
    %v1870 = vpop.xlane.xlu0 %1869
    %1871 = vadd.xlane.f32.xlu0 %v1824
    %v1872 = vpop.xlane.xlu0 %1871
    %1873 = vadd.xlane.f32.xlu0 %v1825
    %v1874 = vpop.xlane.xlu0 %1873
    %1875 = vadd.xlane.f32.xlu0 %v1826
    %v1876 = vpop.xlane.xlu0 %1875
    %1877 = vadd.xlane.f32.xlu0 %v1827
    %v1878 = vpop.xlane.xlu0 %1877
    %1879 = vadd.xlane.f32.xlu0 %v1828
    %v1880 = vpop.xlane.xlu0 %1879
    %1881 = vadd.xlane.f32.xlu0 %v1829
    %v1882 = vpop.xlane.xlu0 %1881
    %1883 = vadd.xlane.f32.xlu0 %v1830
    %v1884 = vpop.xlane.xlu0 %1883
    %1885 = vadd.xlane.f32.xlu0 %v1831
    %v1886 = vpop.xlane.xlu0 %1885
    %1887 = vadd.xlane.f32.xlu0 %v1832
    %v1888 = vpop.xlane.xlu0 %1887
    %1889 = vadd.xlane.f32.xlu0 %v1833
    %v1890 = vpop.xlane.xlu0 %1889
    %1891 = vadd.xlane.f32.xlu0 %v1834
    %v1892 = vpop.xlane.xlu0 %1891
    %1893 = vadd.xlane.f32.xlu0 %v1835
    %v1894 = vpop.xlane.xlu0 %1893
    %1895 = vadd.xlane.f32.xlu0 %v1836
    %v1896 = vpop.xlane.xlu0 %1895
    %1897 = vadd.xlane.f32.xlu0 %v1837
    %v1898 = vpop.xlane.xlu0 %1897
    %1899 = vadd.xlane.f32.xlu0 %v1838
    %v1900 = vpop.xlane.xlu0 %1899
    %1901 = vadd.xlane.f32.xlu0 %v1839
    %v1902 = vpop.xlane.xlu0 %1901
    %1903 = vadd.xlane.f32.xlu0 %v1840
    %v1904 = vpop.xlane.xlu0 %1903
    %v1905 = vmul.f32 %v1842, 0.041666668
    %v1906 = vmul.f32 %v1844, 0.041666668
    %v1907 = vmul.f32 %v1846, 0.041666668
    %v1908 = vmul.f32 %v1848, 0.041666668
    %v1909 = vmul.f32 %v1850, 0.041666668
    %v1910 = vmul.f32 %v1852, 0.041666668
    %v1911 = vmul.f32 %v1854, 0.041666668
    %v1912 = vmul.f32 %v1856, 0.041666668
    %v1913 = vmul.f32 %v1858, 0.041666668
    %v1914 = vmul.f32 %v1860, 0.041666668
    %v1915 = vmul.f32 %v1862, 0.041666668
    %v1916 = vmul.f32 %v1864, 0.041666668
    %v1917 = vmul.f32 %v1866, 0.041666668
    %v1918 = vmul.f32 %v1868, 0.041666668
    %v1919 = vmul.f32 %v1870, 0.041666668
    %v1920 = vmul.f32 %v1872, 0.041666668
    %v1921 = vmul.f32 %v1874, 0.041666668
    %v1922 = vmul.f32 %v1876, 0.041666668
    %v1923 = vmul.f32 %v1878, 0.041666668
    %v1924 = vmul.f32 %v1880, 0.041666668
    %v1925 = vmul.f32 %v1882, 0.041666668
    %v1926 = vmul.f32 %v1884, 0.041666668
    %v1927 = vmul.f32 %v1886, 0.041666668
    %v1928 = vmul.f32 %v1888, 0.041666668
    %v1929 = vmul.f32 %v1890, 0.041666668
    %v1930 = vmul.f32 %v1892, 0.041666668
    %v1931 = vmul.f32 %v1894, 0.041666668
    %v1932 = vmul.f32 %v1896, 0.041666668
    %v1933 = vmul.f32 %v1898, 0.041666668
    %v1934 = vmul.f32 %v1900, 0.041666668
    %v1935 = vmul.f32 %v1902, 0.041666668
    %v1936 = vmul.f32 %v1904, 0.041666668
    %v1937 = vmul.f32 %v1809, %v1809
    %v1938 = vmul.f32 %v1810, %v1810
    %v1939 = vmul.f32 %v1811, %v1811
    %v1940 = vmul.f32 %v1812, %v1812
    %v1941 = vmul.f32 %v1813, %v1813
    %v1942 = vmul.f32 %v1814, %v1814
    %v1943 = vmul.f32 %v1815, %v1815
    %v1944 = vmul.f32 %v1816, %v1816
    %v1945 = vmul.f32 %v1817, %v1817
    %v1946 = vmul.f32 %v1818, %v1818
    %v1947 = vmul.f32 %v1819, %v1819
    %v1948 = vmul.f32 %v1820, %v1820
    %v1949 = vmul.f32 %v1821, %v1821
    %v1950 = vmul.f32 %v1822, %v1822
    %v1951 = vmul.f32 %v1823, %v1823
    %v1952 = vmul.f32 %v1824, %v1824
    %v1953 = vmul.f32 %v1825, %v1825
    %v1954 = vmul.f32 %v1826, %v1826
    %v1955 = vmul.f32 %v1827, %v1827
    %v1956 = vmul.f32 %v1828, %v1828
    %v1957 = vmul.f32 %v1829, %v1829
    %v1958 = vmul.f32 %v1830, %v1830
    %v1959 = vmul.f32 %v1831, %v1831
    %v1960 = vmul.f32 %v1832, %v1832
    %v1961 = vmul.f32 %v1833, %v1833
    %v1962 = vmul.f32 %v1834, %v1834
    %v1963 = vmul.f32 %v1835, %v1835
    %v1964 = vmul.f32 %v1836, %v1836
    %v1965 = vmul.f32 %v1837, %v1837
    %v1966 = vmul.f32 %v1838, %v1838
    %v1967 = vmul.f32 %v1839, %v1839
    %v1968 = vmul.f32 %v1840, %v1840
    %1969 = vadd.xlane.f32.xlu0 %v1937
    %v1970 = vpop.xlane.xlu0 %1969
    %1971 = vadd.xlane.f32.xlu0 %v1938
    %v1972 = vpop.xlane.xlu0 %1971
    %1973 = vadd.xlane.f32.xlu0 %v1939
    %v1974 = vpop.xlane.xlu0 %1973
    %1975 = vadd.xlane.f32.xlu0 %v1940
    %v1976 = vpop.xlane.xlu0 %1975
    %1977 = vadd.xlane.f32.xlu0 %v1941
    %v1978 = vpop.xlane.xlu0 %1977
    %1979 = vadd.xlane.f32.xlu0 %v1942
    %v1980 = vpop.xlane.xlu0 %1979
    %1981 = vadd.xlane.f32.xlu0 %v1943
    %v1982 = vpop.xlane.xlu0 %1981
    %1983 = vadd.xlane.f32.xlu0 %v1944
    %v1984 = vpop.xlane.xlu0 %1983
    %1985 = vadd.xlane.f32.xlu0 %v1945
    %v1986 = vpop.xlane.xlu0 %1985
    %1987 = vadd.xlane.f32.xlu0 %v1946
    %v1988 = vpop.xlane.xlu0 %1987
    %1989 = vadd.xlane.f32.xlu0 %v1947
    %v1990 = vpop.xlane.xlu0 %1989
    %1991 = vadd.xlane.f32.xlu0 %v1948
    %v1992 = vpop.xlane.xlu0 %1991
    %1993 = vadd.xlane.f32.xlu0 %v1949
    %v1994 = vpop.xlane.xlu0 %1993
    %1995 = vadd.xlane.f32.xlu0 %v1950
    %v1996 = vpop.xlane.xlu0 %1995
    %1997 = vadd.xlane.f32.xlu0 %v1951
    %v1998 = vpop.xlane.xlu0 %1997
    %1999 = vadd.xlane.f32.xlu0 %v1952
    %v2000 = vpop.xlane.xlu0 %1999
    %2001 = vadd.xlane.f32.xlu0 %v1953
    %v2002 = vpop.xlane.xlu0 %2001
    %2003 = vadd.xlane.f32.xlu0 %v1954
    %v2004 = vpop.xlane.xlu0 %2003
    %2005 = vadd.xlane.f32.xlu0 %v1955
    %v2006 = vpop.xlane.xlu0 %2005
    %2007 = vadd.xlane.f32.xlu0 %v1956
    %v2008 = vpop.xlane.xlu0 %2007
    %2009 = vadd.xlane.f32.xlu0 %v1957
    %v2010 = vpop.xlane.xlu0 %2009
    %2011 = vadd.xlane.f32.xlu0 %v1958
    %v2012 = vpop.xlane.xlu0 %2011
    %2013 = vadd.xlane.f32.xlu0 %v1959
    %v2014 = vpop.xlane.xlu0 %2013
    %2015 = vadd.xlane.f32.xlu0 %v1960
    %v2016 = vpop.xlane.xlu0 %2015
    %2017 = vadd.xlane.f32.xlu0 %v1961
    %v2018 = vpop.xlane.xlu0 %2017
    %2019 = vadd.xlane.f32.xlu0 %v1962
    %v2020 = vpop.xlane.xlu0 %2019
    %2021 = vadd.xlane.f32.xlu0 %v1963
    %v2022 = vpop.xlane.xlu0 %2021
    %2023 = vadd.xlane.f32.xlu0 %v1964
    %v2024 = vpop.xlane.xlu0 %2023
    %2025 = vadd.xlane.f32.xlu0 %v1965
    %v2026 = vpop.xlane.xlu0 %2025
    %2027 = vadd.xlane.f32.xlu0 %v1966
    %v2028 = vpop.xlane.xlu0 %2027
    %2029 = vadd.xlane.f32.xlu0 %v1967
    %v2030 = vpop.xlane.xlu0 %2029
    %2031 = vadd.xlane.f32.xlu0 %v1968
    %v2032 = vpop.xlane.xlu0 %2031
    %v2033 = vmul.f32 %v1970, 0.041666668
    %v2034 = vmul.f32 %v1972, 0.041666668
    %v2035 = vmul.f32 %v1974, 0.041666668
    %v2036 = vmul.f32 %v1976, 0.041666668
    %v2037 = vmul.f32 %v1978, 0.041666668
    %v2038 = vmul.f32 %v1980, 0.041666668
    %v2039 = vmul.f32 %v1982, 0.041666668
    %v2040 = vmul.f32 %v1984, 0.041666668
    %v2041 = vmul.f32 %v1986, 0.041666668
    %v2042 = vmul.f32 %v1988, 0.041666668
    %v2043 = vmul.f32 %v1990, 0.041666668
    %v2044 = vmul.f32 %v1992, 0.041666668
    %v2045 = vmul.f32 %v1994, 0.041666668
    %v2046 = vmul.f32 %v1996, 0.041666668
    %v2047 = vmul.f32 %v1998, 0.041666668
    %v2048 = vmul.f32 %v2000, 0.041666668
    %v2049 = vmul.f32 %v2002, 0.041666668
    %v2050 = vmul.f32 %v2004, 0.041666668
    %v2051 = vmul.f32 %v2006, 0.041666668
    %v2052 = vmul.f32 %v2008, 0.041666668
    %v2053 = vmul.f32 %v2010, 0.041666668
    %v2054 = vmul.f32 %v2012, 0.041666668
    %v2055 = vmul.f32 %v2014, 0.041666668
    %v2056 = vmul.f32 %v2016, 0.041666668
    %v2057 = vmul.f32 %v2018, 0.041666668
    %v2058 = vmul.f32 %v2020, 0.041666668
    %v2059 = vmul.f32 %v2022, 0.041666668
    %v2060 = vmul.f32 %v2024, 0.041666668
    %v2061 = vmul.f32 %v2026, 0.041666668
    %v2062 = vmul.f32 %v2028, 0.041666668
    %v2063 = vmul.f32 %v2030, 0.041666668
    %v2064 = vmul.f32 %v2032, 0.041666668
    %v2065 = vmul.f32 %v1905, %v1905
    %v2066 = vmul.f32 %v1906, %v1906
    %v2067 = vmul.f32 %v1907, %v1907
    %v2068 = vmul.f32 %v1908, %v1908
    %v2069 = vmul.f32 %v1909, %v1909
    %v2070 = vmul.f32 %v1910, %v1910
    %v2071 = vmul.f32 %v1911, %v1911
    %v2072 = vmul.f32 %v1912, %v1912
    %v2073 = vmul.f32 %v1913, %v1913
    %v2074 = vmul.f32 %v1914, %v1914
    %v2075 = vmul.f32 %v1915, %v1915
    %v2076 = vmul.f32 %v1916, %v1916
    %v2077 = vmul.f32 %v1917, %v1917
    %v2078 = vmul.f32 %v1918, %v1918
    %v2079 = vmul.f32 %v1919, %v1919
    %v2080 = vmul.f32 %v1920, %v1920
    %v2081 = vmul.f32 %v1921, %v1921
    %v2082 = vmul.f32 %v1922, %v1922
    %v2083 = vmul.f32 %v1923, %v1923
    %v2084 = vmul.f32 %v1924, %v1924
    %v2085 = vmul.f32 %v1925, %v1925
    %v2086 = vmul.f32 %v1926, %v1926
    %v2087 = vmul.f32 %v1927, %v1927
    %v2088 = vmul.f32 %v1928, %v1928
    %v2089 = vmul.f32 %v1929, %v1929
    %v2090 = vmul.f32 %v1930, %v1930
    %v2091 = vmul.f32 %v1931, %v1931
    %v2092 = vmul.f32 %v1932, %v1932
    %v2093 = vmul.f32 %v1933, %v1933
    %v2094 = vmul.f32 %v1934, %v1934
    %v2095 = vmul.f32 %v1935, %v1935
    %v2096 = vmul.f32 %v1936, %v1936
    %v2097 = vsub.f32 %v2033, %v2065
    %v2098 = vsub.f32 %v2034, %v2066
    %v2099 = vsub.f32 %v2035, %v2067
    %v2100 = vsub.f32 %v2036, %v2068
    %v2101 = vsub.f32 %v2037, %v2069
    %v2102 = vsub.f32 %v2038, %v2070
    %v2103 = vsub.f32 %v2039, %v2071
    %v2104 = vsub.f32 %v2040, %v2072
    %v2105 = vsub.f32 %v2041, %v2073
    %v2106 = vsub.f32 %v2042, %v2074
    %v2107 = vsub.f32 %v2043, %v2075
    %v2108 = vsub.f32 %v2044, %v2076
    %v2109 = vsub.f32 %v2045, %v2077
    %v2110 = vsub.f32 %v2046, %v2078
    %v2111 = vsub.f32 %v2047, %v2079
    %v2112 = vsub.f32 %v2048, %v2080
    %v2113 = vsub.f32 %v2049, %v2081
    %v2114 = vsub.f32 %v2050, %v2082
    %v2115 = vsub.f32 %v2051, %v2083
    %v2116 = vsub.f32 %v2052, %v2084
    %v2117 = vsub.f32 %v2053, %v2085
    %v2118 = vsub.f32 %v2054, %v2086
    %v2119 = vsub.f32 %v2055, %v2087
    %v2120 = vsub.f32 %v2056, %v2088
    %v2121 = vsub.f32 %v2057, %v2089
    %v2122 = vsub.f32 %v2058, %v2090
    %v2123 = vsub.f32 %v2059, %v2091
    %v2124 = vsub.f32 %v2060, %v2092
    %v2125 = vsub.f32 %v2061, %v2093
    %v2126 = vsub.f32 %v2062, %v2094
    %v2127 = vsub.f32 %v2063, %v2095
    %v2128 = vsub.f32 %v2064, %v2096
    %v2129 = vmax.f32 %v2097, 0.0
    %v2130 = vmax.f32 %v2098, 0.0
    %v2131 = vmax.f32 %v2099, 0.0
    %v2132 = vmax.f32 %v2100, 0.0
    %v2133 = vmax.f32 %v2101, 0.0
    %v2134 = vmax.f32 %v2102, 0.0
    %v2135 = vmax.f32 %v2103, 0.0
    %v2136 = vmax.f32 %v2104, 0.0
    %v2137 = vmax.f32 %v2105, 0.0
    %v2138 = vmax.f32 %v2106, 0.0
    %v2139 = vmax.f32 %v2107, 0.0
    %v2140 = vmax.f32 %v2108, 0.0
    %v2141 = vmax.f32 %v2109, 0.0
    %v2142 = vmax.f32 %v2110, 0.0
    %v2143 = vmax.f32 %v2111, 0.0
    %v2144 = vmax.f32 %v2112, 0.0
    %v2145 = vmax.f32 %v2113, 0.0
    %v2146 = vmax.f32 %v2114, 0.0
    %v2147 = vmax.f32 %v2115, 0.0
    %v2148 = vmax.f32 %v2116, 0.0
    %v2149 = vmax.f32 %v2117, 0.0
    %v2150 = vmax.f32 %v2118, 0.0
    %v2151 = vmax.f32 %v2119, 0.0
    %v2152 = vmax.f32 %v2120, 0.0
    %v2153 = vmax.f32 %v2121, 0.0
    %v2154 = vmax.f32 %v2122, 0.0
    %v2155 = vmax.f32 %v2123, 0.0
    %v2156 = vmax.f32 %v2124, 0.0
    %v2157 = vmax.f32 %v2125, 0.0
    %v2158 = vmax.f32 %v2126, 0.0
    %v2159 = vmax.f32 %v2127, 0.0
    %v2160 = vmax.f32 %v2128, 0.0
    %v2161 = vsub.f32 %v1809, %v1905
    %v2162 = vsub.f32 %v1810, %v1906
    %v2163 = vsub.f32 %v1811, %v1907
    %v2164 = vsub.f32 %v1812, %v1908
    %v2165 = vsub.f32 %v1813, %v1909
    %v2166 = vsub.f32 %v1814, %v1910
    %v2167 = vsub.f32 %v1815, %v1911
    %v2168 = vsub.f32 %v1816, %v1912
    %v2169 = vsub.f32 %v1817, %v1913
    %v2170 = vsub.f32 %v1818, %v1914
    %v2171 = vsub.f32 %v1819, %v1915
    %v2172 = vsub.f32 %v1820, %v1916
    %v2173 = vsub.f32 %v1821, %v1917
    %v2174 = vsub.f32 %v1822, %v1918
    %v2175 = vsub.f32 %v1823, %v1919
    %v2176 = vsub.f32 %v1824, %v1920
    %v2177 = vsub.f32 %v1825, %v1921
    %v2178 = vsub.f32 %v1826, %v1922
    %v2179 = vsub.f32 %v1827, %v1923
    %v2180 = vsub.f32 %v1828, %v1924
    %v2181 = vsub.f32 %v1829, %v1925
    %v2182 = vsub.f32 %v1830, %v1926
    %v2183 = vsub.f32 %v1831, %v1927
    %v2184 = vsub.f32 %v1832, %v1928
    %v2185 = vsub.f32 %v1833, %v1929
    %v2186 = vsub.f32 %v1834, %v1930
    %v2187 = vsub.f32 %v1835, %v1931
    %v2188 = vsub.f32 %v1836, %v1932
    %v2189 = vsub.f32 %v1837, %v1933
    %v2190 = vsub.f32 %v1838, %v1934
    %v2191 = vsub.f32 %v1839, %v1935
    %v2192 = vsub.f32 %v1840, %v1936
    %v2193 = vadd.f32 %v2129, 1e-05
    %v2194 = vadd.f32 %v2130, 1e-05
    %v2195 = vadd.f32 %v2131, 1e-05
    %v2196 = vadd.f32 %v2132, 1e-05
    %v2197 = vadd.f32 %v2133, 1e-05
    %v2198 = vadd.f32 %v2134, 1e-05
    %v2199 = vadd.f32 %v2135, 1e-05
    %v2200 = vadd.f32 %v2136, 1e-05
    %v2201 = vadd.f32 %v2137, 1e-05
    %v2202 = vadd.f32 %v2138, 1e-05
    %v2203 = vadd.f32 %v2139, 1e-05
    %v2204 = vadd.f32 %v2140, 1e-05
    %v2205 = vadd.f32 %v2141, 1e-05
    %v2206 = vadd.f32 %v2142, 1e-05
    %v2207 = vadd.f32 %v2143, 1e-05
    %v2208 = vadd.f32 %v2144, 1e-05
    %v2209 = vadd.f32 %v2145, 1e-05
    %v2210 = vadd.f32 %v2146, 1e-05
    %v2211 = vadd.f32 %v2147, 1e-05
    %v2212 = vadd.f32 %v2148, 1e-05
    %v2213 = vadd.f32 %v2149, 1e-05
    %v2214 = vadd.f32 %v2150, 1e-05
    %v2215 = vadd.f32 %v2151, 1e-05
    %v2216 = vadd.f32 %v2152, 1e-05
    %v2217 = vadd.f32 %v2153, 1e-05
    %v2218 = vadd.f32 %v2154, 1e-05
    %v2219 = vadd.f32 %v2155, 1e-05
    %v2220 = vadd.f32 %v2156, 1e-05
    %v2221 = vadd.f32 %v2157, 1e-05
    %v2222 = vadd.f32 %v2158, 1e-05
    %v2223 = vadd.f32 %v2159, 1e-05
    %v2224 = vadd.f32 %v2160, 1e-05
    %v2225 = vrsqrt.pop %v2193
    %v2226 = vrsqrt.pop %v2194
    %v2227 = vrsqrt.pop %v2195
    %v2228 = vrsqrt.pop %v2196
    %v2229 = vrsqrt.pop %v2197
    %v2230 = vrsqrt.pop %v2198
    %v2231 = vrsqrt.pop %v2199
    %v2232 = vrsqrt.pop %v2200
    %v2233 = vrsqrt.pop %v2201
    %v2234 = vrsqrt.pop %v2202
    %v2235 = vrsqrt.pop %v2203
    %v2236 = vrsqrt.pop %v2204
    %v2237 = vrsqrt.pop %v2205
    %v2238 = vrsqrt.pop %v2206
    %v2239 = vrsqrt.pop %v2207
    %v2240 = vrsqrt.pop %v2208
    %v2241 = vrsqrt.pop %v2209
    %v2242 = vrsqrt.pop %v2210
    %v2243 = vrsqrt.pop %v2211
    %v2244 = vrsqrt.pop %v2212
    %v2245 = vrsqrt.pop %v2213
    %v2246 = vrsqrt.pop %v2214
    %v2247 = vrsqrt.pop %v2215
    %v2248 = vrsqrt.pop %v2216
    %v2249 = vrsqrt.pop %v2217
    %v2250 = vrsqrt.pop %v2218
    %v2251 = vrsqrt.pop %v2219
    %v2252 = vrsqrt.pop %v2220
    %v2253 = vrsqrt.pop %v2221
    %v2254 = vrsqrt.pop %v2222
    %v2255 = vrsqrt.pop %v2223
    %v2256 = vrsqrt.pop %v2224
    %v2257 = vmul.f32 %v2161, %v2225
    %v2258 = vmul.f32 %v2162, %v2226
    %v2259 = vmul.f32 %v2163, %v2227
    %v2260 = vmul.f32 %v2164, %v2228
    %v2261 = vmul.f32 %v2165, %v2229
    %v2262 = vmul.f32 %v2166, %v2230
    %v2263 = vmul.f32 %v2167, %v2231
    %v2264 = vmul.f32 %v2168, %v2232
    %v2265 = vmul.f32 %v2169, %v2233
    %v2266 = vmul.f32 %v2170, %v2234
    %v2267 = vmul.f32 %v2171, %v2235
    %v2268 = vmul.f32 %v2172, %v2236
    %v2269 = vmul.f32 %v2173, %v2237
    %v2270 = vmul.f32 %v2174, %v2238
    %v2271 = vmul.f32 %v2175, %v2239
    %v2272 = vmul.f32 %v2176, %v2240
    %v2273 = vmul.f32 %v2177, %v2241
    %v2274 = vmul.f32 %v2178, %v2242
    %v2275 = vmul.f32 %v2179, %v2243
    %v2276 = vmul.f32 %v2180, %v2244
    %v2277 = vmul.f32 %v2181, %v2245
    %v2278 = vmul.f32 %v2182, %v2246
    %v2279 = vmul.f32 %v2183, %v2247
    %v2280 = vmul.f32 %v2184, %v2248
    %v2281 = vmul.f32 %v2185, %v2249
    %v2282 = vmul.f32 %v2186, %v2250
    %v2283 = vmul.f32 %v2187, %v2251
    %v2284 = vmul.f32 %v2188, %v2252
    %v2285 = vmul.f32 %v2189, %v2253
    %v2286 = vmul.f32 %v2190, %v2254
    %v2287 = vmul.f32 %v2191, %v2255
    %v2288 = vmul.f32 %v2192, %v2256
    %v2289 = vlaneseq
    %v2290 = vshrl.u32 %v2289, 7
    %v2291 = vsub.s32 1, %v2290
    %v2292 = vrot.slane %v1563, %v2291
    %v2293 = vmul.f32 %v2257, %v2292
    %v2294 = vmul.f32 %v2258, %v2292
    %v2295 = vmul.f32 %v2259, %v2292
    %v2296 = vmul.f32 %v2260, %v2292
    %v2297 = vmul.f32 %v2261, %v2292
    %v2298 = vmul.f32 %v2262, %v2292
    %v2299 = vmul.f32 %v2263, %v2292
    %v2300 = vmul.f32 %v2264, %v2292
    %v2301 = vmul.f32 %v2265, %v2292
    %v2302 = vmul.f32 %v2266, %v2292
    %v2303 = vmul.f32 %v2267, %v2292
    %v2304 = vmul.f32 %v2268, %v2292
    %v2305 = vmul.f32 %v2269, %v2292
    %v2306 = vmul.f32 %v2270, %v2292
    %v2307 = vmul.f32 %v2271, %v2292
    %v2308 = vmul.f32 %v2272, %v2292
    %v2309 = vmul.f32 %v2273, %v2292
    %v2310 = vmul.f32 %v2274, %v2292
    %v2311 = vmul.f32 %v2275, %v2292
    %v2312 = vmul.f32 %v2276, %v2292
    %v2313 = vmul.f32 %v2277, %v2292
    %v2314 = vmul.f32 %v2278, %v2292
    %v2315 = vmul.f32 %v2279, %v2292
    %v2316 = vmul.f32 %v2280, %v2292
    %v2317 = vmul.f32 %v2281, %v2292
    %v2318 = vmul.f32 %v2282, %v2292
    %v2319 = vmul.f32 %v2283, %v2292
    %v2320 = vmul.f32 %v2284, %v2292
    %v2321 = vmul.f32 %v2285, %v2292
    %v2322 = vmul.f32 %v2286, %v2292
    %v2323 = vmul.f32 %v2287, %v2292
    %v2324 = vmul.f32 %v2288, %v2292
    %v2325 = vlaneseq
    %v2326 = vshrl.u32 %v2325, 7
    %v2327 = vsub.s32 2, %v2326
    %v2328 = vrot.slane %v1563, %v2327
    %v2329 = vadd.f32 %v2293, %v2328
    %v2330 = vadd.f32 %v2294, %v2328
    %v2331 = vadd.f32 %v2295, %v2328
    %v2332 = vadd.f32 %v2296, %v2328
    %v2333 = vadd.f32 %v2297, %v2328
    %v2334 = vadd.f32 %v2298, %v2328
    %v2335 = vadd.f32 %v2299, %v2328
    %v2336 = vadd.f32 %v2300, %v2328
    %v2337 = vadd.f32 %v2301, %v2328
    %v2338 = vadd.f32 %v2302, %v2328
    %v2339 = vadd.f32 %v2303, %v2328
    %v2340 = vadd.f32 %v2304, %v2328
    %v2341 = vadd.f32 %v2305, %v2328
    %v2342 = vadd.f32 %v2306, %v2328
    %v2343 = vadd.f32 %v2307, %v2328
    %v2344 = vadd.f32 %v2308, %v2328
    %v2345 = vadd.f32 %v2309, %v2328
    %v2346 = vadd.f32 %v2310, %v2328
    %v2347 = vadd.f32 %v2311, %v2328
    %v2348 = vadd.f32 %v2312, %v2328
    %v2349 = vadd.f32 %v2313, %v2328
    %v2350 = vadd.f32 %v2314, %v2328
    %v2351 = vadd.f32 %v2315, %v2328
    %v2352 = vadd.f32 %v2316, %v2328
    %v2353 = vadd.f32 %v2317, %v2328
    %v2354 = vadd.f32 %v2318, %v2328
    %v2355 = vadd.f32 %v2319, %v2328
    %v2356 = vadd.f32 %v2320, %v2328
    %v2357 = vadd.f32 %v2321, %v2328
    %v2358 = vadd.f32 %v2322, %v2328
    %v2359 = vadd.f32 %v2323, %v2328
    %v2360 = vadd.f32 %v2324, %v2328
    %2361 = vst [vmem:[#allocation5] sm:$0xff] %v2329
    %2362 = vst [vmem:[#allocation5 + $0x8] sm:$0xff] %v2330
    %2363 = vst [vmem:[#allocation5 + $0x10] sm:$0xff] %v2331
    %2364 = vst [vmem:[#allocation5 + $0x18] sm:$0xff] %v2332
    %2365 = vst [vmem:[#allocation5 + $0x20] sm:$0xff] %v2333
    %2366 = vst [vmem:[#allocation5 + $0x28] sm:$0xff] %v2334
    %2367 = vst [vmem:[#allocation5 + $0x30] sm:$0xff] %v2335
    %2368 = vst [vmem:[#allocation5 + $0x38] sm:$0xff] %v2336
    %2369 = vst [vmem:[#allocation5 + $0x40] sm:$0xff] %v2337
    %2370 = vst [vmem:[#allocation5 + $0x48] sm:$0xff] %v2338
    %2371 = vst [vmem:[#allocation5 + $0x50] sm:$0xff] %v2339
    %2372 = vst [vmem:[#allocation5 + $0x58] sm:$0xff] %v2340
    %2373 = vst [vmem:[#allocation5 + $0x60] sm:$0xff] %v2341
    %2374 = vst [vmem:[#allocation5 + $0x68] sm:$0xff] %v2342
    %2375 = vst [vmem:[#allocation5 + $0x70] sm:$0xff] %v2343
    %2376 = vst [vmem:[#allocation5 + $0x78] sm:$0xff] %v2344
    %2377 = vst [vmem:[#allocation5 + $0x80] sm:$0xff] %v2345
    %2378 = vst [vmem:[#allocation5 + $0x88] sm:$0xff] %v2346
    %2379 = vst [vmem:[#allocation5 + $0x90] sm:$0xff] %v2347
    %2380 = vst [vmem:[#allocation5 + $0x98] sm:$0xff] %v2348
    %2381 = vst [vmem:[#allocation5 + $0xa0] sm:$0xff] %v2349
    %2382 = vst [vmem:[#allocation5 + $0xa8] sm:$0xff] %v2350
    %2383 = vst [vmem:[#allocation5 + $0xb0] sm:$0xff] %v2351
    %2384 = vst [vmem:[#allocation5 + $0xb8] sm:$0xff] %v2352
    %2385 = vst [vmem:[#allocation5 + $0xc0] sm:$0xff] %v2353
    %2386 = vst [vmem:[#allocation5 + $0xc8] sm:$0xff] %v2354
    %2387 = vst [vmem:[#allocation5 + $0xd0] sm:$0xff] %v2355
    %2388 = vst [vmem:[#allocation5 + $0xd8] sm:$0xff] %v2356
    %2389 = vst [vmem:[#allocation5 + $0xe0] sm:$0xff] %v2357
    %2390 = vst [vmem:[#allocation5 + $0xe8] sm:$0xff] %v2358
    %2391 = vst [vmem:[#allocation5 + $0xf0] sm:$0xff] %v2359
    %2392 = vst [vmem:[#allocation5 + $0xf8] sm:$0xff] %v2360
    // Predicated region
    $region42: #{tpu_custom_call.1} parent=1 // pred_check
      _
    $region43: #{tpu_custom_call.1} parent=1 // pred_check_branch
      %2394 = sbr.rel (0) target = $region45
    $region44: #{tpu_custom_call.1} parent=1 // pred_region
      %s2396 = ssub.s32 4096, 4096
      %2397 = vsyncadd [#allocation4], %s2396
      %s2398 = sshll.u32 [#allocation5], 4
      %s2399 = int_to_ptr.vmem [resolvable:$true] %s2398
      %2404 = dma.vmem_to_hbm [thread:$0]  %s2399, 4096, %s9, [#allocation4], 128, 128, 8
    $region45: #{tpu_custom_call.1} parent=1 // pred_fallthru
      _
    // Predicated region
    $region46: #{tpu_custom_call.1} parent=1 // pred_check
      _
    $region47: #{tpu_custom_call.1} parent=1 // pred_check_branch
      %2406 = sbr.rel (0) target = $region49
    $region48: #{tpu_custom_call.1} parent=1 // pred_region
      %2407 = dma.done [#allocation4], 4096
    $region49: #{tpu_custom_call.1} parent=1 // pred_fallthru
      _
    %2408 = vsyncpa [#allocation3], 1
    %2409 = vsyncpa [#allocation4], 1

</llo_original>
